<compile_context>
chip_gen: v7x
topology: tpu7x:2x2x1
jax: 0.10.0
libtpu: 0.0.40
codegen_flags: <defaults>
</compile_context>

<pallas_src>
import jax
import jax.numpy as jnp
from jax import lax
from jax.experimental import pallas as pl
from jax.experimental.pallas import tpu as pltpu


def _bottleneck_kernel(x_ref, xt_ref, xb_ref,
                       s1_ref, t1_ref,
                       w1_ref, b1_ref,
                       w2_ref, b2_ref,
                       w3_ref, b3_ref,
                       o_ref, h2_ref):
    TH, W, Cin = x_ref.shape
    P = w1_ref.shape[1]
    Cout = w3_ref.shape[1]
    r = pl.program_id(1)
    last_r = pl.num_programs(1) - 1

    s1 = s1_ref[...]
    t1 = t1_ref[...]
    w1 = w1_ref[...]
    b1 = b1_ref[...]

    def h2_rows(x_rows):
        """bn1 -> relu -> conv1 (bn2 folded) -> relu for a (rows, W, Cin) slab."""
        rows = x_rows.shape[0]
        h1 = jnp.maximum(x_rows.astype(jnp.float32) * s1 + t1, 0.0)
        # reshape is a free relayout when W is a multiple of the sublane pack.
        c1 = jnp.dot(h1.reshape(rows * W, Cin).astype(jnp.bfloat16), w1,
                     preferred_element_type=jnp.float32) + b1
        return jnp.maximum(c1, 0.0).reshape(rows, W, P)

    # Main TILE_H rows of the conv2 input -> scratch rows 1..TH (bf16 scratch).
    h2_ref[1:TH + 1, :, :] = h2_rows(x_ref[...]).astype(h2_ref.dtype)

    # 1-row halos.  Outside the image they are conv2's zero padding; inside,
    # they are the neighbouring row block's edge row pushed through conv1.
    top = h2_rows(xt_ref[...])
    top = jnp.where(r == 0, 0.0, top)
    h2_ref[0:1, :, :] = top.astype(h2_ref.dtype)

    bot = h2_rows(xb_ref[...])
    bot = jnp.where(r == last_r, 0.0, bot)
    h2_ref[TH + 1:TH + 2, :, :] = bot.astype(h2_ref.dtype)

    # conv2 (3x3, stride=1, pad=1) with bn3 folded in.  bf16 tap build,
    # f32 MXU accumulation; dx shifts built as zero-column concats (W-aligned).
    b2 = b2_ref[...]
    zcol = jnp.zeros((TH, 1, P), h2_ref.dtype)
    acc = None
    for dy in range(3):
        slab = h2_ref[dy:dy + TH, :, :]                                 # (TH, W, P) bf16
        left = jnp.concatenate([zcol, slab[:, :W - 1, :]], axis=1)      # dx = 0
        right = jnp.concatenate([slab[:, 1:, :], zcol], axis=1)         # dx = 2
        if P % 128 == 0:
            # Lane-aligned channels: concat taps -> one K=3P matmul per dy.
            taps = jnp.concatenate([left, slab, right], axis=-1)        # (TH, W, 3P)
            d = jnp.dot(taps.reshape(TH * W, 3 * P), w2_ref[dy].reshape(3 * P, P),
                        preferred_element_type=jnp.float32)
            acc = d if acc is None else acc + d
        else:
            # P not a multiple of 128: a lane-axis concat would force XLU lane
            # rotations, so use one K=P matmul per (dy, dx) tap instead.
            for dx, tap in enumerate((left, slab, right)):
                d = jnp.dot(tap.reshape(TH * W, P), w2_ref[dy, dx],
                            preferred_element_type=jnp.float32)
                acc = d if acc is None else acc + d
    h3 = jnp.maximum(acc + b2, 0.0)                                      # (TH*W, P)

    # conv3 (1x1) + identity residual.  Re-read x_ref here so the f32 copy of
    # x is not kept live across all three convolutions.
    out = jnp.dot(h3.astype(jnp.bfloat16), w3_ref[...],
                  preferred_element_type=jnp.float32) + b3_ref[...]
    out = out + x_ref[...].astype(jnp.float32).reshape(TH * W, Cout)
    o_ref[...] = out.reshape(TH, W, Cout).astype(o_ref.dtype)


def _vmem_limit_bytes():
    """Scoped-VMEM limit derived per TPU generation (v7x only has 64 MiB/TC)."""
    try:
        cap = getattr(pltpu.get_tpu_info(), "vmem_capacity_bytes", None)
        if cap:
            return int(min(cap // 2, 64 * 1024 * 1024))
    except Exception:
        pass
    return 32 * 1024 * 1024


def _pick_tile_h(H, W, Cin, P, Cout):
    """Largest divisor of H keeping the per-step working set ~a few MiB."""
    per_row = W * (6 * Cin + 10 * P + 6 * Cout)          # rough bytes per row
    max_rows = max(1, min(H, (4 * 1024 * 1024) // max(per_row, 1)))
    for th in range(max_rows, 0, -1):
        if H % th == 0:
            return th
    return 1


def bottleneck_pallas(x_nchw, params, tile_h=None):
    (s1, t1, w1, b1, s2, t2, w2, b2, s3, t3, w3, b3) = params
    # NCHW -> NHWC, bf16 in HBM (halves I/O traffic; math stays f32 in-kernel).
    x = jnp.transpose(x_nchw, (0, 2, 3, 1)).astype(jnp.bfloat16)
    N, H, W, Cin = x.shape
    P = w1.shape[1]
    Cout = w3.shape[1]
    assert Cin == Cout, "identity shortcut requires inplanes == 4*planes"

    if tile_h is None:
        tile_h = _pick_tile_h(H, W, Cin, P, Cout)
    tile_h = max(1, min(tile_h, H))
    while H % tile_h != 0:
        tile_h -= 1
    R = H // tile_h

    # Fold bn2 into conv1 and bn3 into conv2 (per-output-channel).
    w1f = (w1 * s2[None, :]).astype(jnp.bfloat16)                          # (Cin, P)
    b1f = (b1 * s2 + t2).reshape(1, P).astype(jnp.float32)
    w2f = (w2 * s3[None, None, None, :]).astype(jnp.bfloat16)              # (3, 3, P, P)
    b2f = (b2 * s3 + t3).reshape(1, P).astype(jnp.float32)
    w3f = w3.astype(jnp.bfloat16)                                          # (P, Cout)
    b3f = b3.reshape(1, Cout).astype(jnp.float32)
    s1k = s1.reshape(1, Cin).astype(jnp.float32)
    t1k = t1.reshape(1, Cin).astype(jnp.float32)

    def full_spec(shape):
        nd = len(shape)
        return pl.BlockSpec(shape, lambda n, r, _nd=nd: (0,) * _nd)

    main_map = lambda n, r: (n, r, 0, 0)
    # Halo row views of x (block size 1 along H => block index == row index).
    # Clamped at the image edges; the kernel zeroes the out-of-image halo.
    top_map = lambda n, r: (n, jnp.maximum(r * tile_h - 1, 0), 0, 0)
    bot_map = lambda n, r: (n, jnp.minimum(r * tile_h + tile_h, H - 1), 0, 0)

    grid_spec = pltpu.PrefetchScalarGridSpec(
        num_scalar_prefetch=0,
        grid=(N, R),
        in_specs=[
            pl.BlockSpec((None, tile_h, W, Cin), main_map),   # x row block
            pl.BlockSpec((None, 1, W, Cin), top_map),         # x top halo row
            pl.BlockSpec((None, 1, W, Cin), bot_map),         # x bottom halo row
            full_spec((1, Cin)), full_spec((1, Cin)),
            full_spec((Cin, P)), full_spec((1, P)),
            full_spec((3, 3, P, P)), full_spec((1, P)),
            full_spec((P, Cout)), full_spec((1, Cout)),
        ],
        out_specs=pl.BlockSpec((None, tile_h, W, Cout), main_map),
        scratch_shapes=[pltpu.VMEM((tile_h + 2, W, P), jnp.bfloat16)],
    )

    out_nhwc = pl.pallas_call(
        _bottleneck_kernel,
        out_shape=jax.ShapeDtypeStruct((N, H, W, Cout), jnp.bfloat16),
        grid_spec=grid_spec,
        compiler_params=pltpu.CompilerParams(
            dimension_semantics=("parallel", "parallel"),
            vmem_limit_bytes=_vmem_limit_bytes()),
    )(x, x, x, s1k, t1k, w1f, b1f, w2f, b2f, w3f, b3f)

    return jnp.transpose(out_nhwc, (0, 3, 1, 2))              # NHWC -> NCHW


def bottleneck_reference(x_nchw, params):
    """Pure-JAX f32 reference (lax.conv) for correctness checking."""
    (s1, t1, w1, b1, s2, t2, w2, b2, s3, t3, w3, b3) = params
    x = jnp.transpose(x_nchw, (0, 2, 3, 1)).astype(jnp.float32)
    Cin, P, Cout = x.shape[-1], w1.shape[1], w3.shape[1]
    dn = ('NHWC', 'HWIO', 'NHWC')
    h = jnp.maximum(x * s1 + t1, 0.0)
    h = lax.conv_general_dilated(h, w1.reshape(1, 1, Cin, P), (1, 1), 'VALID',
                                 dimension_numbers=dn) + b1
    h = jnp.maximum(h * s2 + t2, 0.0)
    h = lax.conv_general_dilated(h, w2, (1, 1), ((1, 1), (1, 1)),
                                 dimension_numbers=dn) + b2
    h = jnp.maximum(h * s3 + t3, 0.0)
    h = lax.conv_general_dilated(h, w3.reshape(1, 1, P, Cout), (1, 1), 'VALID',
                                 dimension_numbers=dn) + b3
    out = h + x
    return jnp.transpose(out, (0, 3, 1, 2))


if __name__ == "__main__":
    planes = 4
    inplanes = planes * 4          # identity shortcut => inplanes == 4*planes
    N, Hs, Ws = 2, 16, 16

    key = jax.random.PRNGKey(0)
    k = jax.random.split(key, 10)

    def bn_fold(kk, c):
        k1, k2, k3, k4 = jax.random.split(kk, 4)
        gamma = 1.0 + 0.1 * jax.random.normal(k1, (c,), jnp.float32)
        beta = 0.1 * jax.random.normal(k2, (c,), jnp.float32)
        mean = 0.1 * jax.random.normal(k3, (c,), jnp.float32)
        var = jnp.abs(jax.random.normal(k4, (c,), jnp.float32)) + 0.5
        scale = gamma * lax.rsqrt(var + 1e-5)
        shift = beta - mean * scale
        return scale, shift

    s1, t1 = bn_fold(k[0], inplanes)
    s2, t2 = bn_fold(k[1], planes)
    s3, t3 = bn_fold(k[2], planes)

    w1 = 0.1 * jax.random.normal(k[3], (inplanes, planes), jnp.float32)      # 1x1
    b1 = 0.05 * jax.random.normal(k[4], (planes,), jnp.float32)
    w2 = 0.1 * jax.random.normal(k[5], (3, 3, planes, planes), jnp.float32)  # 3x3 HWIO
    b2 = 0.05 * jax.random.normal(k[6], (planes,), jnp.float32)
    w3 = 0.1 * jax.random.normal(k[7], (planes, planes * 4), jnp.float32)    # 1x1
    b3 = 0.05 * jax.random.normal(k[8], (planes * 4,), jnp.float32)

    params = (s1, t1, w1, b1, s2, t2, w2, b2, s3, t3, w3, b3)

    # PyTorch-style NCHW input
    x = jax.random.normal(k[9], (N, inplanes, Hs, Ws), jnp.float32)

    # tile_h=8 => 2 row blocks per image: exercises both the zero-padding halo
    # (image edges) and the neighbour-row halo (interior block boundary).
    out = jax.block_until_ready(bottleneck_pallas(x, params, tile_h=8))
    ref = jax.block_until_ready(bottleneck_reference(x, params))

    assert out.shape == (N, inplanes, Hs, Ws)
    # bf16 HBM I/O + bf16 MXU operands vs. a pure-f32 reference -> loosened tol.
    max_err = float(jnp.max(jnp.abs(out.astype(jnp.float32) - ref)))
    if max_err < 5e-2:
        print("KERNEL_OK")
    else:
        print(f"MISMATCH max_err={max_err}")
</pallas_src>

<mosaic_0001>
module attributes {stable_mosaic.version = 11 : i64} {
  func.func @_bottleneck_kernel(%arg0: i32, %arg1: i32, %arg2: memref<1x8x16x16xbf16, #tpu.memory_space<vmem>>, %arg3: memref<1x1x16x16xbf16, #tpu.memory_space<vmem>>, %arg4: memref<1x1x16x16xbf16, #tpu.memory_space<vmem>>, %arg5: memref<1x16xf32, #tpu.memory_space<vmem>>, %arg6: memref<1x16xf32, #tpu.memory_space<vmem>>, %arg7: memref<16x4xbf16, #tpu.memory_space<vmem>>, %arg8: memref<1x4xf32, #tpu.memory_space<vmem>>, %arg9: memref<3x3x4x4xbf16, #tpu.memory_space<vmem>>, %arg10: memref<1x4xf32, #tpu.memory_space<vmem>>, %arg11: memref<4x16xbf16, #tpu.memory_space<vmem>>, %arg12: memref<1x16xf32, #tpu.memory_space<vmem>>, %arg13: memref<1x8x16x16xbf16, #tpu.memory_space<vmem>>, %arg14: memref<10x16x4xbf16, #tpu.memory_space<vmem>>) attributes {dimension_semantics = [#tpu.dimension_semantics<parallel>, #tpu.dimension_semantics<parallel>], iteration_bounds = array<i64: 2, 2>, scalar_prefetch = 0 : i64, scratch_operands = 1 : i64, tpu.core_type = #tpu.core_type<tc>, window_params = [{transform_indices = @transform_0, window_bounds = array<i64: 1, 8, 16, 16>}, {transform_indices = @transform_1, window_bounds = array<i64: 1, 1, 16, 16>}, {transform_indices = @transform_2, window_bounds = array<i64: 1, 1, 16, 16>}, {pipeline_mode = #tpu.pipeline_mode<synchronous>, transform_indices = @transform_3, window_bounds = array<i64: 1, 16>}, {pipeline_mode = #tpu.pipeline_mode<synchronous>, transform_indices = @transform_4, window_bounds = array<i64: 1, 16>}, {pipeline_mode = #tpu.pipeline_mode<synchronous>, transform_indices = @transform_5, window_bounds = array<i64: 16, 4>}, {pipeline_mode = #tpu.pipeline_mode<synchronous>, transform_indices = @transform_6, window_bounds = array<i64: 1, 4>}, {pipeline_mode = #tpu.pipeline_mode<synchronous>, transform_indices = @transform_7, window_bounds = array<i64: 3, 3, 4, 4>}, {pipeline_mode = #tpu.pipeline_mode<synchronous>, transform_indices = @transform_8, window_bounds = array<i64: 1, 4>}, {pipeline_mode = #tpu.pipeline_mode<synchronous>, transform_indices = @transform_9, window_bounds = array<i64: 4, 16>}, {pipeline_mode = #tpu.pipeline_mode<synchronous>, transform_indices = @transform_10, window_bounds = array<i64: 1, 16>}, {transform_indices = @transform_11, window_bounds = array<i64: 1, 8, 16, 16>}]} {
    %c0 = arith.constant 0 : index
    %c0_0 = arith.constant 0 : index
    %0 = vector.load %arg5[%c0, %c0_0] : memref<1x16xf32, #tpu.memory_space<vmem>>, vector<1x16xf32>
    %c0_1 = arith.constant 0 : index
    %c0_2 = arith.constant 0 : index
    %1 = vector.load %arg6[%c0_1, %c0_2] : memref<1x16xf32, #tpu.memory_space<vmem>>, vector<1x16xf32>
    %c0_3 = arith.constant 0 : index
    %c0_4 = arith.constant 0 : index
    %2 = vector.load %arg7[%c0_3, %c0_4] : memref<16x4xbf16, #tpu.memory_space<vmem>>, vector<16x4xbf16>
    %c0_5 = arith.constant 0 : index
    %c0_6 = arith.constant 0 : index
    %3 = vector.load %arg8[%c0_5, %c0_6] : memref<1x4xf32, #tpu.memory_space<vmem>>, vector<1x4xf32>
    %c0_7 = arith.constant 0 : index
    %c0_8 = arith.constant 0 : index
    %c0_9 = arith.constant 0 : index
    %c0_10 = arith.constant 0 : index
    %4 = vector.load %arg2[%c0_7, %c0_8, %c0_9, %c0_10] : memref<1x8x16x16xbf16, #tpu.memory_space<vmem>>, vector<1x8x16x16xbf16>
    %5 = vector.shape_cast %4 : vector<1x8x16x16xbf16> to vector<8x16x16xbf16>
    %6 = arith.extf %5 : vector<8x16x16xbf16> to vector<8x16x16xf32>
    %7 = vector.shape_cast %0 : vector<1x16xf32> to vector<1x1x16xf32>
    %8 = vector.broadcast %7 : vector<1x1x16xf32> to vector<8x16x16xf32>
    %9 = arith.mulf %6, %8 : vector<8x16x16xf32>
    %10 = vector.shape_cast %1 : vector<1x16xf32> to vector<1x1x16xf32>
    %11 = vector.broadcast %10 : vector<1x1x16xf32> to vector<8x16x16xf32>
    %12 = arith.addf %9, %11 : vector<8x16x16xf32>
    %cst = arith.constant 0.000000e+00 : f32
    %13 = vector.broadcast %cst : f32 to vector<8x16x16xf32>
    %14 = arith.maximumf %12, %13 : vector<8x16x16xf32>
    %15 = vector.shape_cast %14 : vector<8x16x16xf32> to vector<128x16xf32>
    %16 = arith.truncf %15 : vector<128x16xf32> to vector<128x16xbf16>
    %cst_11 = arith.constant dense<0.000000e+00> : vector<128x4xf32>
    %17 = tpu.matmul %16, %2, %cst_11 {dimension_numbers = #tpu.dot_dimension_numbers<[1], [0], [0], [1], [0, 0, 1, 1], [], []>} : vector<128x16xbf16>, vector<16x4xbf16>, vector<128x4xf32> -> vector<128x4xf32>
    %18 = vector.broadcast %3 : vector<1x4xf32> to vector<128x4xf32>
    %19 = arith.addf %17, %18 : vector<128x4xf32>
    %cst_12 = arith.constant 0.000000e+00 : f32
    %20 = vector.broadcast %cst_12 : f32 to vector<128x4xf32>
    %21 = arith.maximumf %19, %20 : vector<128x4xf32>
    %22 = vector.shape_cast %21 : vector<128x4xf32> to vector<8x16x4xf32>
    %23 = arith.truncf %22 : vector<8x16x4xf32> to vector<8x16x4xbf16>
    %c1 = arith.constant 1 : index
    %c0_13 = arith.constant 0 : index
    %c0_14 = arith.constant 0 : index
    %24 = vector.load %arg14[%c1, %c0_13, %c0_14] : memref<10x16x4xbf16, #tpu.memory_space<vmem>>, vector<8x16x4xbf16>
    tpu.vector_store %arg14[%c1, %c0_13, %c0_14], %23 {strides = array<i32>} : memref<10x16x4xbf16, #tpu.memory_space<vmem>>, vector<8x16x4xbf16>,
    %c0_15 = arith.constant 0 : index
    %c0_16 = arith.constant 0 : index
    %c0_17 = arith.constant 0 : index
    %c0_18 = arith.constant 0 : index
    %25 = vector.load %arg3[%c0_15, %c0_16, %c0_17, %c0_18] : memref<1x1x16x16xbf16, #tpu.memory_space<vmem>>, vector<1x1x16x16xbf16>
    %26 = vector.shape_cast %25 : vector<1x1x16x16xbf16> to vector<1x16x16xbf16>
    %27 = arith.extf %26 : vector<1x16x16xbf16> to vector<1x16x16xf32>
    %28 = vector.shape_cast %0 : vector<1x16xf32> to vector<1x1x16xf32>
    %29 = vector.broadcast %28 : vector<1x1x16xf32> to vector<1x16x16xf32>
    %30 = arith.mulf %27, %29 : vector<1x16x16xf32>
    %31 = vector.shape_cast %1 : vector<1x16xf32> to vector<1x1x16xf32>
    %32 = vector.broadcast %31 : vector<1x1x16xf32> to vector<1x16x16xf32>
    %33 = arith.addf %30, %32 : vector<1x16x16xf32>
    %cst_19 = arith.constant 0.000000e+00 : f32
    %34 = vector.broadcast %cst_19 : f32 to vector<1x16x16xf32>
    %35 = arith.maximumf %33, %34 : vector<1x16x16xf32>
    %36 = vector.shape_cast %35 : vector<1x16x16xf32> to vector<16x16xf32>
    %37 = arith.truncf %36 : vector<16x16xf32> to vector<16x16xbf16>
    %cst_20 = arith.constant dense<0.000000e+00> : vector<16x4xf32>
    %38 = tpu.matmul %37, %2, %cst_20 {dimension_numbers = #tpu.dot_dimension_numbers<[1], [0], [0], [1], [0, 0, 1, 1], [], []>} : vector<16x16xbf16>, vector<16x4xbf16>, vector<16x4xf32> -> vector<16x4xf32>
    %39 = vector.broadcast %3 : vector<1x4xf32> to vector<16x4xf32>
    %40 = arith.addf %38, %39 : vector<16x4xf32>
    %cst_21 = arith.constant 0.000000e+00 : f32
    %41 = vector.broadcast %cst_21 : f32 to vector<16x4xf32>
    %42 = arith.maximumf %40, %41 : vector<16x4xf32>
    %43 = vector.shape_cast %42 : vector<16x4xf32> to vector<1x16x4xf32>
    %c0_i32 = arith.constant 0 : i32
    %44 = arith.cmpi eq, %arg1, %c0_i32 : i32
    %cst_22 = arith.constant 0.000000e+00 : f32
    %45 = vector.broadcast %cst_22 : f32 to vector<1x16x4xf32>
    %46 = arith.select %44, %45, %43 : vector<1x16x4xf32>
    %47 = arith.truncf %46 : vector<1x16x4xf32> to vector<1x16x4xbf16>
    %c0_23 = arith.constant 0 : index
    %c0_24 = arith.constant 0 : index
    %c0_25 = arith.constant 0 : index
    %48 = vector.load %arg14[%c0_23, %c0_24, %c0_25] : memref<10x16x4xbf16, #tpu.memory_space<vmem>>, vector<1x16x4xbf16>
    tpu.vector_store %arg14[%c0_23, %c0_24, %c0_25], %47 {strides = array<i32>} : memref<10x16x4xbf16, #tpu.memory_space<vmem>>, vector<1x16x4xbf16>,
    %c0_26 = arith.constant 0 : index
    %c0_27 = arith.constant 0 : index
    %c0_28 = arith.constant 0 : index
    %c0_29 = arith.constant 0 : index
    %49 = vector.load %arg4[%c0_26, %c0_27, %c0_28, %c0_29] : memref<1x1x16x16xbf16, #tpu.memory_space<vmem>>, vector<1x1x16x16xbf16>
    %50 = vector.shape_cast %49 : vector<1x1x16x16xbf16> to vector<1x16x16xbf16>
    %51 = arith.extf %50 : vector<1x16x16xbf16> to vector<1x16x16xf32>
    %52 = vector.shape_cast %0 : vector<1x16xf32> to vector<1x1x16xf32>
    %53 = vector.broadcast %52 : vector<1x1x16xf32> to vector<1x16x16xf32>
    %54 = arith.mulf %51, %53 : vector<1x16x16xf32>
    %55 = vector.shape_cast %1 : vector<1x16xf32> to vector<1x1x16xf32>
    %56 = vector.broadcast %55 : vector<1x1x16xf32> to vector<1x16x16xf32>
    %57 = arith.addf %54, %56 : vector<1x16x16xf32>
    %cst_30 = arith.constant 0.000000e+00 : f32
    %58 = vector.broadcast %cst_30 : f32 to vector<1x16x16xf32>
    %59 = arith.maximumf %57, %58 : vector<1x16x16xf32>
    %60 = vector.shape_cast %59 : vector<1x16x16xf32> to vector<16x16xf32>
    %61 = arith.truncf %60 : vector<16x16xf32> to vector<16x16xbf16>
    %cst_31 = arith.constant dense<0.000000e+00> : vector<16x4xf32>
    %62 = tpu.matmul %61, %2, %cst_31 {dimension_numbers = #tpu.dot_dimension_numbers<[1], [0], [0], [1], [0, 0, 1, 1], [], []>} : vector<16x16xbf16>, vector<16x4xbf16>, vector<16x4xf32> -> vector<16x4xf32>
    %63 = vector.broadcast %3 : vector<1x4xf32> to vector<16x4xf32>
    %64 = arith.addf %62, %63 : vector<16x4xf32>
    %cst_32 = arith.constant 0.000000e+00 : f32
    %65 = vector.broadcast %cst_32 : f32 to vector<16x4xf32>
    %66 = arith.maximumf %64, %65 : vector<16x4xf32>
    %67 = vector.shape_cast %66 : vector<16x4xf32> to vector<1x16x4xf32>
    %c1_i32 = arith.constant 1 : i32
    %68 = arith.cmpi eq, %arg1, %c1_i32 : i32
    %cst_33 = arith.constant 0.000000e+00 : f32
    %69 = vector.broadcast %cst_33 : f32 to vector<1x16x4xf32>
    %70 = arith.select %68, %69, %67 : vector<1x16x4xf32>
    %71 = arith.truncf %70 : vector<1x16x4xf32> to vector<1x16x4xbf16>
    %c9 = arith.constant 9 : index
    %c0_34 = arith.constant 0 : index
    %c0_35 = arith.constant 0 : index
    %72 = vector.load %arg14[%c9, %c0_34, %c0_35] : memref<10x16x4xbf16, #tpu.memory_space<vmem>>, vector<1x16x4xbf16>
    tpu.vector_store %arg14[%c9, %c0_34, %c0_35], %71 {strides = array<i32>} : memref<10x16x4xbf16, #tpu.memory_space<vmem>>, vector<1x16x4xbf16>,
    %c0_36 = arith.constant 0 : index
    %c0_37 = arith.constant 0 : index
    %73 = vector.load %arg10[%c0_36, %c0_37] : memref<1x4xf32, #tpu.memory_space<vmem>>, vector<1x4xf32>
    %cst_38 = arith.constant 0.000000e+00 : bf16
    %74 = vector.broadcast %cst_38 : bf16 to vector<8x1x4xbf16>
    %c0_39 = arith.constant 0 : index
    %c0_40 = arith.constant 0 : index
    %c0_41 = arith.constant 0 : index
    %75 = vector.load %arg14[%c0_39, %c0_40, %c0_41] : memref<10x16x4xbf16, #tpu.memory_space<vmem>>, vector<8x16x4xbf16>
    %76 = vector.extract_strided_slice %75 {offsets = [0, 0, 0], sizes = [8, 15, 4], strides = [1, 1, 1]} : vector<8x16x4xbf16> to vector<8x15x4xbf16>
    %77 = tpu.concatenate %74, %76 in 1 : vector<8x1x4xbf16>, vector<8x15x4xbf16> -> vector<8x16x4xbf16>
    %78 = vector.extract_strided_slice %75 {offsets = [0, 1, 0], sizes = [8, 15, 4], strides = [1, 1, 1]} : vector<8x16x4xbf16> to vector<8x15x4xbf16>
    %79 = tpu.concatenate %78, %74 in 1 : vector<8x15x4xbf16>, vector<8x1x4xbf16> -> vector<8x16x4xbf16>
    %80 = vector.shape_cast %77 : vector<8x16x4xbf16> to vector<128x4xbf16>
    %c0_42 = arith.constant 0 : index
    %c0_43 = arith.constant 0 : index
    %c0_44 = arith.constant 0 : index
    %c0_45 = arith.constant 0 : index
    %81 = vector.load %arg9[%c0_42, %c0_43, %c0_44, %c0_45] : memref<3x3x4x4xbf16, #tpu.memory_space<vmem>>, vector<1x1x4x4xbf16>
    %82 = vector.shape_cast %81 : vector<1x1x4x4xbf16> to vector<4x4xbf16>
    %cst_46 = arith.constant dense<0.000000e+00> : vector<128x4xf32>
    %83 = tpu.matmul %80, %82, %cst_46 {dimension_numbers = #tpu.dot_dimension_numbers<[1], [0], [0], [1], [0, 0, 1, 1], [], []>} : vector<128x4xbf16>, vector<4x4xbf16>, vector<128x4xf32> -> vector<128x4xf32>
    %84 = vector.shape_cast %75 : vector<8x16x4xbf16> to vector<128x4xbf16>
    %c0_47 = arith.constant 0 : index
    %c1_48 = arith.constant 1 : index
    %c0_49 = arith.constant 0 : index
    %c0_50 = arith.constant 0 : index
    %85 = vector.load %arg9[%c0_47, %c1_48, %c0_49, %c0_50] : memref<3x3x4x4xbf16, #tpu.memory_space<vmem>>, vector<1x1x4x4xbf16>
    %86 = vector.shape_cast %85 : vector<1x1x4x4xbf16> to vector<4x4xbf16>
    %cst_51 = arith.constant dense<0.000000e+00> : vector<128x4xf32>
    %87 = tpu.matmul %84, %86, %cst_51 {dimension_numbers = #tpu.dot_dimension_numbers<[1], [0], [0], [1], [0, 0, 1, 1], [], []>} : vector<128x4xbf16>, vector<4x4xbf16>, vector<128x4xf32> -> vector<128x4xf32>
    %88 = arith.addf %83, %87 : vector<128x4xf32>
    %89 = vector.shape_cast %79 : vector<8x16x4xbf16> to vector<128x4xbf16>
    %c0_52 = arith.constant 0 : index
    %c2 = arith.constant 2 : index
    %c0_53 = arith.constant 0 : index
    %c0_54 = arith.constant 0 : index
    %90 = vector.load %arg9[%c0_52, %c2, %c0_53, %c0_54] : memref<3x3x4x4xbf16, #tpu.memory_space<vmem>>, vector<1x1x4x4xbf16>
    %91 = vector.shape_cast %90 : vector<1x1x4x4xbf16> to vector<4x4xbf16>
    %cst_55 = arith.constant dense<0.000000e+00> : vector<128x4xf32>
    %92 = tpu.matmul %89, %91, %cst_55 {dimension_numbers = #tpu.dot_dimension_numbers<[1], [0], [0], [1], [0, 0, 1, 1], [], []>} : vector<128x4xbf16>, vector<4x4xbf16>, vector<128x4xf32> -> vector<128x4xf32>
    %93 = arith.addf %88, %92 : vector<128x4xf32>
    %c1_56 = arith.constant 1 : index
    %c0_57 = arith.constant 0 : index
    %c0_58 = arith.constant 0 : index
    %94 = vector.load %arg14[%c1_56, %c0_57, %c0_58] : memref<10x16x4xbf16, #tpu.memory_space<vmem>>, vector<8x16x4xbf16>
    %95 = vector.extract_strided_slice %94 {offsets = [0, 0, 0], sizes = [8, 15, 4], strides = [1, 1, 1]} : vector<8x16x4xbf16> to vector<8x15x4xbf16>
    %96 = tpu.concatenate %74, %95 in 1 : vector<8x1x4xbf16>, vector<8x15x4xbf16> -> vector<8x16x4xbf16>
    %97 = vector.extract_strided_slice %94 {offsets = [0, 1, 0], sizes = [8, 15, 4], strides = [1, 1, 1]} : vector<8x16x4xbf16> to vector<8x15x4xbf16>
    %98 = tpu.concatenate %97, %74 in 1 : vector<8x15x4xbf16>, vector<8x1x4xbf16> -> vector<8x16x4xbf16>
    %99 = vector.shape_cast %96 : vector<8x16x4xbf16> to vector<128x4xbf16>
    %c1_59 = arith.constant 1 : index
    %c0_60 = arith.constant 0 : index
    %c0_61 = arith.constant 0 : index
    %c0_62 = arith.constant 0 : index
    %100 = vector.load %arg9[%c1_59, %c0_60, %c0_61, %c0_62] : memref<3x3x4x4xbf16, #tpu.memory_space<vmem>>, vector<1x1x4x4xbf16>
    %101 = vector.shape_cast %100 : vector<1x1x4x4xbf16> to vector<4x4xbf16>
    %cst_63 = arith.constant dense<0.000000e+00> : vector<128x4xf32>
    %102 = tpu.matmul %99, %101, %cst_63 {dimension_numbers = #tpu.dot_dimension_numbers<[1], [0], [0], [1], [0, 0, 1, 1], [], []>} : vector<128x4xbf16>, vector<4x4xbf16>, vector<128x4xf32> -> vector<128x4xf32>
    %103 = arith.addf %93, %102 : vector<128x4xf32>
    %104 = vector.shape_cast %94 : vector<8x16x4xbf16> to vector<128x4xbf16>
    %c1_64 = arith.constant 1 : index
    %c1_65 = arith.constant 1 : index
    %c0_66 = arith.constant 0 : index
    %c0_67 = arith.constant 0 : index
    %105 = vector.load %arg9[%c1_64, %c1_65, %c0_66, %c0_67] : memref<3x3x4x4xbf16, #tpu.memory_space<vmem>>, vector<1x1x4x4xbf16>
    %106 = vector.shape_cast %105 : vector<1x1x4x4xbf16> to vector<4x4xbf16>
    %cst_68 = arith.constant dense<0.000000e+00> : vector<128x4xf32>
    %107 = tpu.matmul %104, %106, %cst_68 {dimension_numbers = #tpu.dot_dimension_numbers<[1], [0], [0], [1], [0, 0, 1, 1], [], []>} : vector<128x4xbf16>, vector<4x4xbf16>, vector<128x4xf32> -> vector<128x4xf32>
    %108 = arith.addf %103, %107 : vector<128x4xf32>
    %109 = vector.shape_cast %98 : vector<8x16x4xbf16> to vector<128x4xbf16>
    %c1_69 = arith.constant 1 : index
    %c2_70 = arith.constant 2 : index
    %c0_71 = arith.constant 0 : index
    %c0_72 = arith.constant 0 : index
    %110 = vector.load %arg9[%c1_69, %c2_70, %c0_71, %c0_72] : memref<3x3x4x4xbf16, #tpu.memory_space<vmem>>, vector<1x1x4x4xbf16>
    %111 = vector.shape_cast %110 : vector<1x1x4x4xbf16> to vector<4x4xbf16>
    %cst_73 = arith.constant dense<0.000000e+00> : vector<128x4xf32>
    %112 = tpu.matmul %109, %111, %cst_73 {dimension_numbers = #tpu.dot_dimension_numbers<[1], [0], [0], [1], [0, 0, 1, 1], [], []>} : vector<128x4xbf16>, vector<4x4xbf16>, vector<128x4xf32> -> vector<128x4xf32>
    %113 = arith.addf %108, %112 : vector<128x4xf32>
    %c2_74 = arith.constant 2 : index
    %c0_75 = arith.constant 0 : index
    %c0_76 = arith.constant 0 : index
    %114 = vector.load %arg14[%c2_74, %c0_75, %c0_76] : memref<10x16x4xbf16, #tpu.memory_space<vmem>>, vector<8x16x4xbf16>
    %115 = vector.extract_strided_slice %114 {offsets = [0, 0, 0], sizes = [8, 15, 4], strides = [1, 1, 1]} : vector<8x16x4xbf16> to vector<8x15x4xbf16>
    %116 = tpu.concatenate %74, %115 in 1 : vector<8x1x4xbf16>, vector<8x15x4xbf16> -> vector<8x16x4xbf16>
    %117 = vector.extract_strided_slice %114 {offsets = [0, 1, 0], sizes = [8, 15, 4], strides = [1, 1, 1]} : vector<8x16x4xbf16> to vector<8x15x4xbf16>
    %118 = tpu.concatenate %117, %74 in 1 : vector<8x15x4xbf16>, vector<8x1x4xbf16> -> vector<8x16x4xbf16>
    %119 = vector.shape_cast %116 : vector<8x16x4xbf16> to vector<128x4xbf16>
    %c2_77 = arith.constant 2 : index
    %c0_78 = arith.constant 0 : index
    %c0_79 = arith.constant 0 : index
    %c0_80 = arith.constant 0 : index
    %120 = vector.load %arg9[%c2_77, %c0_78, %c0_79, %c0_80] : memref<3x3x4x4xbf16, #tpu.memory_space<vmem>>, vector<1x1x4x4xbf16>
    %121 = vector.shape_cast %120 : vector<1x1x4x4xbf16> to vector<4x4xbf16>
    %cst_81 = arith.constant dense<0.000000e+00> : vector<128x4xf32>
    %122 = tpu.matmul %119, %121, %cst_81 {dimension_numbers = #tpu.dot_dimension_numbers<[1], [0], [0], [1], [0, 0, 1, 1], [], []>} : vector<128x4xbf16>, vector<4x4xbf16>, vector<128x4xf32> -> vector<128x4xf32>
    %123 = arith.addf %113, %122 : vector<128x4xf32>
    %124 = vector.shape_cast %114 : vector<8x16x4xbf16> to vector<128x4xbf16>
    %c2_82 = arith.constant 2 : index
    %c1_83 = arith.constant 1 : index
    %c0_84 = arith.constant 0 : index
    %c0_85 = arith.constant 0 : index
    %125 = vector.load %arg9[%c2_82, %c1_83, %c0_84, %c0_85] : memref<3x3x4x4xbf16, #tpu.memory_space<vmem>>, vector<1x1x4x4xbf16>
    %126 = vector.shape_cast %125 : vector<1x1x4x4xbf16> to vector<4x4xbf16>
    %cst_86 = arith.constant dense<0.000000e+00> : vector<128x4xf32>
    %127 = tpu.matmul %124, %126, %cst_86 {dimension_numbers = #tpu.dot_dimension_numbers<[1], [0], [0], [1], [0, 0, 1, 1], [], []>} : vector<128x4xbf16>, vector<4x4xbf16>, vector<128x4xf32> -> vector<128x4xf32>
    %128 = arith.addf %123, %127 : vector<128x4xf32>
    %129 = vector.shape_cast %118 : vector<8x16x4xbf16> to vector<128x4xbf16>
    %c2_87 = arith.constant 2 : index
    %c2_88 = arith.constant 2 : index
    %c0_89 = arith.constant 0 : index
    %c0_90 = arith.constant 0 : index
    %130 = vector.load %arg9[%c2_87, %c2_88, %c0_89, %c0_90] : memref<3x3x4x4xbf16, #tpu.memory_space<vmem>>, vector<1x1x4x4xbf16>
    %131 = vector.shape_cast %130 : vector<1x1x4x4xbf16> to vector<4x4xbf16>
    %cst_91 = arith.constant dense<0.000000e+00> : vector<128x4xf32>
    %132 = tpu.matmul %129, %131, %cst_91 {dimension_numbers = #tpu.dot_dimension_numbers<[1], [0], [0], [1], [0, 0, 1, 1], [], []>} : vector<128x4xbf16>, vector<4x4xbf16>, vector<128x4xf32> -> vector<128x4xf32>
    %133 = arith.addf %128, %132 : vector<128x4xf32>
    %134 = vector.broadcast %73 : vector<1x4xf32> to vector<128x4xf32>
    %135 = arith.addf %133, %134 : vector<128x4xf32>
    %cst_92 = arith.constant 0.000000e+00 : f32
    %136 = vector.broadcast %cst_92 : f32 to vector<128x4xf32>
    %137 = arith.maximumf %135, %136 : vector<128x4xf32>
    %138 = arith.truncf %137 : vector<128x4xf32> to vector<128x4xbf16>
    %c0_93 = arith.constant 0 : index
    %c0_94 = arith.constant 0 : index
    %139 = vector.load %arg11[%c0_93, %c0_94] : memref<4x16xbf16, #tpu.memory_space<vmem>>, vector<4x16xbf16>
    %cst_95 = arith.constant dense<0.000000e+00> : vector<128x16xf32>
    %140 = tpu.matmul %138, %139, %cst_95 {dimension_numbers = #tpu.dot_dimension_numbers<[1], [0], [0], [1], [0, 0, 1, 1], [], []>} : vector<128x4xbf16>, vector<4x16xbf16>, vector<128x16xf32> -> vector<128x16xf32>
    %c0_96 = arith.constant 0 : index
    %c0_97 = arith.constant 0 : index
    %141 = vector.load %arg12[%c0_96, %c0_97] : memref<1x16xf32, #tpu.memory_space<vmem>>, vector<1x16xf32>
    %142 = vector.broadcast %141 : vector<1x16xf32> to vector<128x16xf32>
    %143 = arith.addf %140, %142 : vector<128x16xf32>
    %c0_98 = arith.constant 0 : index
    %c0_99 = arith.constant 0 : index
    %c0_100 = arith.constant 0 : index
    %c0_101 = arith.constant 0 : index
    %144 = vector.load %arg2[%c0_98, %c0_99, %c0_100, %c0_101] : memref<1x8x16x16xbf16, #tpu.memory_space<vmem>>, vector<1x8x16x16xbf16>
    %145 = vector.shape_cast %144 : vector<1x8x16x16xbf16> to vector<8x16x16xbf16>
    %146 = arith.extf %145 : vector<8x16x16xbf16> to vector<8x16x16xf32>
    %147 = vector.shape_cast %146 : vector<8x16x16xf32> to vector<128x16xf32>
    %148 = arith.addf %143, %147 : vector<128x16xf32>
    %149 = vector.shape_cast %148 : vector<128x16xf32> to vector<8x16x16xf32>
    %150 = arith.truncf %149 : vector<8x16x16xf32> to vector<8x16x16xbf16>
    %c0_102 = arith.constant 0 : index
    %c0_103 = arith.constant 0 : index
    %c0_104 = arith.constant 0 : index
    %c0_105 = arith.constant 0 : index
    %151 = vector.load %arg13[%c0_102, %c0_103, %c0_104, %c0_105] : memref<1x8x16x16xbf16, #tpu.memory_space<vmem>>, vector<1x8x16x16xbf16>
    %152 = vector.shape_cast %151 : vector<1x8x16x16xbf16> to vector<8x16x16xbf16>
    %153 = vector.shape_cast %150 : vector<8x16x16xbf16> to vector<1x8x16x16xbf16>
    tpu.vector_store %arg13[%c0_102, %c0_103, %c0_104, %c0_105], %153 {strides = array<i32>} : memref<1x8x16x16xbf16, #tpu.memory_space<vmem>>, vector<1x8x16x16xbf16>,
    return
  }
  func.func @transform_0(%arg0: i32, %arg1: i32) -> (i32, i32, i32, i32) {
    %c0_i32 = arith.constant 0 : i32
    %c0_i32_0 = arith.constant 0 : i32
    %c0_i32_1 = arith.constant 0 : i32
    return %arg0, %arg1, %c0_i32, %c0_i32_0 : i32, i32, i32, i32
  }
  func.func @transform_1(%arg0: i32, %arg1: i32) -> (i32, i32, i32, i32) {
    %c8_i32 = arith.constant 8 : i32
    %0 = arith.muli %arg1, %c8_i32 : i32
    %c1_i32 = arith.constant 1 : i32
    %1 = arith.subi %0, %c1_i32 : i32
    %c0_i32 = arith.constant 0 : i32
    %2 = arith.maxsi %1, %c0_i32 : i32
    %c0_i32_0 = arith.constant 0 : i32
    %c0_i32_1 = arith.constant 0 : i32
    %c0_i32_2 = arith.constant 0 : i32
    return %arg0, %2, %c0_i32_0, %c0_i32_1 : i32, i32, i32, i32
  }
  func.func @transform_2(%arg0: i32, %arg1: i32) -> (i32, i32, i32, i32) {
    %c8_i32 = arith.constant 8 : i32
    %0 = arith.muli %arg1, %c8_i32 : i32
    %c8_i32_0 = arith.constant 8 : i32
    %1 = arith.addi %0, %c8_i32_0 : i32
    %c15_i32 = arith.constant 15 : i32
    %2 = arith.minsi %1, %c15_i32 : i32
    %c0_i32 = arith.constant 0 : i32
    %c0_i32_1 = arith.constant 0 : i32
    %c0_i32_2 = arith.constant 0 : i32
    return %arg0, %2, %c0_i32, %c0_i32_1 : i32, i32, i32, i32
  }
  func.func @transform_3(%arg0: i32, %arg1: i32) -> (i32, i32) {
    %c0_i32 = arith.constant 0 : i32
    %c0_i32_0 = arith.constant 0 : i32
    %c0_i32_1 = arith.constant 0 : i32
    return %c0_i32, %c0_i32_0 : i32, i32
  }
  func.func @transform_4(%arg0: i32, %arg1: i32) -> (i32, i32) {
    %c0_i32 = arith.constant 0 : i32
    %c0_i32_0 = arith.constant 0 : i32
    %c0_i32_1 = arith.constant 0 : i32
    return %c0_i32, %c0_i32_0 : i32, i32
  }
  func.func @transform_5(%arg0: i32, %arg1: i32) -> (i32, i32) {
    %c0_i32 = arith.constant 0 : i32
    %c0_i32_0 = arith.constant 0 : i32
    %c0_i32_1 = arith.constant 0 : i32
    return %c0_i32, %c0_i32_0 : i32, i32
  }
  func.func @transform_6(%arg0: i32, %arg1: i32) -> (i32, i32) {
    %c0_i32 = arith.constant 0 : i32
    %c0_i32_0 = arith.constant 0 : i32
    %c0_i32_1 = arith.constant 0 : i32
    return %c0_i32, %c0_i32_0 : i32, i32
  }
  func.func @transform_7(%arg0: i32, %arg1: i32) -> (i32, i32, i32, i32) {
    %c0_i32 = arith.constant 0 : i32
    %c0_i32_0 = arith.constant 0 : i32
    %c0_i32_1 = arith.constant 0 : i32
    %c0_i32_2 = arith.constant 0 : i32
    %c0_i32_3 = arith.constant 0 : i32
    return %c0_i32, %c0_i32_0, %c0_i32_1, %c0_i32_2 : i32, i32, i32, i32
  }
  func.func @transform_8(%arg0: i32, %arg1: i32) -> (i32, i32) {
    %c0_i32 = arith.constant 0 : i32
    %c0_i32_0 = arith.constant 0 : i32
    %c0_i32_1 = arith.constant 0 : i32
    return %c0_i32, %c0_i32_0 : i32, i32
  }
  func.func @transform_9(%arg0: i32, %arg1: i32) -> (i32, i32) {
    %c0_i32 = arith.constant 0 : i32
    %c0_i32_0 = arith.constant 0 : i32
    %c0_i32_1 = arith.constant 0 : i32
    return %c0_i32, %c0_i32_0 : i32, i32
  }
  func.func @transform_10(%arg0: i32, %arg1: i32) -> (i32, i32) {
    %c0_i32 = arith.constant 0 : i32
    %c0_i32_0 = arith.constant 0 : i32
    %c0_i32_1 = arith.constant 0 : i32
    return %c0_i32, %c0_i32_0 : i32, i32
  }
  func.func @transform_11(%arg0: i32, %arg1: i32) -> (i32, i32, i32, i32) {
    %c0_i32 = arith.constant 0 : i32
    %c0_i32_0 = arith.constant 0 : i32
    %c0_i32_1 = arith.constant 0 : i32
    return %arg0, %arg1, %c0_i32, %c0_i32_0 : i32, i32, i32, i32
  }
}

</mosaic_0001>

<llo_original>
// kernel: tpu_custom_call.1
$region0: #{tpu_custom_call.1}
  #allocation0 [shape = 'u32[]', space=smem, size = 0x4, offset = 0x4, fixed_abs, tag = 'smem constant byte address 0x4 - core index']
  #allocation1 [shape = 'u32[144,128]{1,0:T(1,128)}', space=vmem, size = 0x12000, scoped, tag = 'internal scratch']
  #allocation2 [shape = 'bf16[10,16,4]{2,1,0:T(16,128)(2,1)}', space=vmem, size = 0xa000, scoped, tag = 'scratch operand']
  %s0 = inlined_call_operand.hbm [shape: bf16[2,16,16,16], index: 0, kind: input, shape index: {}]
  %s1 = inlined_call_operand.hbm [shape: bf16[2,16,16,16], index: 1, kind: input, shape index: {}]
  %s2 = inlined_call_operand.hbm [shape: bf16[2,16,16,16], index: 2, kind: input, shape index: {}]
  %s3 = inlined_call_operand.vmem [shape: f32[1,16], index: 3, kind: input, shape index: {}]
  %s4 = inlined_call_operand.vmem [shape: f32[1,16], index: 4, kind: input, shape index: {}]
  %s5 = inlined_call_operand.vmem [shape: bf16[16,4], index: 5, kind: input, shape index: {}]
  %s6 = inlined_call_operand.vmem [shape: f32[1,4], index: 6, kind: input, shape index: {}]
  %s7 = inlined_call_operand.vmem [shape: bf16[3,3,4,4], index: 7, kind: input, shape index: {}]
  %s8 = inlined_call_operand.vmem [shape: f32[1,4], index: 8, kind: input, shape index: {}]
  %s9 = inlined_call_operand.vmem [shape: bf16[4,16], index: 9, kind: input, shape index: {}]
  %s10 = inlined_call_operand.vmem [shape: f32[1,16], index: 10, kind: input, shape index: {}]
  %s11 = inlined_call_operand.hbm [shape: bf16[2,16,16,16], index: 11, kind: output, shape index: {}]
  %s12 = sld [smem:[#allocation0]]
  $region89: #{tpu_custom_call.1} parent=0
    _
  %s14 = ssub.s32 1, %s12
  %s15 = scalar_select 0, %s14, %s12
  $region1: #{tpu_custom_call.1} parent=0
    #allocation3 [shape = 'u8[65536]{0}', space=vmem, size = 0x10000, scoped, tag = 'input window, operand 0']
    #allocation4 [shape = 's32[2]{0}', space=sflag, size = 0x8, scoped, tag = 'scoped memory for tpu_custom_call.1']
    #allocation5 [shape = 's32[2]{0}', space=sflag, size = 0x8, scoped, tag = 'scoped memory for tpu_custom_call.1']
    #allocation6 [shape = 'u8[8192]{0}', space=vmem, size = 0x2000, scoped, tag = 'input window, operand 1']
    #allocation7 [shape = 's32[2]{0}', space=sflag, size = 0x8, scoped, tag = 'scoped memory for tpu_custom_call.1']
    #allocation8 [shape = 'u8[8192]{0}', space=vmem, size = 0x2000, scoped, tag = 'input window, operand 2']
    #allocation9 [shape = 'u8[65536]{0}', space=vmem, size = 0x10000, scoped, tag = 'output window, operand 0']
    %16 = vsyncpa [#allocation4], 0
    %s17 = scalar_lea.sflag [#allocation4], 1
    %18 = vsyncpa %s17, 0
    %19 = vsyncpa [#allocation7], 0
    %s20 = scalar_lea.sflag [#allocation7], 1
    %21 = vsyncpa %s20, 0
    %22 = vsyncpa [#allocation5], 0
    %s23 = scalar_lea.sflag [#allocation5], 1
    %24 = vsyncpa %s23, 0
    loop: start=0, step=1, limit=6
    $region2: #{tpu_custom_call.1} parent=1 // loop_pre_header
      _
    $region3: #{tpu_custom_call.1} parent=1 // loop_header
      %s26 = sphi 0, %s30
      %p27 = scmp.ge.s32.totalorder %s26, 6
      %s33 = sphi 0, %s45
      %s34 = sphi 0, %s41
      %s35 = sphi 0, %s33
      %s36 = sphi 0, %s34
      %s37 = sphi 0, %s35
      %s38 = sphi 0, %s36
      %s50 = sphi 0, %s52
      %s53 = sphi 0, %s50
      %s54 = sphi 0, %s53
      %s70 = sphi 0, %s54
      %s86 = sphi 0, %s88
      %s89 = sphi 0, %s86
      %s90 = sphi 0, %s89
      %s106 = sphi 0, %s90
      %s122 = sphi 0, %s124
      %s125 = sphi 0, %s122
      %s126 = sphi 0, %s125
      %s142 = sphi 0, %s126
      %s146 = sphi 0, %s146
      %s148 = sphi 0, %s146
      %s149 = sphi 0, %s148
      %s163 = sphi 0, %s149
      %s167 = sphi 0, %s167
      %s169 = sphi 0, %s167
      %s170 = sphi 0, %s169
      %s184 = sphi 0, %s170
      %s188 = sphi 0, %s188
      %s190 = sphi 0, %s188
      %s191 = sphi 0, %s190
      %s205 = sphi 0, %s191
      %s209 = sphi 0, %s209
      %s211 = sphi 0, %s209
      %s212 = sphi 0, %s211
      %s226 = sphi 0, %s212
      %s230 = sphi 0, %s230
      %s232 = sphi 0, %s230
      %s233 = sphi 0, %s232
      %s247 = sphi 0, %s233
      %s251 = sphi 0, %s251
      %s253 = sphi 0, %s251
      %s254 = sphi 0, %s253
      %s268 = sphi 0, %s254
      %s272 = sphi 0, %s272
      %s274 = sphi 0, %s272
      %s275 = sphi 0, %s274
      %s289 = sphi 0, %s275
      %s293 = sphi 0, %s293
      %s295 = sphi 0, %s293
      %s296 = sphi 0, %s295
      %s310 = sphi 0, %s296
      %s318 = sphi 0, %s320
      %s321 = sphi 0, %s318
      %s322 = sphi 0, %s321
      %s338 = sphi 0, %s322
    $region4: #{tpu_custom_call.1} parent=1 // loop_header_branch
      %29 = sbr.rel (%p27) target = $region8
    $region5: #{tpu_custom_call.1} parent=1 // loop_body
      %s31 = ssub.s32 %s26, 1
      %s32 = ssub.s32 %s26, 2
      %s39 = sadd.s32 1, %s34
      %p40 = scmp.ge.s32.totalorder %s39, 2
      %s41 = scalar_select %p40, 0, %s39
      %s42 = sadd.s32 1, %s33
      %s43 = scalar_select %p40, %s42, %s33
      %p44 = scmp.ge.s32.totalorder %s43, 2
      %s45 = scalar_select %p44, 0, %s43
      %s46 = ssub.s32 %s33, %s45
      %s47 = ssub.s32 %s34, %s41
      %s48 = sor.u32 %s46, %s47
      %p49 = scmp.eq.s32.totalorder %s48, 0
      %s51 = sadd.s32 %s50, 1
      %s52 = scalar_select %p49, %s50, %s51
      %p55 = pneg %p49
      %p56 = scmp.eq.s32.totalorder %s26, 3
      %p57 = por %p55, %p56
      %p58 = scmp.ne.s32.totalorder %s50, %s53
      %p59 = scmp.eq.s32.totalorder %s26, 0
      %p60 = por %p58, %p59
      %p61 = scmp.ne.s32.totalorder %s50, %s53
      %p62 = scmp.eq.s32.totalorder %s31, 3
      %p63 = por %p61, %p62
      %p64 = scmp.ne.s32.totalorder %s53, %s54
      %p65 = scmp.eq.s32.totalorder %s31, 0
      %p66 = por %p64, %p65
      %p67 = scmp.ne.s32.totalorder %s53, %s54
      %p68 = scmp.eq.s32.totalorder %s32, 3
      %p69 = por %p67, %p68
      %p71 = scmp.ne.s32.totalorder %s54, %s70
      %p72 = scmp.eq.s32.totalorder %s32, 0
      %p73 = por %p71, %p72
      %s74 = smul.u32 %s34, 8
      %s75 = ssub.s32 %s74, 1
      %p76 = scmp.gt.s32.totalorder %s75, 0
      %s77 = scalar_select %p76, %s75, 0
      %s78 = smul.u32 %s41, 8
      %s79 = ssub.s32 %s78, 1
      %p80 = scmp.gt.s32.totalorder %s79, 0
      %s81 = scalar_select %p80, %s79, 0
      %s82 = ssub.s32 %s33, %s45
      %s83 = ssub.s32 %s77, %s81
      %s84 = sor.u32 %s82, %s83
      %p85 = scmp.eq.s32.totalorder %s84, 0
      %s87 = sadd.s32 %s86, 1
      %s88 = scalar_select %p85, %s86, %s87
      %p91 = pneg %p85
      %p92 = scmp.eq.s32.totalorder %s26, 3
      %p93 = por %p91, %p92
      %p94 = scmp.ne.s32.totalorder %s86, %s89
      %p95 = scmp.eq.s32.totalorder %s26, 0
      %p96 = por %p94, %p95
      %p97 = scmp.ne.s32.totalorder %s86, %s89
      %p98 = scmp.eq.s32.totalorder %s31, 3
      %p99 = por %p97, %p98
      %p100 = scmp.ne.s32.totalorder %s89, %s90
      %p101 = scmp.eq.s32.totalorder %s31, 0
      %p102 = por %p100, %p101
      %p103 = scmp.ne.s32.totalorder %s89, %s90
      %p104 = scmp.eq.s32.totalorder %s32, 3
      %p105 = por %p103, %p104
      %p107 = scmp.ne.s32.totalorder %s90, %s106
      %p108 = scmp.eq.s32.totalorder %s32, 0
      %p109 = por %p107, %p108
      %s110 = smul.u32 %s34, 8
      %s111 = sadd.s32 %s110, 8
      %p112 = scmp.lt.s32.totalorder %s111, 15
      %s113 = scalar_select %p112, %s111, 15
      %s114 = smul.u32 %s41, 8
      %s115 = sadd.s32 %s114, 8
      %p116 = scmp.lt.s32.totalorder %s115, 15
      %s117 = scalar_select %p116, %s115, 15
      %s118 = ssub.s32 %s33, %s45
      %s119 = ssub.s32 %s113, %s117
      %s120 = sor.u32 %s118, %s119
      %p121 = scmp.eq.s32.totalorder %s120, 0
      %s123 = sadd.s32 %s122, 1
      %s124 = scalar_select %p121, %s122, %s123
      %p127 = pneg %p121
      %p128 = scmp.eq.s32.totalorder %s26, 3
      %p129 = por %p127, %p128
      %p130 = scmp.ne.s32.totalorder %s122, %s125
      %p131 = scmp.eq.s32.totalorder %s26, 0
      %p132 = por %p130, %p131
      %p133 = scmp.ne.s32.totalorder %s122, %s125
      %p134 = scmp.eq.s32.totalorder %s31, 3
      %p135 = por %p133, %p134
      %p136 = scmp.ne.s32.totalorder %s125, %s126
      %p137 = scmp.eq.s32.totalorder %s31, 0
      %p138 = por %p136, %p137
      %p139 = scmp.ne.s32.totalorder %s125, %s126
      %p140 = scmp.eq.s32.totalorder %s32, 3
      %p141 = por %p139, %p140
      %p143 = scmp.ne.s32.totalorder %s126, %s142
      %p144 = scmp.eq.s32.totalorder %s32, 0
      %p145 = por %p143, %p144
      %s147 = sadd.s32 %s146, 1
      %p150 = scmp.eq.s32.totalorder %s26, 3
      %p151 = scmp.ne.s32.totalorder %s146, %s148
      %p152 = scmp.eq.s32.totalorder %s26, 0
      %p153 = por %p151, %p152
      %p154 = scmp.ne.s32.totalorder %s146, %s148
      %p155 = scmp.eq.s32.totalorder %s31, 3
      %p156 = por %p154, %p155
      %p157 = scmp.ne.s32.totalorder %s148, %s149
      %p158 = scmp.eq.s32.totalorder %s31, 0
      %p159 = por %p157, %p158
      %p160 = scmp.ne.s32.totalorder %s148, %s149
      %p161 = scmp.eq.s32.totalorder %s32, 3
      %p162 = por %p160, %p161
      %p164 = scmp.ne.s32.totalorder %s149, %s163
      %p165 = scmp.eq.s32.totalorder %s32, 0
      %p166 = por %p164, %p165
      %s168 = sadd.s32 %s167, 1
      %p171 = scmp.eq.s32.totalorder %s26, 3
      %p172 = scmp.ne.s32.totalorder %s167, %s169
      %p173 = scmp.eq.s32.totalorder %s26, 0
      %p174 = por %p172, %p173
      %p175 = scmp.ne.s32.totalorder %s167, %s169
      %p176 = scmp.eq.s32.totalorder %s31, 3
      %p177 = por %p175, %p176
      %p178 = scmp.ne.s32.totalorder %s169, %s170
      %p179 = scmp.eq.s32.totalorder %s31, 0
      %p180 = por %p178, %p179
      %p181 = scmp.ne.s32.totalorder %s169, %s170
      %p182 = scmp.eq.s32.totalorder %s32, 3
      %p183 = por %p181, %p182
      %p185 = scmp.ne.s32.totalorder %s170, %s184
      %p186 = scmp.eq.s32.totalorder %s32, 0
      %p187 = por %p185, %p186
      %s189 = sadd.s32 %s188, 1
      %p192 = scmp.eq.s32.totalorder %s26, 3
      %p193 = scmp.ne.s32.totalorder %s188, %s190
      %p194 = scmp.eq.s32.totalorder %s26, 0
      %p195 = por %p193, %p194
      %p196 = scmp.ne.s32.totalorder %s188, %s190
      %p197 = scmp.eq.s32.totalorder %s31, 3
      %p198 = por %p196, %p197
      %p199 = scmp.ne.s32.totalorder %s190, %s191
      %p200 = scmp.eq.s32.totalorder %s31, 0
      %p201 = por %p199, %p200
      %p202 = scmp.ne.s32.totalorder %s190, %s191
      %p203 = scmp.eq.s32.totalorder %s32, 3
      %p204 = por %p202, %p203
      %p206 = scmp.ne.s32.totalorder %s191, %s205
      %p207 = scmp.eq.s32.totalorder %s32, 0
      %p208 = por %p206, %p207
      %s210 = sadd.s32 %s209, 1
      %p213 = scmp.eq.s32.totalorder %s26, 3
      %p214 = scmp.ne.s32.totalorder %s209, %s211
      %p215 = scmp.eq.s32.totalorder %s26, 0
      %p216 = por %p214, %p215
      %p217 = scmp.ne.s32.totalorder %s209, %s211
      %p218 = scmp.eq.s32.totalorder %s31, 3
      %p219 = por %p217, %p218
      %p220 = scmp.ne.s32.totalorder %s211, %s212
      %p221 = scmp.eq.s32.totalorder %s31, 0
      %p222 = por %p220, %p221
      %p223 = scmp.ne.s32.totalorder %s211, %s212
      %p224 = scmp.eq.s32.totalorder %s32, 3
      %p225 = por %p223, %p224
      %p227 = scmp.ne.s32.totalorder %s212, %s226
      %p228 = scmp.eq.s32.totalorder %s32, 0
      %p229 = por %p227, %p228
      %s231 = sadd.s32 %s230, 1
      %p234 = scmp.eq.s32.totalorder %s26, 3
      %p235 = scmp.ne.s32.totalorder %s230, %s232
      %p236 = scmp.eq.s32.totalorder %s26, 0
      %p237 = por %p235, %p236
      %p238 = scmp.ne.s32.totalorder %s230, %s232
      %p239 = scmp.eq.s32.totalorder %s31, 3
      %p240 = por %p238, %p239
      %p241 = scmp.ne.s32.totalorder %s232, %s233
      %p242 = scmp.eq.s32.totalorder %s31, 0
      %p243 = por %p241, %p242
      %p244 = scmp.ne.s32.totalorder %s232, %s233
      %p245 = scmp.eq.s32.totalorder %s32, 3
      %p246 = por %p244, %p245
      %p248 = scmp.ne.s32.totalorder %s233, %s247
      %p249 = scmp.eq.s32.totalorder %s32, 0
      %p250 = por %p248, %p249
      %s252 = sadd.s32 %s251, 1
      %p255 = scmp.eq.s32.totalorder %s26, 3
      %p256 = scmp.ne.s32.totalorder %s251, %s253
      %p257 = scmp.eq.s32.totalorder %s26, 0
      %p258 = por %p256, %p257
      %p259 = scmp.ne.s32.totalorder %s251, %s253
      %p260 = scmp.eq.s32.totalorder %s31, 3
      %p261 = por %p259, %p260
      %p262 = scmp.ne.s32.totalorder %s253, %s254
      %p263 = scmp.eq.s32.totalorder %s31, 0
      %p264 = por %p262, %p263
      %p265 = scmp.ne.s32.totalorder %s253, %s254
      %p266 = scmp.eq.s32.totalorder %s32, 3
      %p267 = por %p265, %p266
      %p269 = scmp.ne.s32.totalorder %s254, %s268
      %p270 = scmp.eq.s32.totalorder %s32, 0
      %p271 = por %p269, %p270
      %s273 = sadd.s32 %s272, 1
      %p276 = scmp.eq.s32.totalorder %s26, 3
      %p277 = scmp.ne.s32.totalorder %s272, %s274
      %p278 = scmp.eq.s32.totalorder %s26, 0
      %p279 = por %p277, %p278
      %p280 = scmp.ne.s32.totalorder %s272, %s274
      %p281 = scmp.eq.s32.totalorder %s31, 3
      %p282 = por %p280, %p281
      %p283 = scmp.ne.s32.totalorder %s274, %s275
      %p284 = scmp.eq.s32.totalorder %s31, 0
      %p285 = por %p283, %p284
      %p286 = scmp.ne.s32.totalorder %s274, %s275
      %p287 = scmp.eq.s32.totalorder %s32, 3
      %p288 = por %p286, %p287
      %p290 = scmp.ne.s32.totalorder %s275, %s289
      %p291 = scmp.eq.s32.totalorder %s32, 0
      %p292 = por %p290, %p291
      %s294 = sadd.s32 %s293, 1
      %p297 = scmp.eq.s32.totalorder %s26, 3
      %p298 = scmp.ne.s32.totalorder %s293, %s295
      %p299 = scmp.eq.s32.totalorder %s26, 0
      %p300 = por %p298, %p299
      %p301 = scmp.ne.s32.totalorder %s293, %s295
      %p302 = scmp.eq.s32.totalorder %s31, 3
      %p303 = por %p301, %p302
      %p304 = scmp.ne.s32.totalorder %s295, %s296
      %p305 = scmp.eq.s32.totalorder %s31, 0
      %p306 = por %p304, %p305
      %p307 = scmp.ne.s32.totalorder %s295, %s296
      %p308 = scmp.eq.s32.totalorder %s32, 3
      %p309 = por %p307, %p308
      %p311 = scmp.ne.s32.totalorder %s296, %s310
      %p312 = scmp.eq.s32.totalorder %s32, 0
      %p313 = por %p311, %p312
      %s314 = ssub.s32 %s33, %s45
      %s315 = ssub.s32 %s34, %s41
      %s316 = sor.u32 %s314, %s315
      %p317 = scmp.eq.s32.totalorder %s316, 0
      %s319 = sadd.s32 %s318, 1
      %s320 = scalar_select %p317, %s318, %s319
      %p323 = pneg %p317
      %p324 = scmp.eq.s32.totalorder %s26, 3
      %p325 = por %p323, %p324
      %p326 = scmp.ne.s32.totalorder %s318, %s321
      %p327 = scmp.eq.s32.totalorder %s26, 0
      %p328 = por %p326, %p327
      %p329 = scmp.ne.s32.totalorder %s318, %s321
      %p330 = scmp.eq.s32.totalorder %s31, 3
      %p331 = por %p329, %p330
      %p332 = scmp.ne.s32.totalorder %s321, %s322
      %p333 = scmp.eq.s32.totalorder %s31, 0
      %p334 = por %p332, %p333
      %p335 = scmp.ne.s32.totalorder %s321, %s322
      %p336 = scmp.eq.s32.totalorder %s32, 3
      %p337 = por %p335, %p336
      %p339 = scmp.ne.s32.totalorder %s322, %s338
      %p340 = scmp.eq.s32.totalorder %s32, 0
      %p341 = por %p339, %p340
      %p342 = scmp.le.s32.totalorder 1, %s26
      %p343 = scmp.lt.s32.totalorder %s26, 5
      %p344 = pnand %p342, %p343
      %p345 = pneg %p344
      // Predicated region
      $region9: #{tpu_custom_call.1} parent=5 // pred_check
        _
      $region10: #{tpu_custom_call.1} parent=5 // pred_check_branch
        %347 = sbr.rel (%p344) target = $region12
      $region11: #{tpu_custom_call.1} parent=5 // pred_region
        %s348 = ssub.s32 %s26, 1
        // Predicated region
        $region13: #{tpu_custom_call.1} parent=11 // pred_check
          %p349 = pneg %p159
        $region14: #{tpu_custom_call.1} parent=11 // pred_check_branch
          %351 = sbr.rel (%p349) target = $region16
        $region15: #{tpu_custom_call.1} parent=11 // pred_region
          _
        $region16: #{tpu_custom_call.1} parent=11 // pred_fallthru
          _
        // Predicated region
        $region17: #{tpu_custom_call.1} parent=11 // pred_check
          %p352 = pneg %p180
        $region18: #{tpu_custom_call.1} parent=11 // pred_check_branch
          %354 = sbr.rel (%p352) target = $region20
        $region19: #{tpu_custom_call.1} parent=11 // pred_region
          _
        $region20: #{tpu_custom_call.1} parent=11 // pred_fallthru
          _
        // Predicated region
        $region21: #{tpu_custom_call.1} parent=11 // pred_check
          %p355 = pneg %p201
        $region22: #{tpu_custom_call.1} parent=11 // pred_check_branch
          %357 = sbr.rel (%p355) target = $region24
        $region23: #{tpu_custom_call.1} parent=11 // pred_region
          _
        $region24: #{tpu_custom_call.1} parent=11 // pred_fallthru
          _
        // Predicated region
        $region25: #{tpu_custom_call.1} parent=11 // pred_check
          %p358 = pneg %p222
        $region26: #{tpu_custom_call.1} parent=11 // pred_check_branch
          %360 = sbr.rel (%p358) target = $region28
        $region27: #{tpu_custom_call.1} parent=11 // pred_region
          _
        $region28: #{tpu_custom_call.1} parent=11 // pred_fallthru
          _
        // Predicated region
        $region29: #{tpu_custom_call.1} parent=11 // pred_check
          %p361 = pneg %p243
        $region30: #{tpu_custom_call.1} parent=11 // pred_check_branch
          %363 = sbr.rel (%p361) target = $region32
        $region31: #{tpu_custom_call.1} parent=11 // pred_region
          _
        $region32: #{tpu_custom_call.1} parent=11 // pred_fallthru
          _
        // Predicated region
        $region33: #{tpu_custom_call.1} parent=11 // pred_check
          %p364 = pneg %p264
        $region34: #{tpu_custom_call.1} parent=11 // pred_check_branch
          %366 = sbr.rel (%p364) target = $region36
        $region35: #{tpu_custom_call.1} parent=11 // pred_region
          _
        $region36: #{tpu_custom_call.1} parent=11 // pred_fallthru
          _
        // Predicated region
        $region37: #{tpu_custom_call.1} parent=11 // pred_check
          %p367 = pneg %p285
        $region38: #{tpu_custom_call.1} parent=11 // pred_check_branch
          %369 = sbr.rel (%p367) target = $region40
        $region39: #{tpu_custom_call.1} parent=11 // pred_region
          _
        $region40: #{tpu_custom_call.1} parent=11 // pred_fallthru
          _
        // Predicated region
        $region41: #{tpu_custom_call.1} parent=11 // pred_check
          %p370 = pneg %p306
        $region42: #{tpu_custom_call.1} parent=11 // pred_check_branch
          %372 = sbr.rel (%p370) target = $region44
        $region43: #{tpu_custom_call.1} parent=11 // pred_region
          _
        $region44: #{tpu_custom_call.1} parent=11 // pred_fallthru
          _
      $region12: #{tpu_custom_call.1} parent=5 // pred_fallthru
        _
      %p373 = scmp.lt.s32.totalorder %s26, 4
      // Predicated region
      $region45: #{tpu_custom_call.1} parent=5 // pred_check
        %p374 = pneg %p373
      $region46: #{tpu_custom_call.1} parent=5 // pred_check_branch
        %376 = sbr.rel (%p374) target = $region48
      $region47: #{tpu_custom_call.1} parent=5 // pred_region
        // Predicated region
        $region49: #{tpu_custom_call.1} parent=47 // pred_check
          %p377 = pneg %p60
        $region50: #{tpu_custom_call.1} parent=47 // pred_check_branch
          %379 = sbr.rel (%p377) target = $region52
        $region51: #{tpu_custom_call.1} parent=47 // pred_region
          %s380 = sand.u32 %s50, 1
          %s381 = scalar_lea.sflag [#allocation4], %s380
          %s382 = sand.u32 %s50, 1
          %s383 = smul.addr %s382, 64
          %s384 = scalar_lea.vmem [#allocation3], %s383
          %s385 = smul.u32 8, %s34
          %s387 = ssub.s32 1024, 1024
          %388 = vsyncadd %s381, %s387
          %s389 = smul.addr %s385, 2
          %s390 = smul.addr %s33, 32
          %s391 = sadd.s32 %s389, %s390
          %s392 = smul.addr %s391, 64
          %s393 = scalar_lea.hbm %s0, %s392
          %s394 = sshll.u32 %s384, 4
          %s395 = int_to_ptr.vmem [resolvable:$true] %s394
          %400 = dma.hbm_to_vmem [thread:$0]  %s393, 1024, %s395, %s381, 64, 64, 4
        $region52: #{tpu_custom_call.1} parent=47 // pred_fallthru
          _
        // Predicated region
        $region53: #{tpu_custom_call.1} parent=47 // pred_check
          %p401 = pneg %p96
        $region54: #{tpu_custom_call.1} parent=47 // pred_check_branch
          %403 = sbr.rel (%p401) target = $region56
        $region55: #{tpu_custom_call.1} parent=47 // pred_region
          %s404 = sand.u32 %s26, 1
          %s405 = scalar_lea.sflag [#allocation7], %s404
          %s406 = sand.u32 %s86, 1
          %s407 = smul.addr %s406, 8
          %s408 = scalar_lea.vmem [#allocation6], %s407
          %s409 = smul.u32 %s34, 8
          %s410 = ssub.s32 %s409, 1
          %p411 = scmp.gt.s32.totalorder %s410, 0
          %s412 = scalar_select %p411, %s410, 0
          %s414 = ssub.s32 128, 128
          %415 = vsyncadd %s405, %s414
          %s416 = smul.addr %s412, 2
          %s417 = smul.addr %s33, 32
          %s418 = sadd.s32 %s416, %s417
          %s419 = smul.addr %s418, 64
          %s420 = scalar_lea.hbm %s1, %s419
          %s421 = sshll.u32 %s408, 4
          %s422 = int_to_ptr.vmem [resolvable:$true] %s421
          %427 = dma.hbm_to_vmem [thread:$0]  %s420, 128, %s422, %s405, 64, 64, 4
        $region56: #{tpu_custom_call.1} parent=47 // pred_fallthru
          _
        // Predicated region
        $region57: #{tpu_custom_call.1} parent=47 // pred_check
          %p428 = pneg %p132
        $region58: #{tpu_custom_call.1} parent=47 // pred_check_branch
          %430 = sbr.rel (%p428) target = $region60
        $region59: #{tpu_custom_call.1} parent=47 // pred_region
          %s431 = sand.u32 %s26, 1
          %s432 = scalar_lea.sflag [#allocation7], %s431
          %s433 = sand.u32 %s122, 1
          %s434 = smul.addr %s433, 8
          %s435 = scalar_lea.vmem [#allocation8], %s434
          %s436 = smul.u32 %s34, 8
          %s437 = sadd.s32 %s436, 8
          %p438 = scmp.lt.s32.totalorder %s437, 15
          %s439 = scalar_select %p438, %s437, 15
          %s441 = ssub.s32 128, 128
          %442 = vsyncadd %s432, %s441
          %s443 = smul.addr %s439, 2
          %s444 = smul.addr %s33, 32
          %s445 = sadd.s32 %s443, %s444
          %s446 = smul.addr %s445, 64
          %s447 = scalar_lea.hbm %s2, %s446
          %s448 = sshll.u32 %s435, 4
          %s449 = int_to_ptr.vmem [resolvable:$true] %s448
          %454 = dma.hbm_to_vmem [thread:$0]  %s447, 128, %s449, %s432, 64, 64, 4
        $region60: #{tpu_custom_call.1} parent=47 // pred_fallthru
          _
      $region48: #{tpu_custom_call.1} parent=5 // pred_fallthru
        _
      %p455 = scmp.le.s32.totalorder 1, %s26
      %p456 = scmp.lt.s32.totalorder %s26, 5
      %p457 = pnand %p455, %p456
      %p458 = pneg %p457
      // Predicated region
      $region61: #{tpu_custom_call.1} parent=5 // pred_check
        _
      $region62: #{tpu_custom_call.1} parent=5 // pred_check_branch
        %460 = sbr.rel (%p457) target = $region64
      $region63: #{tpu_custom_call.1} parent=5 // pred_region
        %s461 = ssub.s32 %s26, 1
        %s462 = sand.u32 %s53, 1
        %s463 = scalar_lea.sflag [#allocation4], %s462
        %s464 = sand.u32 %s53, 1
        %s465 = smul.addr %s464, 64
        %s466 = scalar_lea.vmem [#allocation3], %s465
        // Predicated region
        $region65: #{tpu_custom_call.1} parent=63 // pred_check
          %p467 = pneg %p66
        $region66: #{tpu_custom_call.1} parent=63 // pred_check_branch
          %469 = sbr.rel (%p467) target = $region68
        $region67: #{tpu_custom_call.1} parent=63 // pred_region
          %470 = dma.done %s463, 1024
        $region68: #{tpu_custom_call.1} parent=63 // pred_fallthru
          _
        %s471 = sand.u32 %s31, 1
        %s472 = scalar_lea.sflag [#allocation7], %s471
        %s473 = sand.u32 %s89, 1
        %s474 = smul.addr %s473, 8
        %s475 = scalar_lea.vmem [#allocation6], %s474
        // Predicated region
        $region69: #{tpu_custom_call.1} parent=63 // pred_check
          %p476 = pneg %p102
        $region70: #{tpu_custom_call.1} parent=63 // pred_check_branch
          %478 = sbr.rel (%p476) target = $region72
        $region71: #{tpu_custom_call.1} parent=63 // pred_region
          %479 = dma.done %s472, 128
        $region72: #{tpu_custom_call.1} parent=63 // pred_fallthru
          _
        %s480 = sand.u32 %s31, 1
        %s481 = scalar_lea.sflag [#allocation7], %s480
        %s482 = sand.u32 %s125, 1
        %s483 = smul.addr %s482, 8
        %s484 = scalar_lea.vmem [#allocation8], %s483
        // Predicated region
        $region73: #{tpu_custom_call.1} parent=63 // pred_check
          %p485 = pneg %p138
        $region74: #{tpu_custom_call.1} parent=63 // pred_check_branch
          %487 = sbr.rel (%p485) target = $region76
        $region75: #{tpu_custom_call.1} parent=63 // pred_region
          %488 = dma.done %s481, 128
        $region76: #{tpu_custom_call.1} parent=63 // pred_fallthru
          _
        %s489 = sand.u32 %s53, 1
        %s490 = scalar_lea.sflag [#allocation4], %s489
        %s491 = sand.u32 %s53, 1
        %s492 = smul.addr %s491, 64
        %s493 = scalar_lea.vmem [#allocation3], %s492
        %p494 = pneg %p66
        %p495 = pneg %p63
        %s496 = sand.u32 %s31, 1
        %s497 = scalar_lea.sflag [#allocation7], %s496
        %s498 = sand.u32 %s89, 1
        %s499 = smul.addr %s498, 8
        %s500 = scalar_lea.vmem [#allocation6], %s499
        %p501 = pneg %p102
        %p502 = pneg %p99
        %s503 = sand.u32 %s31, 1
        %s504 = scalar_lea.sflag [#allocation7], %s503
        %s505 = sand.u32 %s125, 1
        %s506 = smul.addr %s505, 8
        %s507 = scalar_lea.vmem [#allocation8], %s506
        %p508 = pneg %p138
        %p509 = pneg %p135
        %p510 = pneg %p159
        %p511 = pneg %p156
        %p512 = pneg %p180
        %p513 = pneg %p177
        %p514 = pneg %p201
        %p515 = pneg %p198
        %p516 = pneg %p222
        %p517 = pneg %p219
        %p518 = pneg %p243
        %p519 = pneg %p240
        %p520 = pneg %p264
        %p521 = pneg %p261
        %p522 = pneg %p285
        %p523 = pneg %p282
        %p524 = pneg %p306
        %p525 = pneg %p303
        %p526 = pneg %p334
        %p527 = pneg %p331
        %s528 = sand.u32 %s321, 1
        %s529 = scalar_lea.sflag [#allocation5], %s528
        %s530 = sand.u32 %s321, 1
        %s531 = smul.addr %s530, 64
        %s532 = scalar_lea.vmem [#allocation9], %s531
        %s533 = smul.u32 8, %s36
        %s534 = smul.u32 %s36, 8
        %s535 = ssub.s32 %s534, 1
        %p536 = scmp.gt.s32.totalorder %s535, 0
        %s537 = scalar_select %p536, %s535, 0
        %s538 = smul.u32 %s36, 8
        %s539 = sadd.s32 %s538, 8
        %p540 = scmp.lt.s32.totalorder %s539, 15
        %s541 = scalar_select %p540, %s539, 15
        %s542 = smul.u32 8, %s36
        %v544 = vld [vmem:[%s3] sm:$0x1]
        %v545 = vld [vmem:[%s4] sm:$0x1]
        %v546 = vld [vmem:[%s5] sm:$0xf]
        %v547 = vld [vmem:[%s5 + $0x4] sm:$0xf]
        %v548 = vld [vmem:[%s6] sm:$0x1]
        %v549 = vld [vmem:[%s466] sm:$0xf]
        %v550 = vld [vmem:[%s466 + $0x4] sm:$0xf]
        %v551 = vld [vmem:[%s466 + $0x8] sm:$0xf]
        %v552 = vld [vmem:[%s466 + $0xc] sm:$0xf]
        %v553 = vld [vmem:[%s466 + $0x10] sm:$0xf]
        %v554 = vld [vmem:[%s466 + $0x14] sm:$0xf]
        %v555 = vld [vmem:[%s466 + $0x18] sm:$0xf]
        %v556 = vld [vmem:[%s466 + $0x1c] sm:$0xf]
        %v557 = vld [vmem:[%s466 + $0x20] sm:$0xf]
        %v558 = vld [vmem:[%s466 + $0x24] sm:$0xf]
        %v559 = vld [vmem:[%s466 + $0x28] sm:$0xf]
        %v560 = vld [vmem:[%s466 + $0x2c] sm:$0xf]
        %v561 = vld [vmem:[%s466 + $0x30] sm:$0xf]
        %v562 = vld [vmem:[%s466 + $0x34] sm:$0xf]
        %v563 = vld [vmem:[%s466 + $0x38] sm:$0xf]
        %v564 = vld [vmem:[%s466 + $0x3c] sm:$0xf]
        %v565 = vunpack.c.l.bf16 %v549
        %v566 = vunpack.c.l.bf16 %v550
        %v567 = vunpack.c.l.bf16 %v551
        %v568 = vunpack.c.l.bf16 %v552
        %v569 = vunpack.c.l.bf16 %v553
        %v570 = vunpack.c.l.bf16 %v554
        %v571 = vunpack.c.l.bf16 %v555
        %v572 = vunpack.c.l.bf16 %v556
        %v573 = vunpack.c.l.bf16 %v557
        %v574 = vunpack.c.l.bf16 %v558
        %v575 = vunpack.c.l.bf16 %v559
        %v576 = vunpack.c.l.bf16 %v560
        %v577 = vunpack.c.l.bf16 %v561
        %v578 = vunpack.c.l.bf16 %v562
        %v579 = vunpack.c.l.bf16 %v563
        %v580 = vunpack.c.l.bf16 %v564
        %v582 = vlaneseq
        %v583 = vshrl.u32 %v582, 7
        %v584 = vsub.s32 0, %v583
        %v585 = vrot.slane %v544, %v584
        %v587 = vmul.f32 %v565, %v585
        %v588 = vmul.f32 %v566, %v585
        %v589 = vmul.f32 %v567, %v585
        %v590 = vmul.f32 %v568, %v585
        %v591 = vmul.f32 %v569, %v585
        %v592 = vmul.f32 %v570, %v585
        %v593 = vmul.f32 %v571, %v585
        %v594 = vmul.f32 %v572, %v585
        %v595 = vmul.f32 %v573, %v585
        %v596 = vmul.f32 %v574, %v585
        %v597 = vmul.f32 %v575, %v585
        %v598 = vmul.f32 %v576, %v585
        %v599 = vmul.f32 %v577, %v585
        %v600 = vmul.f32 %v578, %v585
        %v601 = vmul.f32 %v579, %v585
        %v602 = vmul.f32 %v580, %v585
        %v604 = vlaneseq
        %v605 = vshrl.u32 %v604, 7
        %v606 = vsub.s32 0, %v605
        %v607 = vrot.slane %v545, %v606
        %v609 = vadd.f32 %v587, %v607
        %v610 = vadd.f32 %v588, %v607
        %v611 = vadd.f32 %v589, %v607
        %v612 = vadd.f32 %v590, %v607
        %v613 = vadd.f32 %v591, %v607
        %v614 = vadd.f32 %v592, %v607
        %v615 = vadd.f32 %v593, %v607
        %v616 = vadd.f32 %v594, %v607
        %v617 = vadd.f32 %v595, %v607
        %v618 = vadd.f32 %v596, %v607
        %v619 = vadd.f32 %v597, %v607
        %v620 = vadd.f32 %v598, %v607
        %v621 = vadd.f32 %v599, %v607
        %v622 = vadd.f32 %v600, %v607
        %v623 = vadd.f32 %v601, %v607
        %v624 = vadd.f32 %v602, %v607
        %v625 = vmax.f32 %v609, 0.0
        %v626 = vmax.f32 %v610, 0.0
        %v627 = vmax.f32 %v611, 0.0
        %v628 = vmax.f32 %v612, 0.0
        %v629 = vmax.f32 %v613, 0.0
        %v630 = vmax.f32 %v614, 0.0
        %v631 = vmax.f32 %v615, 0.0
        %v632 = vmax.f32 %v616, 0.0
        %v633 = vmax.f32 %v617, 0.0
        %v634 = vmax.f32 %v618, 0.0
        %v635 = vmax.f32 %v619, 0.0
        %v636 = vmax.f32 %v620, 0.0
        %v637 = vmax.f32 %v621, 0.0
        %v638 = vmax.f32 %v622, 0.0
        %v639 = vmax.f32 %v623, 0.0
        %v640 = vmax.f32 %v624, 0.0
        %v641 = vpack.c.bf16 %v626, %v625
        %v642 = vpack.c.bf16 %v628, %v627
        %v643 = vpack.c.bf16 %v630, %v629
        %v644 = vpack.c.bf16 %v632, %v631
        %v645 = vpack.c.bf16 %v634, %v633
        %v646 = vpack.c.bf16 %v636, %v635
        %v647 = vpack.c.bf16 %v638, %v637
        %v648 = vpack.c.bf16 %v640, %v639
        %v650 = vlaneseq
        %v651 = vshrl.u32 %v650, 7
        %v652 = vsub.s32 0, %v651
        %v653 = vrot.slane %v548, %v652
        %v657 = vunpack.c.l.b16 %v546
        %v658 = vunpack.c.l.b16 %v547
        %v659 = vpack.c.b16 %v658, %v657
        %vm661 = vcmask 130048
        %v663 = vsel %vm661, %v641, 0
        %v666 = vsel %vm661, %v642, 0
        %v669 = vsel %vm661, %v643, 0
        %v672 = vsel %vm661, %v644, 0
        %v675 = vsel %vm661, %v645, 0
        %v678 = vsel %vm661, %v646, 0
        %v681 = vsel %vm661, %v647, 0
        %v684 = vsel %vm661, %v648, 0
        %686 = vmatprep.subr.bf16.mxu0 0
        %687 = vmatpush1.bf16.msra.mxu0 %v659
        %688 = vmatprep.subr.bf16.mxu0 0
        %689 = vmatpush1.bf16.msra.mxu0 0
        %690 = vmatprep.subr.bf16.mxu0 0
        %691 = vmatpush1.bf16.msra.mxu0 0
        %692 = vmatprep.subr.bf16.mxu0 0
        %693 = vmatpush1.bf16.msra.mxu0 0
        %694 = vmatprep.subr.bf16.mxu0 0
        %695 = vmatpush1.bf16.msra.mxu0 0
        %696 = vmatprep.subr.bf16.mxu0 0
        %697 = vmatpush1.bf16.msra.mxu0 0
        %698 = vmatprep.subr.bf16.mxu0 0
        %699 = vmatpush1.bf16.msra.mxu0 0
        %700 = vmatprep.subr.bf16.mxu0 0
        %701 = vmatpush1.bf16.msra.mxu0 0
        %702 = vmatprep.subr.bf16.mxu0 0
        %703 = vmatpush1.bf16.msra.mxu0 0
        %704 = vmatprep.subr.bf16.mxu0 0
        %705 = vmatpush1.bf16.msra.mxu0 0
        %706 = vmatprep.subr.bf16.mxu0 0
        %707 = vmatpush1.bf16.msra.mxu0 0
        %708 = vmatprep.subr.bf16.mxu0 0
        %709 = vmatpush1.bf16.msra.mxu0 0
        %710 = vmatprep.subr.bf16.mxu0 0
        %711 = vmatpush1.bf16.msra.mxu0 0
        %712 = vmatprep.subr.bf16.mxu0 0
        %713 = vmatpush1.bf16.msra.mxu0 0
        %714 = vmatprep.subr.bf16.mxu0 0
        %715 = vmatpush1.bf16.msra.mxu0 0
        %716 = vmatprep.subr.bf16.mxu0 0
        %717 = vmatpush1.bf16.msra.mxu0 0
        %718 = vmatprep.mubr.bf16.mxu0 0
        %719 = vmatmul.mubr.bf16.gmra.mrb[0].mxu0 %v663
        %v720 = vpop.f32.mrb[0].mxu0
        %v721 = vadd.f32 %v653, %v720
        %v722 = vpop.f32.mrb[0].mxu0
        %v723 = vpop.f32.mrb[0].mxu0
        %v724 = vadd.f32 %v653, %v723
        %v725 = vpop.f32.mrb[0].mxu0
        %726 = vmatprep.mubr.bf16.mxu0 0
        %727 = vmatmul.mubr.bf16.gmra.mrb[0].mxu0 %v666
        %v728 = vpop.f32.mrb[0].mxu0
        %v729 = vadd.f32 %v653, %v728
        %v730 = vpop.f32.mrb[0].mxu0
        %v731 = vpop.f32.mrb[0].mxu0
        %v732 = vadd.f32 %v653, %v731
        %v733 = vpop.f32.mrb[0].mxu0
        %734 = vmatprep.mubr.bf16.mxu0 0
        %735 = vmatmul.mubr.bf16.gmra.mrb[0].mxu0 %v669
        %v736 = vpop.f32.mrb[0].mxu0
        %v737 = vadd.f32 %v653, %v736
        %v738 = vpop.f32.mrb[0].mxu0
        %v739 = vpop.f32.mrb[0].mxu0
        %v740 = vadd.f32 %v653, %v739
        %v741 = vpop.f32.mrb[0].mxu0
        %742 = vmatprep.mubr.bf16.mxu0 0
        %743 = vmatmul.mubr.bf16.gmra.mrb[0].mxu0 %v672
        %v744 = vpop.f32.mrb[0].mxu0
        %v745 = vadd.f32 %v653, %v744
        %v746 = vpop.f32.mrb[0].mxu0
        %v747 = vpop.f32.mrb[0].mxu0
        %v748 = vadd.f32 %v653, %v747
        %v749 = vpop.f32.mrb[0].mxu0
        %750 = vmatprep.mubr.bf16.mxu0 0
        %751 = vmatmul.mubr.bf16.gmra.mrb[0].mxu0 %v675
        %v752 = vpop.f32.mrb[0].mxu0
        %v753 = vadd.f32 %v653, %v752
        %v754 = vpop.f32.mrb[0].mxu0
        %v755 = vpop.f32.mrb[0].mxu0
        %v756 = vadd.f32 %v653, %v755
        %v757 = vpop.f32.mrb[0].mxu0
        %758 = vmatprep.mubr.bf16.mxu0 0
        %759 = vmatmul.mubr.bf16.gmra.mrb[0].mxu0 %v678
        %v760 = vpop.f32.mrb[0].mxu0
        %v761 = vadd.f32 %v653, %v760
        %v762 = vpop.f32.mrb[0].mxu0
        %v763 = vpop.f32.mrb[0].mxu0
        %v764 = vadd.f32 %v653, %v763
        %v765 = vpop.f32.mrb[0].mxu0
        %766 = vmatprep.mubr.bf16.mxu0 0
        %767 = vmatmul.mubr.bf16.gmra.mrb[0].mxu0 %v681
        %v768 = vpop.f32.mrb[0].mxu0
        %v769 = vadd.f32 %v653, %v768
        %v770 = vpop.f32.mrb[0].mxu0
        %v771 = vpop.f32.mrb[0].mxu0
        %v772 = vadd.f32 %v653, %v771
        %v773 = vpop.f32.mrb[0].mxu0
        %774 = vmatprep.mubr.bf16.mxu0 0
        %775 = vmatmul.mubr.bf16.gmra.mrb[0].mxu0 %v684
        %v776 = vpop.f32.mrb[0].mxu0
        %v777 = vadd.f32 %v653, %v776
        %v778 = vpop.f32.mrb[0].mxu0
        %v779 = vpop.f32.mrb[0].mxu0
        %v780 = vadd.f32 %v653, %v779
        %v781 = vpop.f32.mrb[0].mxu0
        %782 = vdwg.mxu0
        %v783 = vmax.f32 %v721, 0.0
        %v784 = vmax.f32 %v724, 0.0
        %v785 = vmax.f32 %v729, 0.0
        %v786 = vmax.f32 %v732, 0.0
        %v787 = vmax.f32 %v737, 0.0
        %v788 = vmax.f32 %v740, 0.0
        %v789 = vmax.f32 %v745, 0.0
        %v790 = vmax.f32 %v748, 0.0
        %v791 = vmax.f32 %v753, 0.0
        %v792 = vmax.f32 %v756, 0.0
        %v793 = vmax.f32 %v761, 0.0
        %v794 = vmax.f32 %v764, 0.0
        %v795 = vmax.f32 %v769, 0.0
        %v796 = vmax.f32 %v772, 0.0
        %v797 = vmax.f32 %v777, 0.0
        %v798 = vmax.f32 %v780, 0.0
        %v799 = vpack.c.bf16 %v784, %v783
        %v800 = vpack.c.bf16 %v786, %v785
        %v801 = vpack.c.bf16 %v788, %v787
        %v802 = vpack.c.bf16 %v790, %v789
        %v803 = vpack.c.bf16 %v792, %v791
        %v804 = vpack.c.bf16 %v794, %v793
        %v805 = vpack.c.bf16 %v796, %v795
        %v806 = vpack.c.bf16 %v798, %v797
        %s807 = scalar_lea.vmem [#allocation2], 8
        %vm808 = vcmask 31744
        %809 = vst.msk [vmem:[%s807] sm:$0xff] %vm808, %v799
        %810 = vst.msk [vmem:[%s807 + $0x8] sm:$0xff] %vm808, %v800
        %811 = vst.msk [vmem:[%s807 + $0x10] sm:$0xff] %vm808, %v801
        %812 = vst.msk [vmem:[%s807 + $0x18] sm:$0xff] %vm808, %v802
        %813 = vst.msk [vmem:[%s807 + $0x20] sm:$0xff] %vm808, %v803
        %814 = vst.msk [vmem:[%s807 + $0x28] sm:$0xff] %vm808, %v804
        %815 = vst.msk [vmem:[%s807 + $0x30] sm:$0xff] %vm808, %v805
        %816 = vst.msk [vmem:[%s807 + $0x38] sm:$0xff] %vm808, %v806
        %v817 = vld [vmem:[%s475] sm:$0xf]
        %v818 = vld [vmem:[%s475 + $0x4] sm:$0xf]
        %v819 = vunpack.c.l.bf16 %v817
        %v820 = vunpack.c.l.bf16 %v818
        %v821 = vmul.f32 %v819, %v585
        %v822 = vmul.f32 %v820, %v585
        %v823 = vadd.f32 %v821, %v607
        %v824 = vadd.f32 %v822, %v607
        %v825 = vmax.f32 %v823, 0.0
        %v826 = vmax.f32 %v824, 0.0
        %v827 = vpack.c.bf16 %v826, %v825
        %v829 = vsel %vm661, %v827, 0
        %831 = vmatprep.subr.bf16.mxu0 0
        %832 = vmatpush1.bf16.msra.mxu0 %v659
        %833 = vmatprep.subr.bf16.mxu0 0
        %834 = vmatpush1.bf16.msra.mxu0 0
        %835 = vmatprep.subr.bf16.mxu0 0
        %836 = vmatpush1.bf16.msra.mxu0 0
        %837 = vmatprep.subr.bf16.mxu0 0
        %838 = vmatpush1.bf16.msra.mxu0 0
        %839 = vmatprep.subr.bf16.mxu0 0
        %840 = vmatpush1.bf16.msra.mxu0 0
        %841 = vmatprep.subr.bf16.mxu0 0
        %842 = vmatpush1.bf16.msra.mxu0 0
        %843 = vmatprep.subr.bf16.mxu0 0
        %844 = vmatpush1.bf16.msra.mxu0 0
        %845 = vmatprep.subr.bf16.mxu0 0
        %846 = vmatpush1.bf16.msra.mxu0 0
        %847 = vmatprep.subr.bf16.mxu0 0
        %848 = vmatpush1.bf16.msra.mxu0 0
        %849 = vmatprep.subr.bf16.mxu0 0
        %850 = vmatpush1.bf16.msra.mxu0 0
        %851 = vmatprep.subr.bf16.mxu0 0
        %852 = vmatpush1.bf16.msra.mxu0 0
        %853 = vmatprep.subr.bf16.mxu0 0
        %854 = vmatpush1.bf16.msra.mxu0 0
        %855 = vmatprep.subr.bf16.mxu0 0
        %856 = vmatpush1.bf16.msra.mxu0 0
        %857 = vmatprep.subr.bf16.mxu0 0
        %858 = vmatpush1.bf16.msra.mxu0 0
        %859 = vmatprep.subr.bf16.mxu0 0
        %860 = vmatpush1.bf16.msra.mxu0 0
        %861 = vmatprep.subr.bf16.mxu0 0
        %862 = vmatpush1.bf16.msra.mxu0 0
        %863 = vmatprep.mubr.bf16.mxu0 0
        %864 = vmatmul.mubr.bf16.gmra.mrb[0].mxu0 %v829
        %v865 = vpop.f32.mrb[0].mxu0
        %v866 = vadd.f32 %v653, %v865
        %v867 = vpop.f32.mrb[0].mxu0
        %v868 = vpop.f32.mrb[0].mxu0
        %v869 = vadd.f32 %v653, %v868
        %v870 = vpop.f32.mrb[0].mxu0
        %871 = vdwg.mxu0
        %v872 = vmax.f32 %v866, 0.0
        %v873 = vmax.f32 %v869, 0.0
        %p874 = scmp.eq.s32.totalorder %s36, 0
        %s875 = scalar_select %p874, 1, 0
        %v876 = vstv %s875
        %vm877 = vcmp.eq.s32.totalorder %v876, 1
        %v878 = vsel %vm877, 0.0, %v872
        %v879 = vsel %vm877, 0.0, %v873
        %v880 = vpack.c.bf16 %v879, %v878
        %881 = vst.msk [vmem:[#allocation2] sm:$0xff] %vm808, %v880
        %v882 = vld [vmem:[%s484] sm:$0xf]
        %v883 = vld [vmem:[%s484 + $0x4] sm:$0xf]
        %v884 = vunpack.c.l.bf16 %v882
        %v885 = vunpack.c.l.bf16 %v883
        %v886 = vmul.f32 %v884, %v585
        %v887 = vmul.f32 %v885, %v585
        %v888 = vadd.f32 %v886, %v607
        %v889 = vadd.f32 %v887, %v607
        %v890 = vmax.f32 %v888, 0.0
        %v891 = vmax.f32 %v889, 0.0
        %v892 = vpack.c.bf16 %v891, %v890
        %v894 = vsel %vm661, %v892, 0
        %896 = vmatprep.subr.bf16.mxu0 0
        %897 = vmatpush1.bf16.msra.mxu0 %v659
        %898 = vmatprep.subr.bf16.mxu0 0
        %899 = vmatpush1.bf16.msra.mxu0 0
        %900 = vmatprep.subr.bf16.mxu0 0
        %901 = vmatpush1.bf16.msra.mxu0 0
        %902 = vmatprep.subr.bf16.mxu0 0
        %903 = vmatpush1.bf16.msra.mxu0 0
        %904 = vmatprep.subr.bf16.mxu0 0
        %905 = vmatpush1.bf16.msra.mxu0 0
        %906 = vmatprep.subr.bf16.mxu0 0
        %907 = vmatpush1.bf16.msra.mxu0 0
        %908 = vmatprep.subr.bf16.mxu0 0
        %909 = vmatpush1.bf16.msra.mxu0 0
        %910 = vmatprep.subr.bf16.mxu0 0
        %911 = vmatpush1.bf16.msra.mxu0 0
        %912 = vmatprep.subr.bf16.mxu0 0
        %913 = vmatpush1.bf16.msra.mxu0 0
        %914 = vmatprep.subr.bf16.mxu0 0
        %915 = vmatpush1.bf16.msra.mxu0 0
        %916 = vmatprep.subr.bf16.mxu0 0
        %917 = vmatpush1.bf16.msra.mxu0 0
        %918 = vmatprep.subr.bf16.mxu0 0
        %919 = vmatpush1.bf16.msra.mxu0 0
        %920 = vmatprep.subr.bf16.mxu0 0
        %921 = vmatpush1.bf16.msra.mxu0 0
        %922 = vmatprep.subr.bf16.mxu0 0
        %923 = vmatpush1.bf16.msra.mxu0 0
        %924 = vmatprep.subr.bf16.mxu0 0
        %925 = vmatpush1.bf16.msra.mxu0 0
        %926 = vmatprep.subr.bf16.mxu0 0
        %927 = vmatpush1.bf16.msra.mxu0 0
        %928 = vmatprep.mubr.bf16.mxu0 0
        %929 = vmatmul.mubr.bf16.gmra.mrb[0].mxu0 %v894
        %v930 = vpop.f32.mrb[0].mxu0
        %v931 = vadd.f32 %v653, %v930
        %v932 = vpop.f32.mrb[0].mxu0
        %v933 = vpop.f32.mrb[0].mxu0
        %v934 = vadd.f32 %v653, %v933
        %v935 = vpop.f32.mrb[0].mxu0
        %936 = vdwg.mxu0
        %v937 = vmax.f32 %v931, 0.0
        %v938 = vmax.f32 %v934, 0.0
        %p939 = scmp.eq.s32.totalorder %s36, 1
        %s940 = scalar_select %p939, 1, 0
        %v941 = vstv %s940
        %vm942 = vcmp.eq.s32.totalorder %v941, 1
        %v943 = vsel %vm942, 0.0, %v937
        %v944 = vsel %vm942, 0.0, %v938
        %v945 = vpack.c.bf16 %v944, %v943
        %s946 = scalar_lea.vmem [#allocation2], 72
        %947 = vst.msk [vmem:[%s946] sm:$0xff] %vm808, %v945
        %v948 = vld [vmem:[%s8] sm:$0x1]
        %v949 = vld [vmem:[#allocation2] sm:$0xff]
        %v950 = vld [vmem:[#allocation2 + $0x8] sm:$0xff]
        %v951 = vld [vmem:[#allocation2 + $0x10] sm:$0xff]
        %v952 = vld [vmem:[#allocation2 + $0x18] sm:$0xff]
        %v953 = vld [vmem:[#allocation2 + $0x20] sm:$0xff]
        %v954 = vld [vmem:[#allocation2 + $0x28] sm:$0xff]
        %v955 = vld [vmem:[#allocation2 + $0x30] sm:$0xff]
        %v956 = vld [vmem:[#allocation2 + $0x38] sm:$0xff]
        %v958 = vshrl.u32 %v949, 16
        %v960 = vrot.slane %v958, 7
        %v961 = vshll.u32 %v949, 16
        %v963 = vor.u32 %v960, %v961
        %v965 = vshrl.u32 %v950, 16
        %v967 = vrot.slane %v965, 7
        %v968 = vshll.u32 %v950, 16
        %v970 = vor.u32 %v967, %v968
        %v972 = vshrl.u32 %v951, 16
        %v974 = vrot.slane %v972, 7
        %v975 = vshll.u32 %v951, 16
        %v977 = vor.u32 %v974, %v975
        %v979 = vshrl.u32 %v952, 16
        %v981 = vrot.slane %v979, 7
        %v982 = vshll.u32 %v952, 16
        %v984 = vor.u32 %v981, %v982
        %v986 = vshrl.u32 %v953, 16
        %v988 = vrot.slane %v986, 7
        %v989 = vshll.u32 %v953, 16
        %v991 = vor.u32 %v988, %v989
        %v993 = vshrl.u32 %v954, 16
        %v995 = vrot.slane %v993, 7
        %v996 = vshll.u32 %v954, 16
        %v998 = vor.u32 %v995, %v996
        %v1000 = vshrl.u32 %v955, 16
        %v1002 = vrot.slane %v1000, 7
        %v1003 = vshll.u32 %v955, 16
        %v1005 = vor.u32 %v1002, %v1003
        %v1007 = vshrl.u32 %v956, 16
        %v1009 = vrot.slane %v1007, 7
        %v1010 = vshll.u32 %v956, 16
        %v1012 = vor.u32 %v1009, %v1010
        %vm1021 = vcmask 1040384
        %vm1022 = vsmask.f32 256
        %vm1023 = vmand %vm1021, %vm1022
        %v1024 = vsel %vm1023, 0, %v963
        %v1025 = vsel %vm1023, 0, %v970
        %v1026 = vsel %vm1023, 0, %v977
        %v1027 = vsel %vm1023, 0, %v984
        %v1028 = vsel %vm1023, 0, %v991
        %v1029 = vsel %vm1023, 0, %v998
        %v1030 = vsel %vm1023, 0, %v1005
        %v1031 = vsel %vm1023, 0, %v1012
        %v1032 = vrot.slane %v961, 1
        %v1033 = vor.u32 %v958, %v1032
        %v1034 = vrot.slane %v968, 1
        %v1035 = vor.u32 %v965, %v1034
        %v1036 = vrot.slane %v975, 1
        %v1037 = vor.u32 %v972, %v1036
        %v1038 = vrot.slane %v982, 1
        %v1039 = vor.u32 %v979, %v1038
        %v1040 = vrot.slane %v989, 1
        %v1041 = vor.u32 %v986, %v1040
        %v1042 = vrot.slane %v996, 1
        %v1043 = vor.u32 %v993, %v1042
        %v1044 = vrot.slane %v1003, 1
        %v1045 = vor.u32 %v1000, %v1044
        %v1046 = vrot.slane %v1010, 1
        %v1047 = vor.u32 %v1007, %v1046
        %vm1056 = vcmask 1047552
        %vm1057 = vsmask.f32 7424
        %vm1058 = vmand %vm1056, %vm1057
        %v1059 = vsel %vm1058, %v1033, 0
        %v1060 = vsel %vm1058, %v1035, 0
        %v1061 = vsel %vm1058, %v1037, 0
        %v1062 = vsel %vm1058, %v1039, 0
        %v1063 = vsel %vm1058, %v1041, 0
        %v1064 = vsel %vm1058, %v1043, 0
        %v1065 = vsel %vm1058, %v1045, 0
        %v1066 = vsel %vm1058, %v1047, 0
        %v1067 = vld [vmem:[%s7] sm:$0x3]
        %s1068 = scalar_lea.vmem %s7, 2
        %v1069 = vld [vmem:[%s1068] sm:$0x3]
        %v1070 = vsel %vm808, %v949, 0
        %v1072 = vsel %vm808, %v950, 0
        %v1074 = vsel %vm808, %v951, 0
        %v1076 = vsel %vm808, %v952, 0
        %v1078 = vsel %vm808, %v953, 0
        %v1080 = vsel %vm808, %v954, 0
        %v1082 = vsel %vm808, %v955, 0
        %v1084 = vsel %vm808, %v956, 0
        %vm1086 = vcmask 1041408
        %v1088 = vsel %vm1086, %v1069, 0
        %1090 = vmatprep.subr.bf16.mxu0 0
        %1091 = vmatpush1.bf16.msra.mxu0 %v1088
        %1092 = vmatprep.subr.bf16.mxu0 0
        %1093 = vmatpush1.bf16.msra.mxu0 0
        %1094 = vmatprep.subr.bf16.mxu0 0
        %1095 = vmatpush1.bf16.msra.mxu0 0
        %1096 = vmatprep.subr.bf16.mxu0 0
        %1097 = vmatpush1.bf16.msra.mxu0 0
        %1098 = vmatprep.subr.bf16.mxu0 0
        %1099 = vmatpush1.bf16.msra.mxu0 0
        %1100 = vmatprep.subr.bf16.mxu0 0
        %1101 = vmatpush1.bf16.msra.mxu0 0
        %1102 = vmatprep.subr.bf16.mxu0 0
        %1103 = vmatpush1.bf16.msra.mxu0 0
        %1104 = vmatprep.subr.bf16.mxu0 0
        %1105 = vmatpush1.bf16.msra.mxu0 0
        %1106 = vmatprep.subr.bf16.mxu0 0
        %1107 = vmatpush1.bf16.msra.mxu0 0
        %1108 = vmatprep.subr.bf16.mxu0 0
        %1109 = vmatpush1.bf16.msra.mxu0 0
        %1110 = vmatprep.subr.bf16.mxu0 0
        %1111 = vmatpush1.bf16.msra.mxu0 0
        %1112 = vmatprep.subr.bf16.mxu0 0
        %1113 = vmatpush1.bf16.msra.mxu0 0
        %1114 = vmatprep.subr.bf16.mxu0 0
        %1115 = vmatpush1.bf16.msra.mxu0 0
        %1116 = vmatprep.subr.bf16.mxu0 0
        %1117 = vmatpush1.bf16.msra.mxu0 0
        %1118 = vmatprep.subr.bf16.mxu0 0
        %1119 = vmatpush1.bf16.msra.mxu0 0
        %1120 = vmatprep.subr.bf16.mxu0 0
        %1121 = vmatpush1.bf16.msra.mxu0 0
        %1122 = vmatprep.mubr.bf16.mxu0 0
        %1123 = vmatmul.mubr.bf16.gmra.mrb[0].mxu0 %v1070
        %v1124 = vpop.f32.mrb[0].mxu0
        %v1125 = vadd.f32 0.0, %v1124
        %v1126 = vpop.f32.mrb[0].mxu0
        %v1127 = vpop.f32.mrb[0].mxu0
        %v1128 = vadd.f32 0.0, %v1127
        %v1129 = vpop.f32.mrb[0].mxu0
        %1130 = vmatprep.mubr.bf16.mxu0 0
        %1131 = vmatmul.mubr.bf16.gmra.mrb[0].mxu0 %v1072
        %v1132 = vpop.f32.mrb[0].mxu0
        %v1133 = vadd.f32 0.0, %v1132
        %v1134 = vpop.f32.mrb[0].mxu0
        %v1135 = vpop.f32.mrb[0].mxu0
        %v1136 = vadd.f32 0.0, %v1135
        %v1137 = vpop.f32.mrb[0].mxu0
        %1138 = vmatprep.mubr.bf16.mxu0 0
        %1139 = vmatmul.mubr.bf16.gmra.mrb[0].mxu0 %v1074
        %v1140 = vpop.f32.mrb[0].mxu0
        %v1141 = vadd.f32 0.0, %v1140
        %v1142 = vpop.f32.mrb[0].mxu0
        %v1143 = vpop.f32.mrb[0].mxu0
        %v1144 = vadd.f32 0.0, %v1143
        %v1145 = vpop.f32.mrb[0].mxu0
        %1146 = vmatprep.mubr.bf16.mxu0 0
        %1147 = vmatmul.mubr.bf16.gmra.mrb[0].mxu0 %v1076
        %v1148 = vpop.f32.mrb[0].mxu0
        %v1149 = vadd.f32 0.0, %v1148
        %v1150 = vpop.f32.mrb[0].mxu0
        %v1151 = vpop.f32.mrb[0].mxu0
        %v1152 = vadd.f32 0.0, %v1151
        %v1153 = vpop.f32.mrb[0].mxu0
        %1154 = vmatprep.mubr.bf16.mxu0 0
        %1155 = vmatmul.mubr.bf16.gmra.mrb[0].mxu0 %v1078
        %v1156 = vpop.f32.mrb[0].mxu0
        %v1157 = vadd.f32 0.0, %v1156
        %v1158 = vpop.f32.mrb[0].mxu0
        %v1159 = vpop.f32.mrb[0].mxu0
        %v1160 = vadd.f32 0.0, %v1159
        %v1161 = vpop.f32.mrb[0].mxu0
        %1162 = vmatprep.mubr.bf16.mxu0 0
        %1163 = vmatmul.mubr.bf16.gmra.mrb[0].mxu0 %v1080
        %v1164 = vpop.f32.mrb[0].mxu0
        %v1165 = vadd.f32 0.0, %v1164
        %v1166 = vpop.f32.mrb[0].mxu0
        %v1167 = vpop.f32.mrb[0].mxu0
        %v1168 = vadd.f32 0.0, %v1167
        %v1169 = vpop.f32.mrb[0].mxu0
        %1170 = vmatprep.mubr.bf16.mxu0 0
        %1171 = vmatmul.mubr.bf16.gmra.mrb[0].mxu0 %v1082
        %v1172 = vpop.f32.mrb[0].mxu0
        %v1173 = vadd.f32 0.0, %v1172
        %v1174 = vpop.f32.mrb[0].mxu0
        %v1175 = vpop.f32.mrb[0].mxu0
        %v1176 = vadd.f32 0.0, %v1175
        %v1177 = vpop.f32.mrb[0].mxu0
        %1178 = vmatprep.mubr.bf16.mxu0 0
        %1179 = vmatmul.mubr.bf16.gmra.mrb[0].mxu0 %v1084
        %v1180 = vpop.f32.mrb[0].mxu0
        %v1181 = vadd.f32 0.0, %v1180
        %v1182 = vpop.f32.mrb[0].mxu0
        %v1183 = vpop.f32.mrb[0].mxu0
        %v1184 = vadd.f32 0.0, %v1183
        %v1185 = vpop.f32.mrb[0].mxu0
        %1186 = vdwg.mxu0
        %v1188 = vsel %vm808, %v1024, 0
        %v1191 = vsel %vm808, %v1025, 0
        %v1194 = vsel %vm808, %v1026, 0
        %v1197 = vsel %vm808, %v1027, 0
        %v1200 = vsel %vm808, %v1028, 0
        %v1203 = vsel %vm808, %v1029, 0
        %v1206 = vsel %vm808, %v1030, 0
        %v1209 = vsel %vm808, %v1031, 0
        %v1212 = vsel %vm1086, %v1067, 0
        %1214 = vmatprep.subr.bf16.mxu0 0
        %1215 = vmatpush1.bf16.msra.mxu0 %v1212
        %1216 = vmatprep.subr.bf16.mxu0 0
        %1217 = vmatpush1.bf16.msra.mxu0 0
        %1218 = vmatprep.subr.bf16.mxu0 0
        %1219 = vmatpush1.bf16.msra.mxu0 0
        %1220 = vmatprep.subr.bf16.mxu0 0
        %1221 = vmatpush1.bf16.msra.mxu0 0
        %1222 = vmatprep.subr.bf16.mxu0 0
        %1223 = vmatpush1.bf16.msra.mxu0 0
        %1224 = vmatprep.subr.bf16.mxu0 0
        %1225 = vmatpush1.bf16.msra.mxu0 0
        %1226 = vmatprep.subr.bf16.mxu0 0
        %1227 = vmatpush1.bf16.msra.mxu0 0
        %1228 = vmatprep.subr.bf16.mxu0 0
        %1229 = vmatpush1.bf16.msra.mxu0 0
        %1230 = vmatprep.subr.bf16.mxu0 0
        %1231 = vmatpush1.bf16.msra.mxu0 0
        %1232 = vmatprep.subr.bf16.mxu0 0
        %1233 = vmatpush1.bf16.msra.mxu0 0
        %1234 = vmatprep.subr.bf16.mxu0 0
        %1235 = vmatpush1.bf16.msra.mxu0 0
        %1236 = vmatprep.subr.bf16.mxu0 0
        %1237 = vmatpush1.bf16.msra.mxu0 0
        %1238 = vmatprep.subr.bf16.mxu0 0
        %1239 = vmatpush1.bf16.msra.mxu0 0
        %1240 = vmatprep.subr.bf16.mxu0 0
        %1241 = vmatpush1.bf16.msra.mxu0 0
        %1242 = vmatprep.subr.bf16.mxu0 0
        %1243 = vmatpush1.bf16.msra.mxu0 0
        %1244 = vmatprep.subr.bf16.mxu0 0
        %1245 = vmatpush1.bf16.msra.mxu0 0
        %1246 = vmatprep.mubr.bf16.mxu0 0
        %1247 = vmatmul.mubr.bf16.gmra.mrb[0].mxu0 %v1188
        %v1248 = vpop.f32.mrb[0].mxu0
        %v1249 = vadd.f32 %v1125, %v1248
        %v1250 = vpop.f32.mrb[0].mxu0
        %v1251 = vpop.f32.mrb[0].mxu0
        %v1252 = vadd.f32 %v1128, %v1251
        %v1253 = vpop.f32.mrb[0].mxu0
        %1254 = vmatprep.mubr.bf16.mxu0 0
        %1255 = vmatmul.mubr.bf16.gmra.mrb[0].mxu0 %v1191
        %v1256 = vpop.f32.mrb[0].mxu0
        %v1257 = vadd.f32 %v1133, %v1256
        %v1258 = vpop.f32.mrb[0].mxu0
        %v1259 = vpop.f32.mrb[0].mxu0
        %v1260 = vadd.f32 %v1136, %v1259
        %v1261 = vpop.f32.mrb[0].mxu0
        %1262 = vmatprep.mubr.bf16.mxu0 0
        %1263 = vmatmul.mubr.bf16.gmra.mrb[0].mxu0 %v1194
        %v1264 = vpop.f32.mrb[0].mxu0
        %v1265 = vadd.f32 %v1141, %v1264
        %v1266 = vpop.f32.mrb[0].mxu0
        %v1267 = vpop.f32.mrb[0].mxu0
        %v1268 = vadd.f32 %v1144, %v1267
        %v1269 = vpop.f32.mrb[0].mxu0
        %1270 = vmatprep.mubr.bf16.mxu0 0
        %1271 = vmatmul.mubr.bf16.gmra.mrb[0].mxu0 %v1197
        %v1272 = vpop.f32.mrb[0].mxu0
        %v1273 = vadd.f32 %v1149, %v1272
        %v1274 = vpop.f32.mrb[0].mxu0
        %v1275 = vpop.f32.mrb[0].mxu0
        %v1276 = vadd.f32 %v1152, %v1275
        %v1277 = vpop.f32.mrb[0].mxu0
        %1278 = vmatprep.mubr.bf16.mxu0 0
        %1279 = vmatmul.mubr.bf16.gmra.mrb[0].mxu0 %v1200
        %v1280 = vpop.f32.mrb[0].mxu0
        %v1281 = vadd.f32 %v1157, %v1280
        %v1282 = vpop.f32.mrb[0].mxu0
        %v1283 = vpop.f32.mrb[0].mxu0
        %v1284 = vadd.f32 %v1160, %v1283
        %v1285 = vpop.f32.mrb[0].mxu0
        %1286 = vmatprep.mubr.bf16.mxu0 0
        %1287 = vmatmul.mubr.bf16.gmra.mrb[0].mxu0 %v1203
        %v1288 = vpop.f32.mrb[0].mxu0
        %v1289 = vadd.f32 %v1165, %v1288
        %v1290 = vpop.f32.mrb[0].mxu0
        %v1291 = vpop.f32.mrb[0].mxu0
        %v1292 = vadd.f32 %v1168, %v1291
        %v1293 = vpop.f32.mrb[0].mxu0
        %1294 = vmatprep.mubr.bf16.mxu0 0
        %1295 = vmatmul.mubr.bf16.gmra.mrb[0].mxu0 %v1206
        %v1296 = vpop.f32.mrb[0].mxu0
        %v1297 = vadd.f32 %v1173, %v1296
        %v1298 = vpop.f32.mrb[0].mxu0
        %v1299 = vpop.f32.mrb[0].mxu0
        %v1300 = vadd.f32 %v1176, %v1299
        %v1301 = vpop.f32.mrb[0].mxu0
        %1302 = vmatprep.mubr.bf16.mxu0 0
        %1303 = vmatmul.mubr.bf16.gmra.mrb[0].mxu0 %v1209
        %v1304 = vpop.f32.mrb[0].mxu0
        %v1305 = vadd.f32 %v1181, %v1304
        %v1306 = vpop.f32.mrb[0].mxu0
        %v1307 = vpop.f32.mrb[0].mxu0
        %v1308 = vadd.f32 %v1184, %v1307
        %v1309 = vpop.f32.mrb[0].mxu0
        %1310 = vdwg.mxu0
        %s1311 = scalar_lea.vmem %s7, 4
        %v1312 = vld [vmem:[%s1311] sm:$0x3]
        %v1314 = vsel %vm808, %v1059, 0
        %v1317 = vsel %vm808, %v1060, 0
        %v1320 = vsel %vm808, %v1061, 0
        %v1323 = vsel %vm808, %v1062, 0
        %v1326 = vsel %vm808, %v1063, 0
        %v1329 = vsel %vm808, %v1064, 0
        %v1332 = vsel %vm808, %v1065, 0
        %v1335 = vsel %vm808, %v1066, 0
        %v1338 = vsel %vm1086, %v1312, 0
        %1340 = vmatprep.subr.bf16.mxu0 0
        %1341 = vmatpush1.bf16.msra.mxu0 %v1338
        %1342 = vmatprep.subr.bf16.mxu0 0
        %1343 = vmatpush1.bf16.msra.mxu0 0
        %1344 = vmatprep.subr.bf16.mxu0 0
        %1345 = vmatpush1.bf16.msra.mxu0 0
        %1346 = vmatprep.subr.bf16.mxu0 0
        %1347 = vmatpush1.bf16.msra.mxu0 0
        %1348 = vmatprep.subr.bf16.mxu0 0
        %1349 = vmatpush1.bf16.msra.mxu0 0
        %1350 = vmatprep.subr.bf16.mxu0 0
        %1351 = vmatpush1.bf16.msra.mxu0 0
        %1352 = vmatprep.subr.bf16.mxu0 0
        %1353 = vmatpush1.bf16.msra.mxu0 0
        %1354 = vmatprep.subr.bf16.mxu0 0
        %1355 = vmatpush1.bf16.msra.mxu0 0
        %1356 = vmatprep.subr.bf16.mxu0 0
        %1357 = vmatpush1.bf16.msra.mxu0 0
        %1358 = vmatprep.subr.bf16.mxu0 0
        %1359 = vmatpush1.bf16.msra.mxu0 0
        %1360 = vmatprep.subr.bf16.mxu0 0
        %1361 = vmatpush1.bf16.msra.mxu0 0
        %1362 = vmatprep.subr.bf16.mxu0 0
        %1363 = vmatpush1.bf16.msra.mxu0 0
        %1364 = vmatprep.subr.bf16.mxu0 0
        %1365 = vmatpush1.bf16.msra.mxu0 0
        %1366 = vmatprep.subr.bf16.mxu0 0
        %1367 = vmatpush1.bf16.msra.mxu0 0
        %1368 = vmatprep.subr.bf16.mxu0 0
        %1369 = vmatpush1.bf16.msra.mxu0 0
        %1370 = vmatprep.subr.bf16.mxu0 0
        %1371 = vmatpush1.bf16.msra.mxu0 0
        %1372 = vmatprep.mubr.bf16.mxu0 0
        %1373 = vmatmul.mubr.bf16.gmra.mrb[0].mxu0 %v1314
        %v1374 = vpop.f32.mrb[0].mxu0
        %v1375 = vadd.f32 0.0, %v1374
        %v1376 = vpop.f32.mrb[0].mxu0
        %v1377 = vpop.f32.mrb[0].mxu0
        %v1378 = vadd.f32 0.0, %v1377
        %v1379 = vpop.f32.mrb[0].mxu0
        %1380 = vmatprep.mubr.bf16.mxu0 0
        %1381 = vmatmul.mubr.bf16.gmra.mrb[0].mxu0 %v1317
        %v1382 = vpop.f32.mrb[0].mxu0
        %v1383 = vadd.f32 0.0, %v1382
        %v1384 = vpop.f32.mrb[0].mxu0
        %v1385 = vpop.f32.mrb[0].mxu0
        %v1386 = vadd.f32 0.0, %v1385
        %v1387 = vpop.f32.mrb[0].mxu0
        %1388 = vmatprep.mubr.bf16.mxu0 0
        %1389 = vmatmul.mubr.bf16.gmra.mrb[0].mxu0 %v1320
        %v1390 = vpop.f32.mrb[0].mxu0
        %v1391 = vadd.f32 0.0, %v1390
        %v1392 = vpop.f32.mrb[0].mxu0
        %v1393 = vpop.f32.mrb[0].mxu0
        %v1394 = vadd.f32 0.0, %v1393
        %v1395 = vpop.f32.mrb[0].mxu0
        %1396 = vmatprep.mubr.bf16.mxu0 0
        %1397 = vmatmul.mubr.bf16.gmra.mrb[0].mxu0 %v1323
        %v1398 = vpop.f32.mrb[0].mxu0
        %v1399 = vadd.f32 0.0, %v1398
        %v1400 = vpop.f32.mrb[0].mxu0
        %v1401 = vpop.f32.mrb[0].mxu0
        %v1402 = vadd.f32 0.0, %v1401
        %v1403 = vpop.f32.mrb[0].mxu0
        %1404 = vmatprep.mubr.bf16.mxu0 0
        %1405 = vmatmul.mubr.bf16.gmra.mrb[0].mxu0 %v1326
        %v1406 = vpop.f32.mrb[0].mxu0
        %v1407 = vadd.f32 0.0, %v1406
        %v1408 = vpop.f32.mrb[0].mxu0
        %v1409 = vpop.f32.mrb[0].mxu0
        %v1410 = vadd.f32 0.0, %v1409
        %v1411 = vpop.f32.mrb[0].mxu0
        %1412 = vmatprep.mubr.bf16.mxu0 0
        %1413 = vmatmul.mubr.bf16.gmra.mrb[0].mxu0 %v1329
        %v1414 = vpop.f32.mrb[0].mxu0
        %v1415 = vadd.f32 0.0, %v1414
        %v1416 = vpop.f32.mrb[0].mxu0
        %v1417 = vpop.f32.mrb[0].mxu0
        %v1418 = vadd.f32 0.0, %v1417
        %v1419 = vpop.f32.mrb[0].mxu0
        %1420 = vmatprep.mubr.bf16.mxu0 0
        %1421 = vmatmul.mubr.bf16.gmra.mrb[0].mxu0 %v1332
        %v1422 = vpop.f32.mrb[0].mxu0
        %v1423 = vadd.f32 0.0, %v1422
        %v1424 = vpop.f32.mrb[0].mxu0
        %v1425 = vpop.f32.mrb[0].mxu0
        %v1426 = vadd.f32 0.0, %v1425
        %v1427 = vpop.f32.mrb[0].mxu0
        %1428 = vmatprep.mubr.bf16.mxu0 0
        %1429 = vmatmul.mubr.bf16.gmra.mrb[0].mxu0 %v1335
        %v1430 = vpop.f32.mrb[0].mxu0
        %v1431 = vadd.f32 0.0, %v1430
        %v1432 = vpop.f32.mrb[0].mxu0
        %v1433 = vpop.f32.mrb[0].mxu0
        %v1434 = vadd.f32 0.0, %v1433
        %v1435 = vpop.f32.mrb[0].mxu0
        %1436 = vdwg.mxu0
        %v1437 = vadd.f32 %v1249, %v1375
        %v1438 = vadd.f32 %v1252, %v1378
        %v1439 = vadd.f32 %v1257, %v1383
        %v1440 = vadd.f32 %v1260, %v1386
        %v1441 = vadd.f32 %v1265, %v1391
        %v1442 = vadd.f32 %v1268, %v1394
        %v1443 = vadd.f32 %v1273, %v1399
        %v1444 = vadd.f32 %v1276, %v1402
        %v1445 = vadd.f32 %v1281, %v1407
        %v1446 = vadd.f32 %v1284, %v1410
        %v1447 = vadd.f32 %v1289, %v1415
        %v1448 = vadd.f32 %v1292, %v1418
        %v1449 = vadd.f32 %v1297, %v1423
        %v1450 = vadd.f32 %v1300, %v1426
        %v1451 = vadd.f32 %v1305, %v1431
        %v1452 = vadd.f32 %v1308, %v1434
        %v1453 = vld [vmem:[%s807] sm:$0xff]
        %v1454 = vld [vmem:[%s807 + $0x8] sm:$0xff]
        %v1455 = vld [vmem:[%s807 + $0x10] sm:$0xff]
        %v1456 = vld [vmem:[%s807 + $0x18] sm:$0xff]
        %v1457 = vld [vmem:[%s807 + $0x20] sm:$0xff]
        %v1458 = vld [vmem:[%s807 + $0x28] sm:$0xff]
        %v1459 = vld [vmem:[%s807 + $0x30] sm:$0xff]
        %v1460 = vld [vmem:[%s807 + $0x38] sm:$0xff]
        %v1462 = vshrl.u32 %v1453, 16
        %v1464 = vrot.slane %v1462, 7
        %v1465 = vshll.u32 %v1453, 16
        %v1467 = vor.u32 %v1464, %v1465
        %v1469 = vshrl.u32 %v1454, 16
        %v1471 = vrot.slane %v1469, 7
        %v1472 = vshll.u32 %v1454, 16
        %v1474 = vor.u32 %v1471, %v1472
        %v1476 = vshrl.u32 %v1455, 16
        %v1478 = vrot.slane %v1476, 7
        %v1479 = vshll.u32 %v1455, 16
        %v1481 = vor.u32 %v1478, %v1479
        %v1483 = vshrl.u32 %v1456, 16
        %v1485 = vrot.slane %v1483, 7
        %v1486 = vshll.u32 %v1456, 16
        %v1488 = vor.u32 %v1485, %v1486
        %v1490 = vshrl.u32 %v1457, 16
        %v1492 = vrot.slane %v1490, 7
        %v1493 = vshll.u32 %v1457, 16
        %v1495 = vor.u32 %v1492, %v1493
        %v1497 = vshrl.u32 %v1458, 16
        %v1499 = vrot.slane %v1497, 7
        %v1500 = vshll.u32 %v1458, 16
        %v1502 = vor.u32 %v1499, %v1500
        %v1504 = vshrl.u32 %v1459, 16
        %v1506 = vrot.slane %v1504, 7
        %v1507 = vshll.u32 %v1459, 16
        %v1509 = vor.u32 %v1506, %v1507
        %v1511 = vshrl.u32 %v1460, 16
        %v1513 = vrot.slane %v1511, 7
        %v1514 = vshll.u32 %v1460, 16
        %v1516 = vor.u32 %v1513, %v1514
        %v1525 = vsel %vm1023, 0, %v1467
        %v1526 = vsel %vm1023, 0, %v1474
        %v1527 = vsel %vm1023, 0, %v1481
        %v1528 = vsel %vm1023, 0, %v1488
        %v1529 = vsel %vm1023, 0, %v1495
        %v1530 = vsel %vm1023, 0, %v1502
        %v1531 = vsel %vm1023, 0, %v1509
        %v1532 = vsel %vm1023, 0, %v1516
        %v1533 = vrot.slane %v1465, 1
        %v1534 = vor.u32 %v1462, %v1533
        %v1535 = vrot.slane %v1472, 1
        %v1536 = vor.u32 %v1469, %v1535
        %v1537 = vrot.slane %v1479, 1
        %v1538 = vor.u32 %v1476, %v1537
        %v1539 = vrot.slane %v1486, 1
        %v1540 = vor.u32 %v1483, %v1539
        %v1541 = vrot.slane %v1493, 1
        %v1542 = vor.u32 %v1490, %v1541
        %v1543 = vrot.slane %v1500, 1
        %v1544 = vor.u32 %v1497, %v1543
        %v1545 = vrot.slane %v1507, 1
        %v1546 = vor.u32 %v1504, %v1545
        %v1547 = vrot.slane %v1514, 1
        %v1548 = vor.u32 %v1511, %v1547
        %v1557 = vsel %vm1058, %v1534, 0
        %v1558 = vsel %vm1058, %v1536, 0
        %v1559 = vsel %vm1058, %v1538, 0
        %v1560 = vsel %vm1058, %v1540, 0
        %v1561 = vsel %vm1058, %v1542, 0
        %v1562 = vsel %vm1058, %v1544, 0
        %v1563 = vsel %vm1058, %v1546, 0
        %v1564 = vsel %vm1058, %v1548, 0
        %s1565 = scalar_lea.vmem %s7, 6
        %v1566 = vld [vmem:[%s1565] sm:$0x3]
        %v1568 = vsel %vm808, %v1525, 0
        %v1571 = vsel %vm808, %v1526, 0
        %v1574 = vsel %vm808, %v1527, 0
        %v1577 = vsel %vm808, %v1528, 0
        %v1580 = vsel %vm808, %v1529, 0
        %v1583 = vsel %vm808, %v1530, 0
        %v1586 = vsel %vm808, %v1531, 0
        %v1589 = vsel %vm808, %v1532, 0
        %v1592 = vsel %vm1086, %v1566, 0
        %1594 = vmatprep.subr.bf16.mxu0 0
        %1595 = vmatpush1.bf16.msra.mxu0 %v1592
        %1596 = vmatprep.subr.bf16.mxu0 0
        %1597 = vmatpush1.bf16.msra.mxu0 0
        %1598 = vmatprep.subr.bf16.mxu0 0
        %1599 = vmatpush1.bf16.msra.mxu0 0
        %1600 = vmatprep.subr.bf16.mxu0 0
        %1601 = vmatpush1.bf16.msra.mxu0 0
        %1602 = vmatprep.subr.bf16.mxu0 0
        %1603 = vmatpush1.bf16.msra.mxu0 0
        %1604 = vmatprep.subr.bf16.mxu0 0
        %1605 = vmatpush1.bf16.msra.mxu0 0
        %1606 = vmatprep.subr.bf16.mxu0 0
        %1607 = vmatpush1.bf16.msra.mxu0 0
        %1608 = vmatprep.subr.bf16.mxu0 0
        %1609 = vmatpush1.bf16.msra.mxu0 0
        %1610 = vmatprep.subr.bf16.mxu0 0
        %1611 = vmatpush1.bf16.msra.mxu0 0
        %1612 = vmatprep.subr.bf16.mxu0 0
        %1613 = vmatpush1.bf16.msra.mxu0 0
        %1614 = vmatprep.subr.bf16.mxu0 0
        %1615 = vmatpush1.bf16.msra.mxu0 0
        %1616 = vmatprep.subr.bf16.mxu0 0
        %1617 = vmatpush1.bf16.msra.mxu0 0
        %1618 = vmatprep.subr.bf16.mxu0 0
        %1619 = vmatpush1.bf16.msra.mxu0 0
        %1620 = vmatprep.subr.bf16.mxu0 0
        %1621 = vmatpush1.bf16.msra.mxu0 0
        %1622 = vmatprep.subr.bf16.mxu0 0
        %1623 = vmatpush1.bf16.msra.mxu0 0
        %1624 = vmatprep.subr.bf16.mxu0 0
        %1625 = vmatpush1.bf16.msra.mxu0 0
        %1626 = vmatprep.mubr.bf16.mxu0 0
        %1627 = vmatmul.mubr.bf16.gmra.mrb[0].mxu0 %v1568
        %v1628 = vpop.f32.mrb[0].mxu0
        %v1629 = vadd.f32 0.0, %v1628
        %v1630 = vpop.f32.mrb[0].mxu0
        %v1631 = vpop.f32.mrb[0].mxu0
        %v1632 = vadd.f32 0.0, %v1631
        %v1633 = vpop.f32.mrb[0].mxu0
        %1634 = vmatprep.mubr.bf16.mxu0 0
        %1635 = vmatmul.mubr.bf16.gmra.mrb[0].mxu0 %v1571
        %v1636 = vpop.f32.mrb[0].mxu0
        %v1637 = vadd.f32 0.0, %v1636
        %v1638 = vpop.f32.mrb[0].mxu0
        %v1639 = vpop.f32.mrb[0].mxu0
        %v1640 = vadd.f32 0.0, %v1639
        %v1641 = vpop.f32.mrb[0].mxu0
        %1642 = vmatprep.mubr.bf16.mxu0 0
        %1643 = vmatmul.mubr.bf16.gmra.mrb[0].mxu0 %v1574
        %v1644 = vpop.f32.mrb[0].mxu0
        %v1645 = vadd.f32 0.0, %v1644
        %v1646 = vpop.f32.mrb[0].mxu0
        %v1647 = vpop.f32.mrb[0].mxu0
        %v1648 = vadd.f32 0.0, %v1647
        %v1649 = vpop.f32.mrb[0].mxu0
        %1650 = vmatprep.mubr.bf16.mxu0 0
        %1651 = vmatmul.mubr.bf16.gmra.mrb[0].mxu0 %v1577
        %v1652 = vpop.f32.mrb[0].mxu0
        %v1653 = vadd.f32 0.0, %v1652
        %v1654 = vpop.f32.mrb[0].mxu0
        %v1655 = vpop.f32.mrb[0].mxu0
        %v1656 = vadd.f32 0.0, %v1655
        %v1657 = vpop.f32.mrb[0].mxu0
        %1658 = vmatprep.mubr.bf16.mxu0 0
        %1659 = vmatmul.mubr.bf16.gmra.mrb[0].mxu0 %v1580
        %v1660 = vpop.f32.mrb[0].mxu0
        %v1661 = vadd.f32 0.0, %v1660
        %v1662 = vpop.f32.mrb[0].mxu0
        %v1663 = vpop.f32.mrb[0].mxu0
        %v1664 = vadd.f32 0.0, %v1663
        %v1665 = vpop.f32.mrb[0].mxu0
        %1666 = vmatprep.mubr.bf16.mxu0 0
        %1667 = vmatmul.mubr.bf16.gmra.mrb[0].mxu0 %v1583
        %v1668 = vpop.f32.mrb[0].mxu0
        %v1669 = vadd.f32 0.0, %v1668
        %v1670 = vpop.f32.mrb[0].mxu0
        %v1671 = vpop.f32.mrb[0].mxu0
        %v1672 = vadd.f32 0.0, %v1671
        %v1673 = vpop.f32.mrb[0].mxu0
        %1674 = vmatprep.mubr.bf16.mxu0 0
        %1675 = vmatmul.mubr.bf16.gmra.mrb[0].mxu0 %v1586
        %v1676 = vpop.f32.mrb[0].mxu0
        %v1677 = vadd.f32 0.0, %v1676
        %v1678 = vpop.f32.mrb[0].mxu0
        %v1679 = vpop.f32.mrb[0].mxu0
        %v1680 = vadd.f32 0.0, %v1679
        %v1681 = vpop.f32.mrb[0].mxu0
        %1682 = vmatprep.mubr.bf16.mxu0 0
        %1683 = vmatmul.mubr.bf16.gmra.mrb[0].mxu0 %v1589
        %v1684 = vpop.f32.mrb[0].mxu0
        %v1685 = vadd.f32 0.0, %v1684
        %v1686 = vpop.f32.mrb[0].mxu0
        %v1687 = vpop.f32.mrb[0].mxu0
        %v1688 = vadd.f32 0.0, %v1687
        %v1689 = vpop.f32.mrb[0].mxu0
        %1690 = vdwg.mxu0
        %v1691 = vadd.f32 %v1437, %v1629
        %v1692 = vadd.f32 %v1438, %v1632
        %v1693 = vadd.f32 %v1439, %v1637
        %v1694 = vadd.f32 %v1440, %v1640
        %v1695 = vadd.f32 %v1441, %v1645
        %v1696 = vadd.f32 %v1442, %v1648
        %v1697 = vadd.f32 %v1443, %v1653
        %v1698 = vadd.f32 %v1444, %v1656
        %v1699 = vadd.f32 %v1445, %v1661
        %v1700 = vadd.f32 %v1446, %v1664
        %v1701 = vadd.f32 %v1447, %v1669
        %v1702 = vadd.f32 %v1448, %v1672
        %v1703 = vadd.f32 %v1449, %v1677
        %v1704 = vadd.f32 %v1450, %v1680
        %v1705 = vadd.f32 %v1451, %v1685
        %v1706 = vadd.f32 %v1452, %v1688
        %s1707 = scalar_lea.vmem %s7, 8
        %v1708 = vld [vmem:[%s1707] sm:$0x3]
        %v1709 = vsel %vm808, %v1453, 0
        %v1711 = vsel %vm808, %v1454, 0
        %v1713 = vsel %vm808, %v1455, 0
        %v1715 = vsel %vm808, %v1456, 0
        %v1717 = vsel %vm808, %v1457, 0
        %v1719 = vsel %vm808, %v1458, 0
        %v1721 = vsel %vm808, %v1459, 0
        %v1723 = vsel %vm808, %v1460, 0
        %v1726 = vsel %vm1086, %v1708, 0
        %1728 = vmatprep.subr.bf16.mxu0 0
        %1729 = vmatpush1.bf16.msra.mxu0 %v1726
        %1730 = vmatprep.subr.bf16.mxu0 0
        %1731 = vmatpush1.bf16.msra.mxu0 0
        %1732 = vmatprep.subr.bf16.mxu0 0
        %1733 = vmatpush1.bf16.msra.mxu0 0
        %1734 = vmatprep.subr.bf16.mxu0 0
        %1735 = vmatpush1.bf16.msra.mxu0 0
        %1736 = vmatprep.subr.bf16.mxu0 0
        %1737 = vmatpush1.bf16.msra.mxu0 0
        %1738 = vmatprep.subr.bf16.mxu0 0
        %1739 = vmatpush1.bf16.msra.mxu0 0
        %1740 = vmatprep.subr.bf16.mxu0 0
        %1741 = vmatpush1.bf16.msra.mxu0 0
        %1742 = vmatprep.subr.bf16.mxu0 0
        %1743 = vmatpush1.bf16.msra.mxu0 0
        %1744 = vmatprep.subr.bf16.mxu0 0
        %1745 = vmatpush1.bf16.msra.mxu0 0
        %1746 = vmatprep.subr.bf16.mxu0 0
        %1747 = vmatpush1.bf16.msra.mxu0 0
        %1748 = vmatprep.subr.bf16.mxu0 0
        %1749 = vmatpush1.bf16.msra.mxu0 0
        %1750 = vmatprep.subr.bf16.mxu0 0
        %1751 = vmatpush1.bf16.msra.mxu0 0
        %1752 = vmatprep.subr.bf16.mxu0 0
        %1753 = vmatpush1.bf16.msra.mxu0 0
        %1754 = vmatprep.subr.bf16.mxu0 0
        %1755 = vmatpush1.bf16.msra.mxu0 0
        %1756 = vmatprep.subr.bf16.mxu0 0
        %1757 = vmatpush1.bf16.msra.mxu0 0
        %1758 = vmatprep.subr.bf16.mxu0 0
        %1759 = vmatpush1.bf16.msra.mxu0 0
        %1760 = vmatprep.mubr.bf16.mxu0 0
        %1761 = vmatmul.mubr.bf16.gmra.mrb[0].mxu0 %v1709
        %v1762 = vpop.f32.mrb[0].mxu0
        %v1763 = vadd.f32 0.0, %v1762
        %v1764 = vpop.f32.mrb[0].mxu0
        %v1765 = vpop.f32.mrb[0].mxu0
        %v1766 = vadd.f32 0.0, %v1765
        %v1767 = vpop.f32.mrb[0].mxu0
        %1768 = vmatprep.mubr.bf16.mxu0 0
        %1769 = vmatmul.mubr.bf16.gmra.mrb[0].mxu0 %v1711
        %v1770 = vpop.f32.mrb[0].mxu0
        %v1771 = vadd.f32 0.0, %v1770
        %v1772 = vpop.f32.mrb[0].mxu0
        %v1773 = vpop.f32.mrb[0].mxu0
        %v1774 = vadd.f32 0.0, %v1773
        %v1775 = vpop.f32.mrb[0].mxu0
        %1776 = vmatprep.mubr.bf16.mxu0 0
        %1777 = vmatmul.mubr.bf16.gmra.mrb[0].mxu0 %v1713
        %v1778 = vpop.f32.mrb[0].mxu0
        %v1779 = vadd.f32 0.0, %v1778
        %v1780 = vpop.f32.mrb[0].mxu0
        %v1781 = vpop.f32.mrb[0].mxu0
        %v1782 = vadd.f32 0.0, %v1781
        %v1783 = vpop.f32.mrb[0].mxu0
        %1784 = vmatprep.mubr.bf16.mxu0 0
        %1785 = vmatmul.mubr.bf16.gmra.mrb[0].mxu0 %v1715
        %v1786 = vpop.f32.mrb[0].mxu0
        %v1787 = vadd.f32 0.0, %v1786
        %v1788 = vpop.f32.mrb[0].mxu0
        %v1789 = vpop.f32.mrb[0].mxu0
        %v1790 = vadd.f32 0.0, %v1789
        %v1791 = vpop.f32.mrb[0].mxu0
        %1792 = vmatprep.mubr.bf16.mxu0 0
        %1793 = vmatmul.mubr.bf16.gmra.mrb[0].mxu0 %v1717
        %v1794 = vpop.f32.mrb[0].mxu0
        %v1795 = vadd.f32 0.0, %v1794
        %v1796 = vpop.f32.mrb[0].mxu0
        %v1797 = vpop.f32.mrb[0].mxu0
        %v1798 = vadd.f32 0.0, %v1797
        %v1799 = vpop.f32.mrb[0].mxu0
        %1800 = vmatprep.mubr.bf16.mxu0 0
        %1801 = vmatmul.mubr.bf16.gmra.mrb[0].mxu0 %v1719
        %v1802 = vpop.f32.mrb[0].mxu0
        %v1803 = vadd.f32 0.0, %v1802
        %v1804 = vpop.f32.mrb[0].mxu0
        %v1805 = vpop.f32.mrb[0].mxu0
        %v1806 = vadd.f32 0.0, %v1805
        %v1807 = vpop.f32.mrb[0].mxu0
        %1808 = vmatprep.mubr.bf16.mxu0 0
        %1809 = vmatmul.mubr.bf16.gmra.mrb[0].mxu0 %v1721
        %v1810 = vpop.f32.mrb[0].mxu0
        %v1811 = vadd.f32 0.0, %v1810
        %v1812 = vpop.f32.mrb[0].mxu0
        %v1813 = vpop.f32.mrb[0].mxu0
        %v1814 = vadd.f32 0.0, %v1813
        %v1815 = vpop.f32.mrb[0].mxu0
        %1816 = vmatprep.mubr.bf16.mxu0 0
        %1817 = vmatmul.mubr.bf16.gmra.mrb[0].mxu0 %v1723
        %v1818 = vpop.f32.mrb[0].mxu0
        %v1819 = vadd.f32 0.0, %v1818
        %v1820 = vpop.f32.mrb[0].mxu0
        %v1821 = vpop.f32.mrb[0].mxu0
        %v1822 = vadd.f32 0.0, %v1821
        %v1823 = vpop.f32.mrb[0].mxu0
        %1824 = vdwg.mxu0
        %v1825 = vadd.f32 %v1691, %v1763
        %v1826 = vadd.f32 %v1692, %v1766
        %v1827 = vadd.f32 %v1693, %v1771
        %v1828 = vadd.f32 %v1694, %v1774
        %v1829 = vadd.f32 %v1695, %v1779
        %v1830 = vadd.f32 %v1696, %v1782
        %v1831 = vadd.f32 %v1697, %v1787
        %v1832 = vadd.f32 %v1698, %v1790
        %v1833 = vadd.f32 %v1699, %v1795
        %v1834 = vadd.f32 %v1700, %v1798
        %v1835 = vadd.f32 %v1701, %v1803
        %v1836 = vadd.f32 %v1702, %v1806
        %v1837 = vadd.f32 %v1703, %v1811
        %v1838 = vadd.f32 %v1704, %v1814
        %v1839 = vadd.f32 %v1705, %v1819
        %v1840 = vadd.f32 %v1706, %v1822
        %s1841 = scalar_lea.vmem %s7, 10
        %v1842 = vld [vmem:[%s1841] sm:$0x3]
        %v1844 = vsel %vm808, %v1557, 0
        %v1847 = vsel %vm808, %v1558, 0
        %v1850 = vsel %vm808, %v1559, 0
        %v1853 = vsel %vm808, %v1560, 0
        %v1856 = vsel %vm808, %v1561, 0
        %v1859 = vsel %vm808, %v1562, 0
        %v1862 = vsel %vm808, %v1563, 0
        %v1865 = vsel %vm808, %v1564, 0
        %v1868 = vsel %vm1086, %v1842, 0
        %1870 = vmatprep.subr.bf16.mxu0 0
        %1871 = vmatpush1.bf16.msra.mxu0 %v1868
        %1872 = vmatprep.subr.bf16.mxu0 0
        %1873 = vmatpush1.bf16.msra.mxu0 0
        %1874 = vmatprep.subr.bf16.mxu0 0
        %1875 = vmatpush1.bf16.msra.mxu0 0
        %1876 = vmatprep.subr.bf16.mxu0 0
        %1877 = vmatpush1.bf16.msra.mxu0 0
        %1878 = vmatprep.subr.bf16.mxu0 0
        %1879 = vmatpush1.bf16.msra.mxu0 0
        %1880 = vmatprep.subr.bf16.mxu0 0
        %1881 = vmatpush1.bf16.msra.mxu0 0
        %1882 = vmatprep.subr.bf16.mxu0 0
        %1883 = vmatpush1.bf16.msra.mxu0 0
        %1884 = vmatprep.subr.bf16.mxu0 0
        %1885 = vmatpush1.bf16.msra.mxu0 0
        %1886 = vmatprep.subr.bf16.mxu0 0
        %1887 = vmatpush1.bf16.msra.mxu0 0
        %1888 = vmatprep.subr.bf16.mxu0 0
        %1889 = vmatpush1.bf16.msra.mxu0 0
        %1890 = vmatprep.subr.bf16.mxu0 0
        %1891 = vmatpush1.bf16.msra.mxu0 0
        %1892 = vmatprep.subr.bf16.mxu0 0
        %1893 = vmatpush1.bf16.msra.mxu0 0
        %1894 = vmatprep.subr.bf16.mxu0 0
        %1895 = vmatpush1.bf16.msra.mxu0 0
        %1896 = vmatprep.subr.bf16.mxu0 0
        %1897 = vmatpush1.bf16.msra.mxu0 0
        %1898 = vmatprep.subr.bf16.mxu0 0
        %1899 = vmatpush1.bf16.msra.mxu0 0
        %1900 = vmatprep.subr.bf16.mxu0 0
        %1901 = vmatpush1.bf16.msra.mxu0 0
        %1902 = vmatprep.mubr.bf16.mxu0 0
        %1903 = vmatmul.mubr.bf16.gmra.mrb[0].mxu0 %v1844
        %v1904 = vpop.f32.mrb[0].mxu0
        %v1905 = vadd.f32 0.0, %v1904
        %v1906 = vpop.f32.mrb[0].mxu0
        %v1907 = vpop.f32.mrb[0].mxu0
        %v1908 = vadd.f32 0.0, %v1907
        %v1909 = vpop.f32.mrb[0].mxu0
        %1910 = vmatprep.mubr.bf16.mxu0 0
        %1911 = vmatmul.mubr.bf16.gmra.mrb[0].mxu0 %v1847
        %v1912 = vpop.f32.mrb[0].mxu0
        %v1913 = vadd.f32 0.0, %v1912
        %v1914 = vpop.f32.mrb[0].mxu0
        %v1915 = vpop.f32.mrb[0].mxu0
        %v1916 = vadd.f32 0.0, %v1915
        %v1917 = vpop.f32.mrb[0].mxu0
        %1918 = vmatprep.mubr.bf16.mxu0 0
        %1919 = vmatmul.mubr.bf16.gmra.mrb[0].mxu0 %v1850
        %v1920 = vpop.f32.mrb[0].mxu0
        %v1921 = vadd.f32 0.0, %v1920
        %v1922 = vpop.f32.mrb[0].mxu0
        %v1923 = vpop.f32.mrb[0].mxu0
        %v1924 = vadd.f32 0.0, %v1923
        %v1925 = vpop.f32.mrb[0].mxu0
        %1926 = vmatprep.mubr.bf16.mxu0 0
        %1927 = vmatmul.mubr.bf16.gmra.mrb[0].mxu0 %v1853
        %v1928 = vpop.f32.mrb[0].mxu0
        %v1929 = vadd.f32 0.0, %v1928
        %v1930 = vpop.f32.mrb[0].mxu0
        %v1931 = vpop.f32.mrb[0].mxu0
        %v1932 = vadd.f32 0.0, %v1931
        %v1933 = vpop.f32.mrb[0].mxu0
        %1934 = vmatprep.mubr.bf16.mxu0 0
        %1935 = vmatmul.mubr.bf16.gmra.mrb[0].mxu0 %v1856
        %v1936 = vpop.f32.mrb[0].mxu0
        %v1937 = vadd.f32 0.0, %v1936
        %v1938 = vpop.f32.mrb[0].mxu0
        %v1939 = vpop.f32.mrb[0].mxu0
        %v1940 = vadd.f32 0.0, %v1939
        %v1941 = vpop.f32.mrb[0].mxu0
        %1942 = vmatprep.mubr.bf16.mxu0 0
        %1943 = vmatmul.mubr.bf16.gmra.mrb[0].mxu0 %v1859
        %v1944 = vpop.f32.mrb[0].mxu0
        %v1945 = vadd.f32 0.0, %v1944
        %v1946 = vpop.f32.mrb[0].mxu0
        %v1947 = vpop.f32.mrb[0].mxu0
        %v1948 = vadd.f32 0.0, %v1947
        %v1949 = vpop.f32.mrb[0].mxu0
        %1950 = vmatprep.mubr.bf16.mxu0 0
        %1951 = vmatmul.mubr.bf16.gmra.mrb[0].mxu0 %v1862
        %v1952 = vpop.f32.mrb[0].mxu0
        %v1953 = vadd.f32 0.0, %v1952
        %v1954 = vpop.f32.mrb[0].mxu0
        %v1955 = vpop.f32.mrb[0].mxu0
        %v1956 = vadd.f32 0.0, %v1955
        %v1957 = vpop.f32.mrb[0].mxu0
        %1958 = vmatprep.mubr.bf16.mxu0 0
        %1959 = vmatmul.mubr.bf16.gmra.mrb[0].mxu0 %v1865
        %v1960 = vpop.f32.mrb[0].mxu0
        %v1961 = vadd.f32 0.0, %v1960
        %v1962 = vpop.f32.mrb[0].mxu0
        %v1963 = vpop.f32.mrb[0].mxu0
        %v1964 = vadd.f32 0.0, %v1963
        %v1965 = vpop.f32.mrb[0].mxu0
        %1966 = vdwg.mxu0
        %v1967 = vadd.f32 %v1825, %v1905
        %v1968 = vadd.f32 %v1826, %v1908
        %v1969 = vadd.f32 %v1827, %v1913
        %v1970 = vadd.f32 %v1828, %v1916
        %v1971 = vadd.f32 %v1829, %v1921
        %v1972 = vadd.f32 %v1830, %v1924
        %v1973 = vadd.f32 %v1831, %v1929
        %v1974 = vadd.f32 %v1832, %v1932
        %v1975 = vadd.f32 %v1833, %v1937
        %v1976 = vadd.f32 %v1834, %v1940
        %v1977 = vadd.f32 %v1835, %v1945
        %v1978 = vadd.f32 %v1836, %v1948
        %v1979 = vadd.f32 %v1837, %v1953
        %v1980 = vadd.f32 %v1838, %v1956
        %v1981 = vadd.f32 %v1839, %v1961
        %v1982 = vadd.f32 %v1840, %v1964
        %s1983 = scalar_lea.vmem [#allocation2], 16
        %v1984 = vld [vmem:[%s1983] sm:$0xff]
        %v1985 = vld [vmem:[%s1983 + $0x8] sm:$0xff]
        %v1986 = vld [vmem:[%s1983 + $0x10] sm:$0xff]
        %v1987 = vld [vmem:[%s1983 + $0x18] sm:$0xff]
        %v1988 = vld [vmem:[%s1983 + $0x20] sm:$0xff]
        %v1989 = vld [vmem:[%s1983 + $0x28] sm:$0xff]
        %v1990 = vld [vmem:[%s1983 + $0x30] sm:$0xff]
        %v1991 = vld [vmem:[%s1983 + $0x38] sm:$0xff]
        %v1993 = vshrl.u32 %v1984, 16
        %v1995 = vrot.slane %v1993, 7
        %v1996 = vshll.u32 %v1984, 16
        %v1998 = vor.u32 %v1995, %v1996
        %v2000 = vshrl.u32 %v1985, 16
        %v2002 = vrot.slane %v2000, 7
        %v2003 = vshll.u32 %v1985, 16
        %v2005 = vor.u32 %v2002, %v2003
        %v2007 = vshrl.u32 %v1986, 16
        %v2009 = vrot.slane %v2007, 7
        %v2010 = vshll.u32 %v1986, 16
        %v2012 = vor.u32 %v2009, %v2010
        %v2014 = vshrl.u32 %v1987, 16
        %v2016 = vrot.slane %v2014, 7
        %v2017 = vshll.u32 %v1987, 16
        %v2019 = vor.u32 %v2016, %v2017
        %v2021 = vshrl.u32 %v1988, 16
        %v2023 = vrot.slane %v2021, 7
        %v2024 = vshll.u32 %v1988, 16
        %v2026 = vor.u32 %v2023, %v2024
        %v2028 = vshrl.u32 %v1989, 16
        %v2030 = vrot.slane %v2028, 7
        %v2031 = vshll.u32 %v1989, 16
        %v2033 = vor.u32 %v2030, %v2031
        %v2035 = vshrl.u32 %v1990, 16
        %v2037 = vrot.slane %v2035, 7
        %v2038 = vshll.u32 %v1990, 16
        %v2040 = vor.u32 %v2037, %v2038
        %v2042 = vshrl.u32 %v1991, 16
        %v2044 = vrot.slane %v2042, 7
        %v2045 = vshll.u32 %v1991, 16
        %v2047 = vor.u32 %v2044, %v2045
        %v2056 = vsel %vm1023, 0, %v1998
        %v2057 = vsel %vm1023, 0, %v2005
        %v2058 = vsel %vm1023, 0, %v2012
        %v2059 = vsel %vm1023, 0, %v2019
        %v2060 = vsel %vm1023, 0, %v2026
        %v2061 = vsel %vm1023, 0, %v2033
        %v2062 = vsel %vm1023, 0, %v2040
        %v2063 = vsel %vm1023, 0, %v2047
        %v2064 = vrot.slane %v1996, 1
        %v2065 = vor.u32 %v1993, %v2064
        %v2066 = vrot.slane %v2003, 1
        %v2067 = vor.u32 %v2000, %v2066
        %v2068 = vrot.slane %v2010, 1
        %v2069 = vor.u32 %v2007, %v2068
        %v2070 = vrot.slane %v2017, 1
        %v2071 = vor.u32 %v2014, %v2070
        %v2072 = vrot.slane %v2024, 1
        %v2073 = vor.u32 %v2021, %v2072
        %v2074 = vrot.slane %v2031, 1
        %v2075 = vor.u32 %v2028, %v2074
        %v2076 = vrot.slane %v2038, 1
        %v2077 = vor.u32 %v2035, %v2076
        %v2078 = vrot.slane %v2045, 1
        %v2079 = vor.u32 %v2042, %v2078
        %v2088 = vsel %vm1058, %v2065, 0
        %v2089 = vsel %vm1058, %v2067, 0
        %v2090 = vsel %vm1058, %v2069, 0
        %v2091 = vsel %vm1058, %v2071, 0
        %v2092 = vsel %vm1058, %v2073, 0
        %v2093 = vsel %vm1058, %v2075, 0
        %v2094 = vsel %vm1058, %v2077, 0
        %v2095 = vsel %vm1058, %v2079, 0
        %s2096 = scalar_lea.vmem %s7, 12
        %v2097 = vld [vmem:[%s2096] sm:$0x3]
        %v2099 = vsel %vm808, %v2056, 0
        %v2102 = vsel %vm808, %v2057, 0
        %v2105 = vsel %vm808, %v2058, 0
        %v2108 = vsel %vm808, %v2059, 0
        %v2111 = vsel %vm808, %v2060, 0
        %v2114 = vsel %vm808, %v2061, 0
        %v2117 = vsel %vm808, %v2062, 0
        %v2120 = vsel %vm808, %v2063, 0
        %v2123 = vsel %vm1086, %v2097, 0
        %2125 = vmatprep.subr.bf16.mxu0 0
        %2126 = vmatpush1.bf16.msra.mxu0 %v2123
        %2127 = vmatprep.subr.bf16.mxu0 0
        %2128 = vmatpush1.bf16.msra.mxu0 0
        %2129 = vmatprep.subr.bf16.mxu0 0
        %2130 = vmatpush1.bf16.msra.mxu0 0
        %2131 = vmatprep.subr.bf16.mxu0 0
        %2132 = vmatpush1.bf16.msra.mxu0 0
        %2133 = vmatprep.subr.bf16.mxu0 0
        %2134 = vmatpush1.bf16.msra.mxu0 0
        %2135 = vmatprep.subr.bf16.mxu0 0
        %2136 = vmatpush1.bf16.msra.mxu0 0
        %2137 = vmatprep.subr.bf16.mxu0 0
        %2138 = vmatpush1.bf16.msra.mxu0 0
        %2139 = vmatprep.subr.bf16.mxu0 0
        %2140 = vmatpush1.bf16.msra.mxu0 0
        %2141 = vmatprep.subr.bf16.mxu0 0
        %2142 = vmatpush1.bf16.msra.mxu0 0
        %2143 = vmatprep.subr.bf16.mxu0 0
        %2144 = vmatpush1.bf16.msra.mxu0 0
        %2145 = vmatprep.subr.bf16.mxu0 0
        %2146 = vmatpush1.bf16.msra.mxu0 0
        %2147 = vmatprep.subr.bf16.mxu0 0
        %2148 = vmatpush1.bf16.msra.mxu0 0
        %2149 = vmatprep.subr.bf16.mxu0 0
        %2150 = vmatpush1.bf16.msra.mxu0 0
        %2151 = vmatprep.subr.bf16.mxu0 0
        %2152 = vmatpush1.bf16.msra.mxu0 0
        %2153 = vmatprep.subr.bf16.mxu0 0
        %2154 = vmatpush1.bf16.msra.mxu0 0
        %2155 = vmatprep.subr.bf16.mxu0 0
        %2156 = vmatpush1.bf16.msra.mxu0 0
        %2157 = vmatprep.mubr.bf16.mxu0 0
        %2158 = vmatmul.mubr.bf16.gmra.mrb[0].mxu0 %v2099
        %v2159 = vpop.f32.mrb[0].mxu0
        %v2160 = vadd.f32 0.0, %v2159
        %v2161 = vpop.f32.mrb[0].mxu0
        %v2162 = vpop.f32.mrb[0].mxu0
        %v2163 = vadd.f32 0.0, %v2162
        %v2164 = vpop.f32.mrb[0].mxu0
        %2165 = vmatprep.mubr.bf16.mxu0 0
        %2166 = vmatmul.mubr.bf16.gmra.mrb[0].mxu0 %v2102
        %v2167 = vpop.f32.mrb[0].mxu0
        %v2168 = vadd.f32 0.0, %v2167
        %v2169 = vpop.f32.mrb[0].mxu0
        %v2170 = vpop.f32.mrb[0].mxu0
        %v2171 = vadd.f32 0.0, %v2170
        %v2172 = vpop.f32.mrb[0].mxu0
        %2173 = vmatprep.mubr.bf16.mxu0 0
        %2174 = vmatmul.mubr.bf16.gmra.mrb[0].mxu0 %v2105
        %v2175 = vpop.f32.mrb[0].mxu0
        %v2176 = vadd.f32 0.0, %v2175
        %v2177 = vpop.f32.mrb[0].mxu0
        %v2178 = vpop.f32.mrb[0].mxu0
        %v2179 = vadd.f32 0.0, %v2178
        %v2180 = vpop.f32.mrb[0].mxu0
        %2181 = vmatprep.mubr.bf16.mxu0 0
        %2182 = vmatmul.mubr.bf16.gmra.mrb[0].mxu0 %v2108
        %v2183 = vpop.f32.mrb[0].mxu0
        %v2184 = vadd.f32 0.0, %v2183
        %v2185 = vpop.f32.mrb[0].mxu0
        %v2186 = vpop.f32.mrb[0].mxu0
        %v2187 = vadd.f32 0.0, %v2186
        %v2188 = vpop.f32.mrb[0].mxu0
        %2189 = vmatprep.mubr.bf16.mxu0 0
        %2190 = vmatmul.mubr.bf16.gmra.mrb[0].mxu0 %v2111
        %v2191 = vpop.f32.mrb[0].mxu0
        %v2192 = vadd.f32 0.0, %v2191
        %v2193 = vpop.f32.mrb[0].mxu0
        %v2194 = vpop.f32.mrb[0].mxu0
        %v2195 = vadd.f32 0.0, %v2194
        %v2196 = vpop.f32.mrb[0].mxu0
        %2197 = vmatprep.mubr.bf16.mxu0 0
        %2198 = vmatmul.mubr.bf16.gmra.mrb[0].mxu0 %v2114
        %v2199 = vpop.f32.mrb[0].mxu0
        %v2200 = vadd.f32 0.0, %v2199
        %v2201 = vpop.f32.mrb[0].mxu0
        %v2202 = vpop.f32.mrb[0].mxu0
        %v2203 = vadd.f32 0.0, %v2202
        %v2204 = vpop.f32.mrb[0].mxu0
        %2205 = vmatprep.mubr.bf16.mxu0 0
        %2206 = vmatmul.mubr.bf16.gmra.mrb[0].mxu0 %v2117
        %v2207 = vpop.f32.mrb[0].mxu0
        %v2208 = vadd.f32 0.0, %v2207
        %v2209 = vpop.f32.mrb[0].mxu0
        %v2210 = vpop.f32.mrb[0].mxu0
        %v2211 = vadd.f32 0.0, %v2210
        %v2212 = vpop.f32.mrb[0].mxu0
        %2213 = vmatprep.mubr.bf16.mxu0 0
        %2214 = vmatmul.mubr.bf16.gmra.mrb[0].mxu0 %v2120
        %v2215 = vpop.f32.mrb[0].mxu0
        %v2216 = vadd.f32 0.0, %v2215
        %v2217 = vpop.f32.mrb[0].mxu0
        %v2218 = vpop.f32.mrb[0].mxu0
        %v2219 = vadd.f32 0.0, %v2218
        %v2220 = vpop.f32.mrb[0].mxu0
        %2221 = vdwg.mxu0
        %v2222 = vadd.f32 %v1967, %v2160
        %v2223 = vadd.f32 %v1968, %v2163
        %v2224 = vadd.f32 %v1969, %v2168
        %v2225 = vadd.f32 %v1970, %v2171
        %v2226 = vadd.f32 %v1971, %v2176
        %v2227 = vadd.f32 %v1972, %v2179
        %v2228 = vadd.f32 %v1973, %v2184
        %v2229 = vadd.f32 %v1974, %v2187
        %v2230 = vadd.f32 %v1975, %v2192
        %v2231 = vadd.f32 %v1976, %v2195
        %v2232 = vadd.f32 %v1977, %v2200
        %v2233 = vadd.f32 %v1978, %v2203
        %v2234 = vadd.f32 %v1979, %v2208
        %v2235 = vadd.f32 %v1980, %v2211
        %v2236 = vadd.f32 %v1981, %v2216
        %v2237 = vadd.f32 %v1982, %v2219
        %s2238 = scalar_lea.vmem %s7, 14
        %v2239 = vld [vmem:[%s2238] sm:$0x3]
        %v2240 = vsel %vm808, %v1984, 0
        %v2242 = vsel %vm808, %v1985, 0
        %v2244 = vsel %vm808, %v1986, 0
        %v2246 = vsel %vm808, %v1987, 0
        %v2248 = vsel %vm808, %v1988, 0
        %v2250 = vsel %vm808, %v1989, 0
        %v2252 = vsel %vm808, %v1990, 0
        %v2254 = vsel %vm808, %v1991, 0
        %v2257 = vsel %vm1086, %v2239, 0
        %2259 = vmatprep.subr.bf16.mxu0 0
        %2260 = vmatpush1.bf16.msra.mxu0 %v2257
        %2261 = vmatprep.subr.bf16.mxu0 0
        %2262 = vmatpush1.bf16.msra.mxu0 0
        %2263 = vmatprep.subr.bf16.mxu0 0
        %2264 = vmatpush1.bf16.msra.mxu0 0
        %2265 = vmatprep.subr.bf16.mxu0 0
        %2266 = vmatpush1.bf16.msra.mxu0 0
        %2267 = vmatprep.subr.bf16.mxu0 0
        %2268 = vmatpush1.bf16.msra.mxu0 0
        %2269 = vmatprep.subr.bf16.mxu0 0
        %2270 = vmatpush1.bf16.msra.mxu0 0
        %2271 = vmatprep.subr.bf16.mxu0 0
        %2272 = vmatpush1.bf16.msra.mxu0 0
        %2273 = vmatprep.subr.bf16.mxu0 0
        %2274 = vmatpush1.bf16.msra.mxu0 0
        %2275 = vmatprep.subr.bf16.mxu0 0
        %2276 = vmatpush1.bf16.msra.mxu0 0
        %2277 = vmatprep.subr.bf16.mxu0 0
        %2278 = vmatpush1.bf16.msra.mxu0 0
        %2279 = vmatprep.subr.bf16.mxu0 0
        %2280 = vmatpush1.bf16.msra.mxu0 0
        %2281 = vmatprep.subr.bf16.mxu0 0
        %2282 = vmatpush1.bf16.msra.mxu0 0
        %2283 = vmatprep.subr.bf16.mxu0 0
        %2284 = vmatpush1.bf16.msra.mxu0 0
        %2285 = vmatprep.subr.bf16.mxu0 0
        %2286 = vmatpush1.bf16.msra.mxu0 0
        %2287 = vmatprep.subr.bf16.mxu0 0
        %2288 = vmatpush1.bf16.msra.mxu0 0
        %2289 = vmatprep.subr.bf16.mxu0 0
        %2290 = vmatpush1.bf16.msra.mxu0 0
        %2291 = vmatprep.mubr.bf16.mxu0 0
        %2292 = vmatmul.mubr.bf16.gmra.mrb[0].mxu0 %v2240
        %v2293 = vpop.f32.mrb[0].mxu0
        %v2294 = vadd.f32 0.0, %v2293
        %v2295 = vpop.f32.mrb[0].mxu0
        %v2296 = vpop.f32.mrb[0].mxu0
        %v2297 = vadd.f32 0.0, %v2296
        %v2298 = vpop.f32.mrb[0].mxu0
        %2299 = vmatprep.mubr.bf16.mxu0 0
        %2300 = vmatmul.mubr.bf16.gmra.mrb[0].mxu0 %v2242
        %v2301 = vpop.f32.mrb[0].mxu0
        %v2302 = vadd.f32 0.0, %v2301
        %v2303 = vpop.f32.mrb[0].mxu0
        %v2304 = vpop.f32.mrb[0].mxu0
        %v2305 = vadd.f32 0.0, %v2304
        %v2306 = vpop.f32.mrb[0].mxu0
        %2307 = vmatprep.mubr.bf16.mxu0 0
        %2308 = vmatmul.mubr.bf16.gmra.mrb[0].mxu0 %v2244
        %v2309 = vpop.f32.mrb[0].mxu0
        %v2310 = vadd.f32 0.0, %v2309
        %v2311 = vpop.f32.mrb[0].mxu0
        %v2312 = vpop.f32.mrb[0].mxu0
        %v2313 = vadd.f32 0.0, %v2312
        %v2314 = vpop.f32.mrb[0].mxu0
        %2315 = vmatprep.mubr.bf16.mxu0 0
        %2316 = vmatmul.mubr.bf16.gmra.mrb[0].mxu0 %v2246
        %v2317 = vpop.f32.mrb[0].mxu0
        %v2318 = vadd.f32 0.0, %v2317
        %v2319 = vpop.f32.mrb[0].mxu0
        %v2320 = vpop.f32.mrb[0].mxu0
        %v2321 = vadd.f32 0.0, %v2320
        %v2322 = vpop.f32.mrb[0].mxu0
        %2323 = vmatprep.mubr.bf16.mxu0 0
        %2324 = vmatmul.mubr.bf16.gmra.mrb[0].mxu0 %v2248
        %v2325 = vpop.f32.mrb[0].mxu0
        %v2326 = vadd.f32 0.0, %v2325
        %v2327 = vpop.f32.mrb[0].mxu0
        %v2328 = vpop.f32.mrb[0].mxu0
        %v2329 = vadd.f32 0.0, %v2328
        %v2330 = vpop.f32.mrb[0].mxu0
        %2331 = vmatprep.mubr.bf16.mxu0 0
        %2332 = vmatmul.mubr.bf16.gmra.mrb[0].mxu0 %v2250
        %v2333 = vpop.f32.mrb[0].mxu0
        %v2334 = vadd.f32 0.0, %v2333
        %v2335 = vpop.f32.mrb[0].mxu0
        %v2336 = vpop.f32.mrb[0].mxu0
        %v2337 = vadd.f32 0.0, %v2336
        %v2338 = vpop.f32.mrb[0].mxu0
        %2339 = vmatprep.mubr.bf16.mxu0 0
        %2340 = vmatmul.mubr.bf16.gmra.mrb[0].mxu0 %v2252
        %v2341 = vpop.f32.mrb[0].mxu0
        %v2342 = vadd.f32 0.0, %v2341
        %v2343 = vpop.f32.mrb[0].mxu0
        %v2344 = vpop.f32.mrb[0].mxu0
        %v2345 = vadd.f32 0.0, %v2344
        %v2346 = vpop.f32.mrb[0].mxu0
        %2347 = vmatprep.mubr.bf16.mxu0 0
        %2348 = vmatmul.mubr.bf16.gmra.mrb[0].mxu0 %v2254
        %v2349 = vpop.f32.mrb[0].mxu0
        %v2350 = vadd.f32 0.0, %v2349
        %v2351 = vpop.f32.mrb[0].mxu0
        %v2352 = vpop.f32.mrb[0].mxu0
        %v2353 = vadd.f32 0.0, %v2352
        %v2354 = vpop.f32.mrb[0].mxu0
        %2355 = vdwg.mxu0
        %v2356 = vadd.f32 %v2222, %v2294
        %v2357 = vadd.f32 %v2223, %v2297
        %v2358 = vadd.f32 %v2224, %v2302
        %v2359 = vadd.f32 %v2225, %v2305
        %v2360 = vadd.f32 %v2226, %v2310
        %v2361 = vadd.f32 %v2227, %v2313
        %v2362 = vadd.f32 %v2228, %v2318
        %v2363 = vadd.f32 %v2229, %v2321
        %v2364 = vadd.f32 %v2230, %v2326
        %v2365 = vadd.f32 %v2231, %v2329
        %v2366 = vadd.f32 %v2232, %v2334
        %v2367 = vadd.f32 %v2233, %v2337
        %v2368 = vadd.f32 %v2234, %v2342
        %v2369 = vadd.f32 %v2235, %v2345
        %v2370 = vadd.f32 %v2236, %v2350
        %v2371 = vadd.f32 %v2237, %v2353
        %s2372 = scalar_lea.vmem %s7, 16
        %v2373 = vld [vmem:[%s2372] sm:$0x3]
        %v2375 = vsel %vm808, %v2088, 0
        %v2378 = vsel %vm808, %v2089, 0
        %v2381 = vsel %vm808, %v2090, 0
        %v2384 = vsel %vm808, %v2091, 0
        %v2387 = vsel %vm808, %v2092, 0
        %v2390 = vsel %vm808, %v2093, 0
        %v2393 = vsel %vm808, %v2094, 0
        %v2396 = vsel %vm808, %v2095, 0
        %v2399 = vsel %vm1086, %v2373, 0
        %2401 = vmatprep.subr.bf16.mxu0 0
        %2402 = vmatpush1.bf16.msra.mxu0 %v2399
        %2403 = vmatprep.subr.bf16.mxu0 0
        %2404 = vmatpush1.bf16.msra.mxu0 0
        %2405 = vmatprep.subr.bf16.mxu0 0
        %2406 = vmatpush1.bf16.msra.mxu0 0
        %2407 = vmatprep.subr.bf16.mxu0 0
        %2408 = vmatpush1.bf16.msra.mxu0 0
        %2409 = vmatprep.subr.bf16.mxu0 0
        %2410 = vmatpush1.bf16.msra.mxu0 0
        %2411 = vmatprep.subr.bf16.mxu0 0
        %2412 = vmatpush1.bf16.msra.mxu0 0
        %2413 = vmatprep.subr.bf16.mxu0 0
        %2414 = vmatpush1.bf16.msra.mxu0 0
        %2415 = vmatprep.subr.bf16.mxu0 0
        %2416 = vmatpush1.bf16.msra.mxu0 0
        %2417 = vmatprep.subr.bf16.mxu0 0
        %2418 = vmatpush1.bf16.msra.mxu0 0
        %2419 = vmatprep.subr.bf16.mxu0 0
        %2420 = vmatpush1.bf16.msra.mxu0 0
        %2421 = vmatprep.subr.bf16.mxu0 0
        %2422 = vmatpush1.bf16.msra.mxu0 0
        %2423 = vmatprep.subr.bf16.mxu0 0
        %2424 = vmatpush1.bf16.msra.mxu0 0
        %2425 = vmatprep.subr.bf16.mxu0 0
        %2426 = vmatpush1.bf16.msra.mxu0 0
        %2427 = vmatprep.subr.bf16.mxu0 0
        %2428 = vmatpush1.bf16.msra.mxu0 0
        %2429 = vmatprep.subr.bf16.mxu0 0
        %2430 = vmatpush1.bf16.msra.mxu0 0
        %2431 = vmatprep.subr.bf16.mxu0 0
        %2432 = vmatpush1.bf16.msra.mxu0 0
        %2433 = vmatprep.mubr.bf16.mxu0 0
        %2434 = vmatmul.mubr.bf16.gmra.mrb[0].mxu0 %v2375
        %v2435 = vpop.f32.mrb[0].mxu0
        %v2436 = vadd.f32 0.0, %v2435
        %v2437 = vpop.f32.mrb[0].mxu0
        %v2438 = vpop.f32.mrb[0].mxu0
        %v2439 = vadd.f32 0.0, %v2438
        %v2440 = vpop.f32.mrb[0].mxu0
        %2441 = vmatprep.mubr.bf16.mxu0 0
        %2442 = vmatmul.mubr.bf16.gmra.mrb[0].mxu0 %v2378
        %v2443 = vpop.f32.mrb[0].mxu0
        %v2444 = vadd.f32 0.0, %v2443
        %v2445 = vpop.f32.mrb[0].mxu0
        %v2446 = vpop.f32.mrb[0].mxu0
        %v2447 = vadd.f32 0.0, %v2446
        %v2448 = vpop.f32.mrb[0].mxu0
        %2449 = vmatprep.mubr.bf16.mxu0 0
        %2450 = vmatmul.mubr.bf16.gmra.mrb[0].mxu0 %v2381
        %v2451 = vpop.f32.mrb[0].mxu0
        %v2452 = vadd.f32 0.0, %v2451
        %v2453 = vpop.f32.mrb[0].mxu0
        %v2454 = vpop.f32.mrb[0].mxu0
        %v2455 = vadd.f32 0.0, %v2454
        %v2456 = vpop.f32.mrb[0].mxu0
        %2457 = vmatprep.mubr.bf16.mxu0 0
        %2458 = vmatmul.mubr.bf16.gmra.mrb[0].mxu0 %v2384
        %v2459 = vpop.f32.mrb[0].mxu0
        %v2460 = vadd.f32 0.0, %v2459
        %v2461 = vpop.f32.mrb[0].mxu0
        %v2462 = vpop.f32.mrb[0].mxu0
        %v2463 = vadd.f32 0.0, %v2462
        %v2464 = vpop.f32.mrb[0].mxu0
        %2465 = vmatprep.mubr.bf16.mxu0 0
        %2466 = vmatmul.mubr.bf16.gmra.mrb[0].mxu0 %v2387
        %v2467 = vpop.f32.mrb[0].mxu0
        %v2468 = vadd.f32 0.0, %v2467
        %v2469 = vpop.f32.mrb[0].mxu0
        %v2470 = vpop.f32.mrb[0].mxu0
        %v2471 = vadd.f32 0.0, %v2470
        %v2472 = vpop.f32.mrb[0].mxu0
        %2473 = vmatprep.mubr.bf16.mxu0 0
        %2474 = vmatmul.mubr.bf16.gmra.mrb[0].mxu0 %v2390
        %v2475 = vpop.f32.mrb[0].mxu0
        %v2476 = vadd.f32 0.0, %v2475
        %v2477 = vpop.f32.mrb[0].mxu0
        %v2478 = vpop.f32.mrb[0].mxu0
        %v2479 = vadd.f32 0.0, %v2478
        %v2480 = vpop.f32.mrb[0].mxu0
        %2481 = vmatprep.mubr.bf16.mxu0 0
        %2482 = vmatmul.mubr.bf16.gmra.mrb[0].mxu0 %v2393
        %v2483 = vpop.f32.mrb[0].mxu0
        %v2484 = vadd.f32 0.0, %v2483
        %v2485 = vpop.f32.mrb[0].mxu0
        %v2486 = vpop.f32.mrb[0].mxu0
        %v2487 = vadd.f32 0.0, %v2486
        %v2488 = vpop.f32.mrb[0].mxu0
        %2489 = vmatprep.mubr.bf16.mxu0 0
        %2490 = vmatmul.mubr.bf16.gmra.mrb[0].mxu0 %v2396
        %v2491 = vpop.f32.mrb[0].mxu0
        %v2492 = vadd.f32 0.0, %v2491
        %v2493 = vpop.f32.mrb[0].mxu0
        %v2494 = vpop.f32.mrb[0].mxu0
        %v2495 = vadd.f32 0.0, %v2494
        %v2496 = vpop.f32.mrb[0].mxu0
        %2497 = vdwg.mxu0
        %v2498 = vadd.f32 %v2356, %v2436
        %v2499 = vadd.f32 %v2357, %v2439
        %v2500 = vadd.f32 %v2358, %v2444
        %v2501 = vadd.f32 %v2359, %v2447
        %v2502 = vadd.f32 %v2360, %v2452
        %v2503 = vadd.f32 %v2361, %v2455
        %v2504 = vadd.f32 %v2362, %v2460
        %v2505 = vadd.f32 %v2363, %v2463
        %v2506 = vadd.f32 %v2364, %v2468
        %v2507 = vadd.f32 %v2365, %v2471
        %v2508 = vadd.f32 %v2366, %v2476
        %v2509 = vadd.f32 %v2367, %v2479
        %v2510 = vadd.f32 %v2368, %v2484
        %v2511 = vadd.f32 %v2369, %v2487
        %v2512 = vadd.f32 %v2370, %v2492
        %v2513 = vadd.f32 %v2371, %v2495
        %v2515 = vlaneseq
        %v2516 = vshrl.u32 %v2515, 7
        %v2517 = vsub.s32 0, %v2516
        %v2518 = vrot.slane %v948, %v2517
        %v2520 = vadd.f32 %v2498, %v2518
        %v2521 = vadd.f32 %v2499, %v2518
        %v2522 = vadd.f32 %v2500, %v2518
        %v2523 = vadd.f32 %v2501, %v2518
        %v2524 = vadd.f32 %v2502, %v2518
        %v2525 = vadd.f32 %v2503, %v2518
        %v2526 = vadd.f32 %v2504, %v2518
        %v2527 = vadd.f32 %v2505, %v2518
        %v2528 = vadd.f32 %v2506, %v2518
        %v2529 = vadd.f32 %v2507, %v2518
        %v2530 = vadd.f32 %v2508, %v2518
        %v2531 = vadd.f32 %v2509, %v2518
        %v2532 = vadd.f32 %v2510, %v2518
        %v2533 = vadd.f32 %v2511, %v2518
        %v2534 = vadd.f32 %v2512, %v2518
        %v2535 = vadd.f32 %v2513, %v2518
        %v2536 = vmax.f32 %v2520, 0.0
        %v2537 = vmax.f32 %v2521, 0.0
        %v2538 = vmax.f32 %v2522, 0.0
        %v2539 = vmax.f32 %v2523, 0.0
        %v2540 = vmax.f32 %v2524, 0.0
        %v2541 = vmax.f32 %v2525, 0.0
        %v2542 = vmax.f32 %v2526, 0.0
        %v2543 = vmax.f32 %v2527, 0.0
        %v2544 = vmax.f32 %v2528, 0.0
        %v2545 = vmax.f32 %v2529, 0.0
        %v2546 = vmax.f32 %v2530, 0.0
        %v2547 = vmax.f32 %v2531, 0.0
        %v2548 = vmax.f32 %v2532, 0.0
        %v2549 = vmax.f32 %v2533, 0.0
        %v2550 = vmax.f32 %v2534, 0.0
        %v2551 = vmax.f32 %v2535, 0.0
        %v2552 = vpack.c.bf16 %v2537, %v2536
        %v2553 = vpack.c.bf16 %v2539, %v2538
        %v2554 = vpack.c.bf16 %v2541, %v2540
        %v2555 = vpack.c.bf16 %v2543, %v2542
        %v2556 = vpack.c.bf16 %v2545, %v2544
        %v2557 = vpack.c.bf16 %v2547, %v2546
        %v2558 = vpack.c.bf16 %v2549, %v2548
        %v2559 = vpack.c.bf16 %v2551, %v2550
        %v2560 = vld [vmem:[%s9] sm:$0x3]
        %v2561 = vld [vmem:[%s10] sm:$0x1]
        %v2563 = vlaneseq
        %v2564 = vshrl.u32 %v2563, 7
        %v2565 = vsub.s32 0, %v2564
        %v2566 = vrot.slane %v2561, %v2565
        %v2569 = vsel %vm808, %v2552, 0
        %v2572 = vsel %vm808, %v2553, 0
        %v2575 = vsel %vm808, %v2554, 0
        %v2578 = vsel %vm808, %v2555, 0
        %v2581 = vsel %vm808, %v2556, 0
        %v2584 = vsel %vm808, %v2557, 0
        %v2587 = vsel %vm808, %v2558, 0
        %v2590 = vsel %vm808, %v2559, 0
        %v2593 = vsel %vm1086, %v2560, 0
        %2595 = vmatprep.subr.bf16.mxu0 0
        %2596 = vmatpush1.bf16.msra.mxu0 %v2593
        %2597 = vmatprep.subr.bf16.mxu0 0
        %2598 = vmatpush1.bf16.msra.mxu0 0
        %2599 = vmatprep.subr.bf16.mxu0 0
        %2600 = vmatpush1.bf16.msra.mxu0 0
        %2601 = vmatprep.subr.bf16.mxu0 0
        %2602 = vmatpush1.bf16.msra.mxu0 0
        %2603 = vmatprep.subr.bf16.mxu0 0
        %2604 = vmatpush1.bf16.msra.mxu0 0
        %2605 = vmatprep.subr.bf16.mxu0 0
        %2606 = vmatpush1.bf16.msra.mxu0 0
        %2607 = vmatprep.subr.bf16.mxu0 0
        %2608 = vmatpush1.bf16.msra.mxu0 0
        %2609 = vmatprep.subr.bf16.mxu0 0
        %2610 = vmatpush1.bf16.msra.mxu0 0
        %2611 = vmatprep.subr.bf16.mxu0 0
        %2612 = vmatpush1.bf16.msra.mxu0 0
        %2613 = vmatprep.subr.bf16.mxu0 0
        %2614 = vmatpush1.bf16.msra.mxu0 0
        %2615 = vmatprep.subr.bf16.mxu0 0
        %2616 = vmatpush1.bf16.msra.mxu0 0
        %2617 = vmatprep.subr.bf16.mxu0 0
        %2618 = vmatpush1.bf16.msra.mxu0 0
        %2619 = vmatprep.subr.bf16.mxu0 0
        %2620 = vmatpush1.bf16.msra.mxu0 0
        %2621 = vmatprep.subr.bf16.mxu0 0
        %2622 = vmatpush1.bf16.msra.mxu0 0
        %2623 = vmatprep.subr.bf16.mxu0 0
        %2624 = vmatpush1.bf16.msra.mxu0 0
        %2625 = vmatprep.subr.bf16.mxu0 0
        %2626 = vmatpush1.bf16.msra.mxu0 0
        %2627 = vmatprep.mubr.bf16.mxu0 0
        %2628 = vmatmul.mubr.bf16.gmra.mrb[0].mxu0 %v2569
        %v2629 = vpop.f32.mrb[0].mxu0
        %v2630 = vadd.f32 %v2566, %v2629
        %v2631 = vpop.f32.mrb[0].mxu0
        %v2632 = vpop.f32.mrb[0].mxu0
        %v2633 = vadd.f32 %v2566, %v2632
        %v2634 = vpop.f32.mrb[0].mxu0
        %2635 = vmatprep.mubr.bf16.mxu0 0
        %2636 = vmatmul.mubr.bf16.gmra.mrb[0].mxu0 %v2572
        %v2637 = vpop.f32.mrb[0].mxu0
        %v2638 = vadd.f32 %v2566, %v2637
        %v2639 = vpop.f32.mrb[0].mxu0
        %v2640 = vpop.f32.mrb[0].mxu0
        %v2641 = vadd.f32 %v2566, %v2640
        %v2642 = vpop.f32.mrb[0].mxu0
        %2643 = vmatprep.mubr.bf16.mxu0 0
        %2644 = vmatmul.mubr.bf16.gmra.mrb[0].mxu0 %v2575
        %v2645 = vpop.f32.mrb[0].mxu0
        %v2646 = vadd.f32 %v2566, %v2645
        %v2647 = vpop.f32.mrb[0].mxu0
        %v2648 = vpop.f32.mrb[0].mxu0
        %v2649 = vadd.f32 %v2566, %v2648
        %v2650 = vpop.f32.mrb[0].mxu0
        %2651 = vmatprep.mubr.bf16.mxu0 0
        %2652 = vmatmul.mubr.bf16.gmra.mrb[0].mxu0 %v2578
        %v2653 = vpop.f32.mrb[0].mxu0
        %v2654 = vadd.f32 %v2566, %v2653
        %v2655 = vpop.f32.mrb[0].mxu0
        %v2656 = vpop.f32.mrb[0].mxu0
        %v2657 = vadd.f32 %v2566, %v2656
        %v2658 = vpop.f32.mrb[0].mxu0
        %2659 = vmatprep.mubr.bf16.mxu0 0
        %2660 = vmatmul.mubr.bf16.gmra.mrb[0].mxu0 %v2581
        %v2661 = vpop.f32.mrb[0].mxu0
        %v2662 = vadd.f32 %v2566, %v2661
        %v2663 = vpop.f32.mrb[0].mxu0
        %v2664 = vpop.f32.mrb[0].mxu0
        %v2665 = vadd.f32 %v2566, %v2664
        %v2666 = vpop.f32.mrb[0].mxu0
        %2667 = vmatprep.mubr.bf16.mxu0 0
        %2668 = vmatmul.mubr.bf16.gmra.mrb[0].mxu0 %v2584
        %v2669 = vpop.f32.mrb[0].mxu0
        %v2670 = vadd.f32 %v2566, %v2669
        %v2671 = vpop.f32.mrb[0].mxu0
        %v2672 = vpop.f32.mrb[0].mxu0
        %v2673 = vadd.f32 %v2566, %v2672
        %v2674 = vpop.f32.mrb[0].mxu0
        %2675 = vmatprep.mubr.bf16.mxu0 0
        %2676 = vmatmul.mubr.bf16.gmra.mrb[0].mxu0 %v2587
        %v2677 = vpop.f32.mrb[0].mxu0
        %v2678 = vadd.f32 %v2566, %v2677
        %v2679 = vpop.f32.mrb[0].mxu0
        %v2680 = vpop.f32.mrb[0].mxu0
        %v2681 = vadd.f32 %v2566, %v2680
        %v2682 = vpop.f32.mrb[0].mxu0
        %2683 = vmatprep.mubr.bf16.mxu0 0
        %2684 = vmatmul.mubr.bf16.gmra.mrb[0].mxu0 %v2590
        %v2685 = vpop.f32.mrb[0].mxu0
        %v2686 = vadd.f32 %v2566, %v2685
        %v2687 = vpop.f32.mrb[0].mxu0
        %v2688 = vpop.f32.mrb[0].mxu0
        %v2689 = vadd.f32 %v2566, %v2688
        %v2690 = vpop.f32.mrb[0].mxu0
        %2691 = vdwg.mxu0
        %v2692 = vld [vmem:[%s466] sm:$0xf]
        %v2693 = vld [vmem:[%s466 + $0x4] sm:$0xf]
        %v2694 = vld [vmem:[%s466 + $0x8] sm:$0xf]
        %v2695 = vld [vmem:[%s466 + $0xc] sm:$0xf]
        %v2696 = vld [vmem:[%s466 + $0x10] sm:$0xf]
        %v2697 = vld [vmem:[%s466 + $0x14] sm:$0xf]
        %v2698 = vld [vmem:[%s466 + $0x18] sm:$0xf]
        %v2699 = vld [vmem:[%s466 + $0x1c] sm:$0xf]
        %v2700 = vld [vmem:[%s466 + $0x20] sm:$0xf]
        %v2701 = vld [vmem:[%s466 + $0x24] sm:$0xf]
        %v2702 = vld [vmem:[%s466 + $0x28] sm:$0xf]
        %v2703 = vld [vmem:[%s466 + $0x2c] sm:$0xf]
        %v2704 = vld [vmem:[%s466 + $0x30] sm:$0xf]
        %v2705 = vld [vmem:[%s466 + $0x34] sm:$0xf]
        %v2706 = vld [vmem:[%s466 + $0x38] sm:$0xf]
        %v2707 = vld [vmem:[%s466 + $0x3c] sm:$0xf]
        %v2708 = vunpack.c.l.bf16 %v2692
        %v2709 = vunpack.c.l.bf16 %v2693
        %v2710 = vunpack.c.l.bf16 %v2694
        %v2711 = vunpack.c.l.bf16 %v2695
        %v2712 = vunpack.c.l.bf16 %v2696
        %v2713 = vunpack.c.l.bf16 %v2697
        %v2714 = vunpack.c.l.bf16 %v2698
        %v2715 = vunpack.c.l.bf16 %v2699
        %v2716 = vunpack.c.l.bf16 %v2700
        %v2717 = vunpack.c.l.bf16 %v2701
        %v2718 = vunpack.c.l.bf16 %v2702
        %v2719 = vunpack.c.l.bf16 %v2703
        %v2720 = vunpack.c.l.bf16 %v2704
        %v2721 = vunpack.c.l.bf16 %v2705
        %v2722 = vunpack.c.l.bf16 %v2706
        %v2723 = vunpack.c.l.bf16 %v2707
        %v2724 = vadd.f32 %v2630, %v2708
        %v2725 = vadd.f32 %v2633, %v2709
        %v2726 = vadd.f32 %v2638, %v2710
        %v2727 = vadd.f32 %v2641, %v2711
        %v2728 = vadd.f32 %v2646, %v2712
        %v2729 = vadd.f32 %v2649, %v2713
        %v2730 = vadd.f32 %v2654, %v2714
        %v2731 = vadd.f32 %v2657, %v2715
        %v2732 = vadd.f32 %v2662, %v2716
        %v2733 = vadd.f32 %v2665, %v2717
        %v2734 = vadd.f32 %v2670, %v2718
        %v2735 = vadd.f32 %v2673, %v2719
        %v2736 = vadd.f32 %v2678, %v2720
        %v2737 = vadd.f32 %v2681, %v2721
        %v2738 = vadd.f32 %v2686, %v2722
        %v2739 = vadd.f32 %v2689, %v2723
        %v2740 = vpack.c.bf16 %v2725, %v2724
        %v2741 = vpack.c.bf16 %v2727, %v2726
        %v2742 = vpack.c.bf16 %v2729, %v2728
        %v2743 = vpack.c.bf16 %v2731, %v2730
        %v2744 = vpack.c.bf16 %v2733, %v2732
        %v2745 = vpack.c.bf16 %v2735, %v2734
        %v2746 = vpack.c.bf16 %v2737, %v2736
        %v2747 = vpack.c.bf16 %v2739, %v2738
        %v2756 = vunpack.c.l.b16 %v2740
        %v2757 = vunpack.c.h.b16 %v2740
        %v2758 = vunpack.c.l.b16 %v2741
        %v2759 = vunpack.c.h.b16 %v2741
        %v2760 = vunpack.c.l.b16 %v2742
        %v2761 = vunpack.c.h.b16 %v2742
        %v2762 = vunpack.c.l.b16 %v2743
        %v2763 = vunpack.c.h.b16 %v2743
        %v2764 = vunpack.c.l.b16 %v2744
        %v2765 = vunpack.c.h.b16 %v2744
        %v2766 = vunpack.c.l.b16 %v2745
        %v2767 = vunpack.c.h.b16 %v2745
        %v2768 = vunpack.c.l.b16 %v2746
        %v2769 = vunpack.c.h.b16 %v2746
        %v2770 = vunpack.c.l.b16 %v2747
        %v2771 = vunpack.c.h.b16 %v2747
        %v2772 = vpack.c.b16 %v2756, %v2756
        %v2773 = vpack.c.b16 %v2757, %v2757
        %v2774 = vpack.c.b16 %v2758, %v2758
        %v2775 = vpack.c.b16 %v2759, %v2759
        %v2776 = vpack.c.b16 %v2760, %v2760
        %v2777 = vpack.c.b16 %v2761, %v2761
        %v2778 = vpack.c.b16 %v2762, %v2762
        %v2779 = vpack.c.b16 %v2763, %v2763
        %v2780 = vpack.c.b16 %v2764, %v2764
        %v2781 = vpack.c.b16 %v2765, %v2765
        %v2782 = vpack.c.b16 %v2766, %v2766
        %v2783 = vpack.c.b16 %v2767, %v2767
        %v2784 = vpack.c.b16 %v2768, %v2768
        %v2785 = vpack.c.b16 %v2769, %v2769
        %v2786 = vpack.c.b16 %v2770, %v2770
        %v2787 = vpack.c.b16 %v2771, %v2771
        %vm2804 = vcmask 125952
        %2805 = vst.msk [vmem:[%s532] sm:$0xf] %vm2804, %v2772
        %2806 = vst.msk [vmem:[%s532 + $0x4] sm:$0xf] %vm2804, %v2773
        %2807 = vst.msk [vmem:[%s532 + $0x8] sm:$0xf] %vm2804, %v2774
        %2808 = vst.msk [vmem:[%s532 + $0xc] sm:$0xf] %vm2804, %v2775
        %2809 = vst.msk [vmem:[%s532 + $0x10] sm:$0xf] %vm2804, %v2776
        %2810 = vst.msk [vmem:[%s532 + $0x14] sm:$0xf] %vm2804, %v2777
        %2811 = vst.msk [vmem:[%s532 + $0x18] sm:$0xf] %vm2804, %v2778
        %2812 = vst.msk [vmem:[%s532 + $0x1c] sm:$0xf] %vm2804, %v2779
        %2813 = vst.msk [vmem:[%s532 + $0x20] sm:$0xf] %vm2804, %v2780
        %2814 = vst.msk [vmem:[%s532 + $0x24] sm:$0xf] %vm2804, %v2781
        %2815 = vst.msk [vmem:[%s532 + $0x28] sm:$0xf] %vm2804, %v2782
        %2816 = vst.msk [vmem:[%s532 + $0x2c] sm:$0xf] %vm2804, %v2783
        %2817 = vst.msk [vmem:[%s532 + $0x30] sm:$0xf] %vm2804, %v2784
        %2818 = vst.msk [vmem:[%s532 + $0x34] sm:$0xf] %vm2804, %v2785
        %2819 = vst.msk [vmem:[%s532 + $0x38] sm:$0xf] %vm2804, %v2786
        %2820 = vst.msk [vmem:[%s532 + $0x3c] sm:$0xf] %vm2804, %v2787
        %s2821 = sand.u32 %s321, 1
        %s2822 = scalar_lea.sflag [#allocation5], %s2821
        %s2823 = sand.u32 %s321, 1
        %s2824 = smul.addr %s2823, 64
        %s2825 = scalar_lea.vmem [#allocation9], %s2824
        // Predicated region
        $region77: #{tpu_custom_call.1} parent=63 // pred_check
          %p2826 = pneg %p331
        $region78: #{tpu_custom_call.1} parent=63 // pred_check_branch
          %2828 = sbr.rel (%p2826) target = $region80
        $region79: #{tpu_custom_call.1} parent=63 // pred_region
          %s2829 = smul.u32 8, %s36
          %s2831 = ssub.s32 1024, 1024
          %2832 = vsyncadd %s2822, %s2831
          %s2833 = smul.addr %s2829, 2
          %s2834 = smul.addr %s35, 32
          %s2835 = sadd.s32 %s2833, %s2834
          %s2836 = smul.addr %s2835, 64
          %s2837 = scalar_lea.hbm %s11, %s2836
          %s2838 = sshll.u32 %s2825, 4
          %s2839 = int_to_ptr.vmem [resolvable:$true] %s2838
          %2844 = dma.vmem_to_hbm [thread:$0]  %s2839, 1024, %s2837, %s2822, 64, 64, 4
        $region80: #{tpu_custom_call.1} parent=63 // pred_fallthru
          _
      $region64: #{tpu_custom_call.1} parent=5 // pred_fallthru
        _
      %p2845 = scmp.le.s32.totalorder 2, %s26
      // Predicated region
      $region81: #{tpu_custom_call.1} parent=5 // pred_check
        %p2846 = pneg %p2845
      $region82: #{tpu_custom_call.1} parent=5 // pred_check_branch
        %2848 = sbr.rel (%p2846) target = $region84
      $region83: #{tpu_custom_call.1} parent=5 // pred_region
        %s2849 = ssub.s32 %s26, 2
        // Predicated region
        $region85: #{tpu_custom_call.1} parent=83 // pred_check
          %p2850 = pneg %p337
        $region86: #{tpu_custom_call.1} parent=83 // pred_check_branch
          %2852 = sbr.rel (%p2850) target = $region88
        $region87: #{tpu_custom_call.1} parent=83 // pred_region
          %s2853 = sand.u32 %s322, 1
          %s2854 = scalar_lea.sflag [#allocation5], %s2853
          %s2855 = sand.u32 %s322, 1
          %s2856 = smul.addr %s2855, 64
          %s2857 = scalar_lea.vmem [#allocation9], %s2856
          %2858 = dma.done %s2854, 1024
        $region88: #{tpu_custom_call.1} parent=83 // pred_fallthru
          _
      $region84: #{tpu_custom_call.1} parent=5 // pred_fallthru
        _
    $region6: #{tpu_custom_call.1} parent=1 // loop_footer
      %s30 = sadd.s32 1, %s26
    $region7: #{tpu_custom_call.1} parent=1 // loop_footer_branch
      %25 = sbr.rel target = $region3
    $region8: #{tpu_custom_call.1} parent=1 // loop_exit
      _
    %2859 = vsyncpa [#allocation4], 1
    %s2860 = scalar_lea.sflag [#allocation4], 1
    %2861 = vsyncpa %s2860, 1
    %2862 = vsyncpa [#allocation7], 1
    %s2863 = scalar_lea.sflag [#allocation7], 1
    %2864 = vsyncpa %s2863, 1
    %2865 = vsyncpa [#allocation5], 1
    %s2866 = scalar_lea.sflag [#allocation5], 1
    %2867 = vsyncpa %s2866, 1

</llo_original>
